<compile_context>
chip_gen: v7x
topology: tpu7x:2x2x1
jax: 0.10.0
libtpu: 0.0.40
codegen_flags: <defaults>
</compile_context>

<pallas_src>
import functools
import math

import jax
import jax.numpy as jnp
import numpy as np
from jax.experimental import pallas as pl
from jax.experimental.pallas import tpu as pltpu

SCALE_LOG2 = 5      # scaling-and-squaring: Taylor-expand exp(A / 2**5)
TAYLOR_ORDER = 7    # Taylor order for exp() of the scaled matrix
_MATVEC_FOLD = 2    # fold the last 2 squarings into 2**2 matrix-vector applies

_LANE = 128         # vreg lane width (batch lives on lanes)
_SUB = 8            # sublane depth: one (8, 128) f32 plane == one full vreg


def _ceil_div(a, b):
    return -(-a // b)


def transop_expm_kernel(psi_ref, c_ref, x_ref, o_ref, *, s, n, m, sub_steps):
    """One batch block, processed as `sub_steps` independent (8, 128) sub-tiles.

    psi_ref: SMEM (S*N*N, M) f32  psi pre-scaled by 2**-SCALE_LOG2, entries-major
    c_ref:   VMEM (M,    bs, 128) coefficients, batch on lanes
    x_ref:   VMEM (S*N,  bs, 128) input vectors, batch on lanes
    o_ref:   VMEM (S*N,  bs, 128) output vectors, batch on lanes
    """
    e_of = lambda si, i, j: (si * n + i) * n + j
    sn = s * n
    n_entries = s * n * n
    coef = [1.0 / math.factorial(k) for k in range(TAYLOR_ORDER + 1)]

    def bmm(p, q):
        # r[s,i,j] = sum_k p[s,i,k] * q[s,k,j]  -- lane-wise FMAs on full vregs
        out = []
        for si in range(s):
            for i in range(n):
                for j in range(n):
                    acc = p[e_of(si, i, 0)] * q[e_of(si, 0, j)]
                    for k in range(1, n):
                        acc = acc + p[e_of(si, i, k)] * q[e_of(si, k, j)]
                    out.append(acc)
        return out

    def matvec(t, v):
        # r[s,i] = sum_j t[s,i,j] * v[s,j]
        out = []
        for si in range(s):
            for i in range(n):
                acc = t[e_of(si, i, 0)] * v[si * n]
                for j in range(1, n):
                    acc = acc + t[e_of(si, i, j)] * v[si * n + j]
                out.append(acc)
        return out

    @pl.loop(0, sub_steps)
    def _(q):
        row = pl.multiple_of(q * _SUB, _SUB)
        rows = pl.ds(row, _SUB)

        # --- form A/2^s in-kernel: A[e] = sum_m psi[e, m] * c[m] (no HBM A) ---
        cv = [c_ref[mi, rows, :] for mi in range(m)]
        a = []
        for e in range(n_entries):
            acc = psi_ref[e, 0] * cv[0]
            for mi in range(1, m):
                acc = acc + psi_ref[e, mi] * cv[mi]
            a.append(acc)

        # --- exp(A/2^s): order-7 Taylor in coefficient-form Horner; identity
        #     contributions hit the N diagonal planes only (no dense eye). ---
        t = []
        for si in range(s):
            for i in range(n):
                for j in range(n):
                    val = a[e_of(si, i, j)] * jnp.float32(coef[TAYLOR_ORDER])
                    if i == j:
                        val = val + jnp.float32(coef[TAYLOR_ORDER - 1])
                    t.append(val)
        for k in range(TAYLOR_ORDER - 2, -1, -1):
            t = bmm(t, a)
            for si in range(s):
                for i in range(n):
                    e = e_of(si, i, i)
                    t[e] = t[e] + jnp.float32(coef[k])

        # --- undo the scaling: square SCALE_LOG2-2 times ... ---
        for _sq in range(SCALE_LOG2 - _MATVEC_FOLD):
            t = bmm(t, t)

        # --- ... and fold the remaining 2**2 powers into matvecs:
        #     exp(A) x = (exp(A/4))^4 x = T(T(T(T x))). ---
        v = [x_ref[r, rows, :] for r in range(sn)]
        for _mv in range(1 << _MATVEC_FOLD):
            v = matvec(t, v)

        for r in range(sn):
            o_ref[r, rows, :] = v[r]


def transop_expm_forward(psi, c, x, *, max_block_batch=8192):
    """psi: (M, S, N, N), c: (B, M), x: (B, S*N) -> (B, S*N), float32."""
    M, S, N, _ = psi.shape
    B = c.shape[0]
    E = S * N * N
    SN = S * N

    # --- batch tiling --------------------------------------------------------
    unit = _SUB * _LANE                      # 1024 batch elems per (8,128) sub-tile
    max_units = max(1, max_block_batch // unit)
    total_units = _ceil_div(B, unit)
    # Keep >= 2 grid steps whenever the batch spans more than one sub-tile so
    # v7x's two TensorCores both get work on the "parallel" axis; otherwise use
    # blocks as big as max_block_batch to amortize ~0.35 us/step overhead.
    units_per_block = min(max_units, max(1, _ceil_div(total_units, 2)))
    bs = units_per_block * _SUB              # sublane rows per block
    block_batch = units_per_block * unit
    G = _ceil_div(total_units, units_per_block)
    B_pad = G * block_batch

    # --- wrapper-side layout (small relayouts only; no (E, B) A intermediate) --
    inv_scale = float(2.0 ** (-SCALE_LOG2))
    psi_smem = (psi.reshape(M, E).astype(jnp.float32) * inv_scale).T      # (E, M)
    c_t = jnp.pad(c.astype(jnp.float32).T, ((0, 0), (0, B_pad - B)))      # (M, B_pad)
    x_t = jnp.pad(x.astype(jnp.float32).reshape(B, SN).T,
                  ((0, 0), (0, B_pad - B)))                               # (SN, B_pad)
    c_blk = c_t.reshape(M, G * bs, _LANE)    # free minor-dim split
    x_blk = x_t.reshape(SN, G * bs, _LANE)

    kernel = functools.partial(transop_expm_kernel, s=S, n=N, m=M,
                               sub_steps=units_per_block)

    # Double-buffered c/x/out blocks; only bump the scoped VMEM limit when we
    # approach v5e's 16 MiB default (v6e/v7x defaults are 32 MiB).
    vmem_need = 2 * (M + 2 * SN) * bs * _LANE * 4
    cp = dict(dimension_semantics=("parallel",))
    if vmem_need > 12 * 1024 * 1024:
        cp["vmem_limit_bytes"] = int(vmem_need + 4 * 1024 * 1024)

    out_blk = pl.pallas_call(
        kernel,
        out_shape=jax.ShapeDtypeStruct((SN, G * bs, _LANE), jnp.float32),
        grid=(G,),
        in_specs=[
            pl.BlockSpec(memory_space=pltpu.MemorySpace.SMEM),        # psi (E, M)
            pl.BlockSpec((M, bs, _LANE), lambda g: (0, g, 0)),        # c
            pl.BlockSpec((SN, bs, _LANE), lambda g: (0, g, 0)),       # x
        ],
        out_specs=pl.BlockSpec((SN, bs, _LANE), lambda g: (0, g, 0)),
        compiler_params=pltpu.CompilerParams(**cp),
    )(psi_smem, c_blk, x_blk)

    out_t = out_blk.reshape(SN, B_pad)
    return out_t[:, :B].T                    # slice before transposing back to (B, S*N)


if __name__ == "__main__":
    # module hyperparameters (defaults, dict_count=2 to exercise the dict axis)
    M, N, dict_count, var = 6, 3, 2, 1.0

    key = jax.random.PRNGKey(0)
    k_psi = jax.random.fold_in(key, 0)
    # deterministic parameter init: psi = randn(M, dict_count, N, N) * (var / N)
    psi = jax.random.normal(k_psi, (M, dict_count, N, N), jnp.float32) * (var / N)

    # B=8: single sub-tile / single grid step.  B=2309: multi-sub-tile inner
    # loop, 2 grid steps and batch padding all exercised.
    for B in (8, 2309):
        kc, kx = jax.random.split(jax.random.fold_in(key, B))
        c = jax.random.normal(kc, (B, M), jnp.float32) * 0.3
        x = jax.random.normal(kx, (B, dict_count * N), jnp.float32)

        out = jax.block_until_ready(transop_expm_forward(psi, c, x))

        # pure-JAX reference (same math as the PyTorch forward)
        A = jnp.einsum('bm,msij->bsij', c, psi)
        T = jax.scipy.linalg.expm(A.reshape(-1, N, N)).reshape(B, dict_count, N, N)
        ref = (T @ x.reshape(B, dict_count, N, 1)).reshape(B, dict_count * N)

        assert out.shape == (B, dict_count * N), out.shape
        err = np.max(np.abs(np.asarray(out) - np.asarray(ref)))
        assert np.allclose(np.asarray(out), np.asarray(ref),
                           atol=1e-4, rtol=1e-4), err

    # TODO(synk): SCALE_LOG2/TAYLOR_ORDER are fixed (validated at this coefficient
    # scale); add a ||A||-based (scale, order) selection if c/psi magnitudes grow.
    print("KERNEL_OK")
</pallas_src>

<mosaic_0001>
module attributes {stable_mosaic.version = 11 : i64} {
  func.func @transop_expm_kernel(%arg0: i32, %arg1: memref<18x6xf32, #tpu.memory_space<smem>>, %arg2: memref<6x8x128xf32, #tpu.memory_space<vmem>>, %arg3: memref<6x8x128xf32, #tpu.memory_space<vmem>>, %arg4: memref<6x8x128xf32, #tpu.memory_space<vmem>>) attributes {dimension_semantics = [#tpu.dimension_semantics<parallel>], iteration_bounds = array<i64: 1>, scalar_prefetch = 0 : i64, scratch_operands = 0 : i64, tpu.core_type = #tpu.core_type<tc>, window_params = [{transform_indices = @transform_0, window_bounds = array<i64: 18, 6>}, {transform_indices = @transform_1, window_bounds = array<i64: 6, 8, 128>}, {transform_indices = @transform_2, window_bounds = array<i64: 6, 8, 128>}, {transform_indices = @transform_3, window_bounds = array<i64: 6, 8, 128>}]} {
    %c0_i32 = arith.constant 0 : i32
    %c1_i32 = arith.constant 1 : i32
    %0 = arith.muli %c0_i32, %c1_i32 : i32
    %c0_i32_0 = arith.constant 0 : i32
    %1 = arith.addi %c0_i32_0, %0 : i32
    %c8_i32 = arith.constant 8 : i32
    %2 = arith.muli %1, %c8_i32 : i32
    %3 = tpu.assume_multiple %2, 8 : i32
    %c0 = arith.constant 0 : index
    %4 = arith.index_cast %3 : i32 to index
    %c0_1 = arith.constant 0 : index
    %5 = vector.load %arg2[%c0, %4, %c0_1] : memref<6x8x128xf32, #tpu.memory_space<vmem>>, vector<1x8x128xf32>
    %6 = vector.shape_cast %5 : vector<1x8x128xf32> to vector<8x128xf32>
    %c1 = arith.constant 1 : index
    %7 = arith.index_cast %3 : i32 to index
    %c0_2 = arith.constant 0 : index
    %8 = vector.load %arg2[%c1, %7, %c0_2] : memref<6x8x128xf32, #tpu.memory_space<vmem>>, vector<1x8x128xf32>
    %9 = vector.shape_cast %8 : vector<1x8x128xf32> to vector<8x128xf32>
    %c2 = arith.constant 2 : index
    %10 = arith.index_cast %3 : i32 to index
    %c0_3 = arith.constant 0 : index
    %11 = vector.load %arg2[%c2, %10, %c0_3] : memref<6x8x128xf32, #tpu.memory_space<vmem>>, vector<1x8x128xf32>
    %12 = vector.shape_cast %11 : vector<1x8x128xf32> to vector<8x128xf32>
    %c3 = arith.constant 3 : index
    %13 = arith.index_cast %3 : i32 to index
    %c0_4 = arith.constant 0 : index
    %14 = vector.load %arg2[%c3, %13, %c0_4] : memref<6x8x128xf32, #tpu.memory_space<vmem>>, vector<1x8x128xf32>
    %15 = vector.shape_cast %14 : vector<1x8x128xf32> to vector<8x128xf32>
    %c4 = arith.constant 4 : index
    %16 = arith.index_cast %3 : i32 to index
    %c0_5 = arith.constant 0 : index
    %17 = vector.load %arg2[%c4, %16, %c0_5] : memref<6x8x128xf32, #tpu.memory_space<vmem>>, vector<1x8x128xf32>
    %18 = vector.shape_cast %17 : vector<1x8x128xf32> to vector<8x128xf32>
    %c5 = arith.constant 5 : index
    %19 = arith.index_cast %3 : i32 to index
    %c0_6 = arith.constant 0 : index
    %20 = vector.load %arg2[%c5, %19, %c0_6] : memref<6x8x128xf32, #tpu.memory_space<vmem>>, vector<1x8x128xf32>
    %21 = vector.shape_cast %20 : vector<1x8x128xf32> to vector<8x128xf32>
    %c0_7 = arith.constant 0 : index
    %c0_8 = arith.constant 0 : index
    %22 = memref.load %arg1[%c0_7, %c0_8] : memref<18x6xf32, #tpu.memory_space<smem>>
    %23 = vector.broadcast %22 : f32 to vector<8x128xf32>
    %24 = arith.mulf %23, %6 : vector<8x128xf32>
    %c0_9 = arith.constant 0 : index
    %c1_10 = arith.constant 1 : index
    %25 = memref.load %arg1[%c0_9, %c1_10] : memref<18x6xf32, #tpu.memory_space<smem>>
    %26 = vector.broadcast %25 : f32 to vector<8x128xf32>
    %27 = arith.mulf %26, %9 : vector<8x128xf32>
    %28 = arith.addf %24, %27 : vector<8x128xf32>
    %c0_11 = arith.constant 0 : index
    %c2_12 = arith.constant 2 : index
    %29 = memref.load %arg1[%c0_11, %c2_12] : memref<18x6xf32, #tpu.memory_space<smem>>
    %30 = vector.broadcast %29 : f32 to vector<8x128xf32>
    %31 = arith.mulf %30, %12 : vector<8x128xf32>
    %32 = arith.addf %28, %31 : vector<8x128xf32>
    %c0_13 = arith.constant 0 : index
    %c3_14 = arith.constant 3 : index
    %33 = memref.load %arg1[%c0_13, %c3_14] : memref<18x6xf32, #tpu.memory_space<smem>>
    %34 = vector.broadcast %33 : f32 to vector<8x128xf32>
    %35 = arith.mulf %34, %15 : vector<8x128xf32>
    %36 = arith.addf %32, %35 : vector<8x128xf32>
    %c0_15 = arith.constant 0 : index
    %c4_16 = arith.constant 4 : index
    %37 = memref.load %arg1[%c0_15, %c4_16] : memref<18x6xf32, #tpu.memory_space<smem>>
    %38 = vector.broadcast %37 : f32 to vector<8x128xf32>
    %39 = arith.mulf %38, %18 : vector<8x128xf32>
    %40 = arith.addf %36, %39 : vector<8x128xf32>
    %c0_17 = arith.constant 0 : index
    %c5_18 = arith.constant 5 : index
    %41 = memref.load %arg1[%c0_17, %c5_18] : memref<18x6xf32, #tpu.memory_space<smem>>
    %42 = vector.broadcast %41 : f32 to vector<8x128xf32>
    %43 = arith.mulf %42, %21 : vector<8x128xf32>
    %44 = arith.addf %40, %43 : vector<8x128xf32>
    %c1_19 = arith.constant 1 : index
    %c0_20 = arith.constant 0 : index
    %45 = memref.load %arg1[%c1_19, %c0_20] : memref<18x6xf32, #tpu.memory_space<smem>>
    %46 = vector.broadcast %45 : f32 to vector<8x128xf32>
    %47 = arith.mulf %46, %6 : vector<8x128xf32>
    %c1_21 = arith.constant 1 : index
    %c1_22 = arith.constant 1 : index
    %48 = memref.load %arg1[%c1_21, %c1_22] : memref<18x6xf32, #tpu.memory_space<smem>>
    %49 = vector.broadcast %48 : f32 to vector<8x128xf32>
    %50 = arith.mulf %49, %9 : vector<8x128xf32>
    %51 = arith.addf %47, %50 : vector<8x128xf32>
    %c1_23 = arith.constant 1 : index
    %c2_24 = arith.constant 2 : index
    %52 = memref.load %arg1[%c1_23, %c2_24] : memref<18x6xf32, #tpu.memory_space<smem>>
    %53 = vector.broadcast %52 : f32 to vector<8x128xf32>
    %54 = arith.mulf %53, %12 : vector<8x128xf32>
    %55 = arith.addf %51, %54 : vector<8x128xf32>
    %c1_25 = arith.constant 1 : index
    %c3_26 = arith.constant 3 : index
    %56 = memref.load %arg1[%c1_25, %c3_26] : memref<18x6xf32, #tpu.memory_space<smem>>
    %57 = vector.broadcast %56 : f32 to vector<8x128xf32>
    %58 = arith.mulf %57, %15 : vector<8x128xf32>
    %59 = arith.addf %55, %58 : vector<8x128xf32>
    %c1_27 = arith.constant 1 : index
    %c4_28 = arith.constant 4 : index
    %60 = memref.load %arg1[%c1_27, %c4_28] : memref<18x6xf32, #tpu.memory_space<smem>>
    %61 = vector.broadcast %60 : f32 to vector<8x128xf32>
    %62 = arith.mulf %61, %18 : vector<8x128xf32>
    %63 = arith.addf %59, %62 : vector<8x128xf32>
    %c1_29 = arith.constant 1 : index
    %c5_30 = arith.constant 5 : index
    %64 = memref.load %arg1[%c1_29, %c5_30] : memref<18x6xf32, #tpu.memory_space<smem>>
    %65 = vector.broadcast %64 : f32 to vector<8x128xf32>
    %66 = arith.mulf %65, %21 : vector<8x128xf32>
    %67 = arith.addf %63, %66 : vector<8x128xf32>
    %c2_31 = arith.constant 2 : index
    %c0_32 = arith.constant 0 : index
    %68 = memref.load %arg1[%c2_31, %c0_32] : memref<18x6xf32, #tpu.memory_space<smem>>
    %69 = vector.broadcast %68 : f32 to vector<8x128xf32>
    %70 = arith.mulf %69, %6 : vector<8x128xf32>
    %c2_33 = arith.constant 2 : index
    %c1_34 = arith.constant 1 : index
    %71 = memref.load %arg1[%c2_33, %c1_34] : memref<18x6xf32, #tpu.memory_space<smem>>
    %72 = vector.broadcast %71 : f32 to vector<8x128xf32>
    %73 = arith.mulf %72, %9 : vector<8x128xf32>
    %74 = arith.addf %70, %73 : vector<8x128xf32>
    %c2_35 = arith.constant 2 : index
    %c2_36 = arith.constant 2 : index
    %75 = memref.load %arg1[%c2_35, %c2_36] : memref<18x6xf32, #tpu.memory_space<smem>>
    %76 = vector.broadcast %75 : f32 to vector<8x128xf32>
    %77 = arith.mulf %76, %12 : vector<8x128xf32>
    %78 = arith.addf %74, %77 : vector<8x128xf32>
    %c2_37 = arith.constant 2 : index
    %c3_38 = arith.constant 3 : index
    %79 = memref.load %arg1[%c2_37, %c3_38] : memref<18x6xf32, #tpu.memory_space<smem>>
    %80 = vector.broadcast %79 : f32 to vector<8x128xf32>
    %81 = arith.mulf %80, %15 : vector<8x128xf32>
    %82 = arith.addf %78, %81 : vector<8x128xf32>
    %c2_39 = arith.constant 2 : index
    %c4_40 = arith.constant 4 : index
    %83 = memref.load %arg1[%c2_39, %c4_40] : memref<18x6xf32, #tpu.memory_space<smem>>
    %84 = vector.broadcast %83 : f32 to vector<8x128xf32>
    %85 = arith.mulf %84, %18 : vector<8x128xf32>
    %86 = arith.addf %82, %85 : vector<8x128xf32>
    %c2_41 = arith.constant 2 : index
    %c5_42 = arith.constant 5 : index
    %87 = memref.load %arg1[%c2_41, %c5_42] : memref<18x6xf32, #tpu.memory_space<smem>>
    %88 = vector.broadcast %87 : f32 to vector<8x128xf32>
    %89 = arith.mulf %88, %21 : vector<8x128xf32>
    %90 = arith.addf %86, %89 : vector<8x128xf32>
    %c3_43 = arith.constant 3 : index
    %c0_44 = arith.constant 0 : index
    %91 = memref.load %arg1[%c3_43, %c0_44] : memref<18x6xf32, #tpu.memory_space<smem>>
    %92 = vector.broadcast %91 : f32 to vector<8x128xf32>
    %93 = arith.mulf %92, %6 : vector<8x128xf32>
    %c3_45 = arith.constant 3 : index
    %c1_46 = arith.constant 1 : index
    %94 = memref.load %arg1[%c3_45, %c1_46] : memref<18x6xf32, #tpu.memory_space<smem>>
    %95 = vector.broadcast %94 : f32 to vector<8x128xf32>
    %96 = arith.mulf %95, %9 : vector<8x128xf32>
    %97 = arith.addf %93, %96 : vector<8x128xf32>
    %c3_47 = arith.constant 3 : index
    %c2_48 = arith.constant 2 : index
    %98 = memref.load %arg1[%c3_47, %c2_48] : memref<18x6xf32, #tpu.memory_space<smem>>
    %99 = vector.broadcast %98 : f32 to vector<8x128xf32>
    %100 = arith.mulf %99, %12 : vector<8x128xf32>
    %101 = arith.addf %97, %100 : vector<8x128xf32>
    %c3_49 = arith.constant 3 : index
    %c3_50 = arith.constant 3 : index
    %102 = memref.load %arg1[%c3_49, %c3_50] : memref<18x6xf32, #tpu.memory_space<smem>>
    %103 = vector.broadcast %102 : f32 to vector<8x128xf32>
    %104 = arith.mulf %103, %15 : vector<8x128xf32>
    %105 = arith.addf %101, %104 : vector<8x128xf32>
    %c3_51 = arith.constant 3 : index
    %c4_52 = arith.constant 4 : index
    %106 = memref.load %arg1[%c3_51, %c4_52] : memref<18x6xf32, #tpu.memory_space<smem>>
    %107 = vector.broadcast %106 : f32 to vector<8x128xf32>
    %108 = arith.mulf %107, %18 : vector<8x128xf32>
    %109 = arith.addf %105, %108 : vector<8x128xf32>
    %c3_53 = arith.constant 3 : index
    %c5_54 = arith.constant 5 : index
    %110 = memref.load %arg1[%c3_53, %c5_54] : memref<18x6xf32, #tpu.memory_space<smem>>
    %111 = vector.broadcast %110 : f32 to vector<8x128xf32>
    %112 = arith.mulf %111, %21 : vector<8x128xf32>
    %113 = arith.addf %109, %112 : vector<8x128xf32>
    %c4_55 = arith.constant 4 : index
    %c0_56 = arith.constant 0 : index
    %114 = memref.load %arg1[%c4_55, %c0_56] : memref<18x6xf32, #tpu.memory_space<smem>>
    %115 = vector.broadcast %114 : f32 to vector<8x128xf32>
    %116 = arith.mulf %115, %6 : vector<8x128xf32>
    %c4_57 = arith.constant 4 : index
    %c1_58 = arith.constant 1 : index
    %117 = memref.load %arg1[%c4_57, %c1_58] : memref<18x6xf32, #tpu.memory_space<smem>>
    %118 = vector.broadcast %117 : f32 to vector<8x128xf32>
    %119 = arith.mulf %118, %9 : vector<8x128xf32>
    %120 = arith.addf %116, %119 : vector<8x128xf32>
    %c4_59 = arith.constant 4 : index
    %c2_60 = arith.constant 2 : index
    %121 = memref.load %arg1[%c4_59, %c2_60] : memref<18x6xf32, #tpu.memory_space<smem>>
    %122 = vector.broadcast %121 : f32 to vector<8x128xf32>
    %123 = arith.mulf %122, %12 : vector<8x128xf32>
    %124 = arith.addf %120, %123 : vector<8x128xf32>
    %c4_61 = arith.constant 4 : index
    %c3_62 = arith.constant 3 : index
    %125 = memref.load %arg1[%c4_61, %c3_62] : memref<18x6xf32, #tpu.memory_space<smem>>
    %126 = vector.broadcast %125 : f32 to vector<8x128xf32>
    %127 = arith.mulf %126, %15 : vector<8x128xf32>
    %128 = arith.addf %124, %127 : vector<8x128xf32>
    %c4_63 = arith.constant 4 : index
    %c4_64 = arith.constant 4 : index
    %129 = memref.load %arg1[%c4_63, %c4_64] : memref<18x6xf32, #tpu.memory_space<smem>>
    %130 = vector.broadcast %129 : f32 to vector<8x128xf32>
    %131 = arith.mulf %130, %18 : vector<8x128xf32>
    %132 = arith.addf %128, %131 : vector<8x128xf32>
    %c4_65 = arith.constant 4 : index
    %c5_66 = arith.constant 5 : index
    %133 = memref.load %arg1[%c4_65, %c5_66] : memref<18x6xf32, #tpu.memory_space<smem>>
    %134 = vector.broadcast %133 : f32 to vector<8x128xf32>
    %135 = arith.mulf %134, %21 : vector<8x128xf32>
    %136 = arith.addf %132, %135 : vector<8x128xf32>
    %c5_67 = arith.constant 5 : index
    %c0_68 = arith.constant 0 : index
    %137 = memref.load %arg1[%c5_67, %c0_68] : memref<18x6xf32, #tpu.memory_space<smem>>
    %138 = vector.broadcast %137 : f32 to vector<8x128xf32>
    %139 = arith.mulf %138, %6 : vector<8x128xf32>
    %c5_69 = arith.constant 5 : index
    %c1_70 = arith.constant 1 : index
    %140 = memref.load %arg1[%c5_69, %c1_70] : memref<18x6xf32, #tpu.memory_space<smem>>
    %141 = vector.broadcast %140 : f32 to vector<8x128xf32>
    %142 = arith.mulf %141, %9 : vector<8x128xf32>
    %143 = arith.addf %139, %142 : vector<8x128xf32>
    %c5_71 = arith.constant 5 : index
    %c2_72 = arith.constant 2 : index
    %144 = memref.load %arg1[%c5_71, %c2_72] : memref<18x6xf32, #tpu.memory_space<smem>>
    %145 = vector.broadcast %144 : f32 to vector<8x128xf32>
    %146 = arith.mulf %145, %12 : vector<8x128xf32>
    %147 = arith.addf %143, %146 : vector<8x128xf32>
    %c5_73 = arith.constant 5 : index
    %c3_74 = arith.constant 3 : index
    %148 = memref.load %arg1[%c5_73, %c3_74] : memref<18x6xf32, #tpu.memory_space<smem>>
    %149 = vector.broadcast %148 : f32 to vector<8x128xf32>
    %150 = arith.mulf %149, %15 : vector<8x128xf32>
    %151 = arith.addf %147, %150 : vector<8x128xf32>
    %c5_75 = arith.constant 5 : index
    %c4_76 = arith.constant 4 : index
    %152 = memref.load %arg1[%c5_75, %c4_76] : memref<18x6xf32, #tpu.memory_space<smem>>
    %153 = vector.broadcast %152 : f32 to vector<8x128xf32>
    %154 = arith.mulf %153, %18 : vector<8x128xf32>
    %155 = arith.addf %151, %154 : vector<8x128xf32>
    %c5_77 = arith.constant 5 : index
    %c5_78 = arith.constant 5 : index
    %156 = memref.load %arg1[%c5_77, %c5_78] : memref<18x6xf32, #tpu.memory_space<smem>>
    %157 = vector.broadcast %156 : f32 to vector<8x128xf32>
    %158 = arith.mulf %157, %21 : vector<8x128xf32>
    %159 = arith.addf %155, %158 : vector<8x128xf32>
    %c6 = arith.constant 6 : index
    %c0_79 = arith.constant 0 : index
    %160 = memref.load %arg1[%c6, %c0_79] : memref<18x6xf32, #tpu.memory_space<smem>>
    %161 = vector.broadcast %160 : f32 to vector<8x128xf32>
    %162 = arith.mulf %161, %6 : vector<8x128xf32>
    %c6_80 = arith.constant 6 : index
    %c1_81 = arith.constant 1 : index
    %163 = memref.load %arg1[%c6_80, %c1_81] : memref<18x6xf32, #tpu.memory_space<smem>>
    %164 = vector.broadcast %163 : f32 to vector<8x128xf32>
    %165 = arith.mulf %164, %9 : vector<8x128xf32>
    %166 = arith.addf %162, %165 : vector<8x128xf32>
    %c6_82 = arith.constant 6 : index
    %c2_83 = arith.constant 2 : index
    %167 = memref.load %arg1[%c6_82, %c2_83] : memref<18x6xf32, #tpu.memory_space<smem>>
    %168 = vector.broadcast %167 : f32 to vector<8x128xf32>
    %169 = arith.mulf %168, %12 : vector<8x128xf32>
    %170 = arith.addf %166, %169 : vector<8x128xf32>
    %c6_84 = arith.constant 6 : index
    %c3_85 = arith.constant 3 : index
    %171 = memref.load %arg1[%c6_84, %c3_85] : memref<18x6xf32, #tpu.memory_space<smem>>
    %172 = vector.broadcast %171 : f32 to vector<8x128xf32>
    %173 = arith.mulf %172, %15 : vector<8x128xf32>
    %174 = arith.addf %170, %173 : vector<8x128xf32>
    %c6_86 = arith.constant 6 : index
    %c4_87 = arith.constant 4 : index
    %175 = memref.load %arg1[%c6_86, %c4_87] : memref<18x6xf32, #tpu.memory_space<smem>>
    %176 = vector.broadcast %175 : f32 to vector<8x128xf32>
    %177 = arith.mulf %176, %18 : vector<8x128xf32>
    %178 = arith.addf %174, %177 : vector<8x128xf32>
    %c6_88 = arith.constant 6 : index
    %c5_89 = arith.constant 5 : index
    %179 = memref.load %arg1[%c6_88, %c5_89] : memref<18x6xf32, #tpu.memory_space<smem>>
    %180 = vector.broadcast %179 : f32 to vector<8x128xf32>
    %181 = arith.mulf %180, %21 : vector<8x128xf32>
    %182 = arith.addf %178, %181 : vector<8x128xf32>
    %c7 = arith.constant 7 : index
    %c0_90 = arith.constant 0 : index
    %183 = memref.load %arg1[%c7, %c0_90] : memref<18x6xf32, #tpu.memory_space<smem>>
    %184 = vector.broadcast %183 : f32 to vector<8x128xf32>
    %185 = arith.mulf %184, %6 : vector<8x128xf32>
    %c7_91 = arith.constant 7 : index
    %c1_92 = arith.constant 1 : index
    %186 = memref.load %arg1[%c7_91, %c1_92] : memref<18x6xf32, #tpu.memory_space<smem>>
    %187 = vector.broadcast %186 : f32 to vector<8x128xf32>
    %188 = arith.mulf %187, %9 : vector<8x128xf32>
    %189 = arith.addf %185, %188 : vector<8x128xf32>
    %c7_93 = arith.constant 7 : index
    %c2_94 = arith.constant 2 : index
    %190 = memref.load %arg1[%c7_93, %c2_94] : memref<18x6xf32, #tpu.memory_space<smem>>
    %191 = vector.broadcast %190 : f32 to vector<8x128xf32>
    %192 = arith.mulf %191, %12 : vector<8x128xf32>
    %193 = arith.addf %189, %192 : vector<8x128xf32>
    %c7_95 = arith.constant 7 : index
    %c3_96 = arith.constant 3 : index
    %194 = memref.load %arg1[%c7_95, %c3_96] : memref<18x6xf32, #tpu.memory_space<smem>>
    %195 = vector.broadcast %194 : f32 to vector<8x128xf32>
    %196 = arith.mulf %195, %15 : vector<8x128xf32>
    %197 = arith.addf %193, %196 : vector<8x128xf32>
    %c7_97 = arith.constant 7 : index
    %c4_98 = arith.constant 4 : index
    %198 = memref.load %arg1[%c7_97, %c4_98] : memref<18x6xf32, #tpu.memory_space<smem>>
    %199 = vector.broadcast %198 : f32 to vector<8x128xf32>
    %200 = arith.mulf %199, %18 : vector<8x128xf32>
    %201 = arith.addf %197, %200 : vector<8x128xf32>
    %c7_99 = arith.constant 7 : index
    %c5_100 = arith.constant 5 : index
    %202 = memref.load %arg1[%c7_99, %c5_100] : memref<18x6xf32, #tpu.memory_space<smem>>
    %203 = vector.broadcast %202 : f32 to vector<8x128xf32>
    %204 = arith.mulf %203, %21 : vector<8x128xf32>
    %205 = arith.addf %201, %204 : vector<8x128xf32>
    %c8 = arith.constant 8 : index
    %c0_101 = arith.constant 0 : index
    %206 = memref.load %arg1[%c8, %c0_101] : memref<18x6xf32, #tpu.memory_space<smem>>
    %207 = vector.broadcast %206 : f32 to vector<8x128xf32>
    %208 = arith.mulf %207, %6 : vector<8x128xf32>
    %c8_102 = arith.constant 8 : index
    %c1_103 = arith.constant 1 : index
    %209 = memref.load %arg1[%c8_102, %c1_103] : memref<18x6xf32, #tpu.memory_space<smem>>
    %210 = vector.broadcast %209 : f32 to vector<8x128xf32>
    %211 = arith.mulf %210, %9 : vector<8x128xf32>
    %212 = arith.addf %208, %211 : vector<8x128xf32>
    %c8_104 = arith.constant 8 : index
    %c2_105 = arith.constant 2 : index
    %213 = memref.load %arg1[%c8_104, %c2_105] : memref<18x6xf32, #tpu.memory_space<smem>>
    %214 = vector.broadcast %213 : f32 to vector<8x128xf32>
    %215 = arith.mulf %214, %12 : vector<8x128xf32>
    %216 = arith.addf %212, %215 : vector<8x128xf32>
    %c8_106 = arith.constant 8 : index
    %c3_107 = arith.constant 3 : index
    %217 = memref.load %arg1[%c8_106, %c3_107] : memref<18x6xf32, #tpu.memory_space<smem>>
    %218 = vector.broadcast %217 : f32 to vector<8x128xf32>
    %219 = arith.mulf %218, %15 : vector<8x128xf32>
    %220 = arith.addf %216, %219 : vector<8x128xf32>
    %c8_108 = arith.constant 8 : index
    %c4_109 = arith.constant 4 : index
    %221 = memref.load %arg1[%c8_108, %c4_109] : memref<18x6xf32, #tpu.memory_space<smem>>
    %222 = vector.broadcast %221 : f32 to vector<8x128xf32>
    %223 = arith.mulf %222, %18 : vector<8x128xf32>
    %224 = arith.addf %220, %223 : vector<8x128xf32>
    %c8_110 = arith.constant 8 : index
    %c5_111 = arith.constant 5 : index
    %225 = memref.load %arg1[%c8_110, %c5_111] : memref<18x6xf32, #tpu.memory_space<smem>>
    %226 = vector.broadcast %225 : f32 to vector<8x128xf32>
    %227 = arith.mulf %226, %21 : vector<8x128xf32>
    %228 = arith.addf %224, %227 : vector<8x128xf32>
    %c9 = arith.constant 9 : index
    %c0_112 = arith.constant 0 : index
    %229 = memref.load %arg1[%c9, %c0_112] : memref<18x6xf32, #tpu.memory_space<smem>>
    %230 = vector.broadcast %229 : f32 to vector<8x128xf32>
    %231 = arith.mulf %230, %6 : vector<8x128xf32>
    %c9_113 = arith.constant 9 : index
    %c1_114 = arith.constant 1 : index
    %232 = memref.load %arg1[%c9_113, %c1_114] : memref<18x6xf32, #tpu.memory_space<smem>>
    %233 = vector.broadcast %232 : f32 to vector<8x128xf32>
    %234 = arith.mulf %233, %9 : vector<8x128xf32>
    %235 = arith.addf %231, %234 : vector<8x128xf32>
    %c9_115 = arith.constant 9 : index
    %c2_116 = arith.constant 2 : index
    %236 = memref.load %arg1[%c9_115, %c2_116] : memref<18x6xf32, #tpu.memory_space<smem>>
    %237 = vector.broadcast %236 : f32 to vector<8x128xf32>
    %238 = arith.mulf %237, %12 : vector<8x128xf32>
    %239 = arith.addf %235, %238 : vector<8x128xf32>
    %c9_117 = arith.constant 9 : index
    %c3_118 = arith.constant 3 : index
    %240 = memref.load %arg1[%c9_117, %c3_118] : memref<18x6xf32, #tpu.memory_space<smem>>
    %241 = vector.broadcast %240 : f32 to vector<8x128xf32>
    %242 = arith.mulf %241, %15 : vector<8x128xf32>
    %243 = arith.addf %239, %242 : vector<8x128xf32>
    %c9_119 = arith.constant 9 : index
    %c4_120 = arith.constant 4 : index
    %244 = memref.load %arg1[%c9_119, %c4_120] : memref<18x6xf32, #tpu.memory_space<smem>>
    %245 = vector.broadcast %244 : f32 to vector<8x128xf32>
    %246 = arith.mulf %245, %18 : vector<8x128xf32>
    %247 = arith.addf %243, %246 : vector<8x128xf32>
    %c9_121 = arith.constant 9 : index
    %c5_122 = arith.constant 5 : index
    %248 = memref.load %arg1[%c9_121, %c5_122] : memref<18x6xf32, #tpu.memory_space<smem>>
    %249 = vector.broadcast %248 : f32 to vector<8x128xf32>
    %250 = arith.mulf %249, %21 : vector<8x128xf32>
    %251 = arith.addf %247, %250 : vector<8x128xf32>
    %c10 = arith.constant 10 : index
    %c0_123 = arith.constant 0 : index
    %252 = memref.load %arg1[%c10, %c0_123] : memref<18x6xf32, #tpu.memory_space<smem>>
    %253 = vector.broadcast %252 : f32 to vector<8x128xf32>
    %254 = arith.mulf %253, %6 : vector<8x128xf32>
    %c10_124 = arith.constant 10 : index
    %c1_125 = arith.constant 1 : index
    %255 = memref.load %arg1[%c10_124, %c1_125] : memref<18x6xf32, #tpu.memory_space<smem>>
    %256 = vector.broadcast %255 : f32 to vector<8x128xf32>
    %257 = arith.mulf %256, %9 : vector<8x128xf32>
    %258 = arith.addf %254, %257 : vector<8x128xf32>
    %c10_126 = arith.constant 10 : index
    %c2_127 = arith.constant 2 : index
    %259 = memref.load %arg1[%c10_126, %c2_127] : memref<18x6xf32, #tpu.memory_space<smem>>
    %260 = vector.broadcast %259 : f32 to vector<8x128xf32>
    %261 = arith.mulf %260, %12 : vector<8x128xf32>
    %262 = arith.addf %258, %261 : vector<8x128xf32>
    %c10_128 = arith.constant 10 : index
    %c3_129 = arith.constant 3 : index
    %263 = memref.load %arg1[%c10_128, %c3_129] : memref<18x6xf32, #tpu.memory_space<smem>>
    %264 = vector.broadcast %263 : f32 to vector<8x128xf32>
    %265 = arith.mulf %264, %15 : vector<8x128xf32>
    %266 = arith.addf %262, %265 : vector<8x128xf32>
    %c10_130 = arith.constant 10 : index
    %c4_131 = arith.constant 4 : index
    %267 = memref.load %arg1[%c10_130, %c4_131] : memref<18x6xf32, #tpu.memory_space<smem>>
    %268 = vector.broadcast %267 : f32 to vector<8x128xf32>
    %269 = arith.mulf %268, %18 : vector<8x128xf32>
    %270 = arith.addf %266, %269 : vector<8x128xf32>
    %c10_132 = arith.constant 10 : index
    %c5_133 = arith.constant 5 : index
    %271 = memref.load %arg1[%c10_132, %c5_133] : memref<18x6xf32, #tpu.memory_space<smem>>
    %272 = vector.broadcast %271 : f32 to vector<8x128xf32>
    %273 = arith.mulf %272, %21 : vector<8x128xf32>
    %274 = arith.addf %270, %273 : vector<8x128xf32>
    %c11 = arith.constant 11 : index
    %c0_134 = arith.constant 0 : index
    %275 = memref.load %arg1[%c11, %c0_134] : memref<18x6xf32, #tpu.memory_space<smem>>
    %276 = vector.broadcast %275 : f32 to vector<8x128xf32>
    %277 = arith.mulf %276, %6 : vector<8x128xf32>
    %c11_135 = arith.constant 11 : index
    %c1_136 = arith.constant 1 : index
    %278 = memref.load %arg1[%c11_135, %c1_136] : memref<18x6xf32, #tpu.memory_space<smem>>
    %279 = vector.broadcast %278 : f32 to vector<8x128xf32>
    %280 = arith.mulf %279, %9 : vector<8x128xf32>
    %281 = arith.addf %277, %280 : vector<8x128xf32>
    %c11_137 = arith.constant 11 : index
    %c2_138 = arith.constant 2 : index
    %282 = memref.load %arg1[%c11_137, %c2_138] : memref<18x6xf32, #tpu.memory_space<smem>>
    %283 = vector.broadcast %282 : f32 to vector<8x128xf32>
    %284 = arith.mulf %283, %12 : vector<8x128xf32>
    %285 = arith.addf %281, %284 : vector<8x128xf32>
    %c11_139 = arith.constant 11 : index
    %c3_140 = arith.constant 3 : index
    %286 = memref.load %arg1[%c11_139, %c3_140] : memref<18x6xf32, #tpu.memory_space<smem>>
    %287 = vector.broadcast %286 : f32 to vector<8x128xf32>
    %288 = arith.mulf %287, %15 : vector<8x128xf32>
    %289 = arith.addf %285, %288 : vector<8x128xf32>
    %c11_141 = arith.constant 11 : index
    %c4_142 = arith.constant 4 : index
    %290 = memref.load %arg1[%c11_141, %c4_142] : memref<18x6xf32, #tpu.memory_space<smem>>
    %291 = vector.broadcast %290 : f32 to vector<8x128xf32>
    %292 = arith.mulf %291, %18 : vector<8x128xf32>
    %293 = arith.addf %289, %292 : vector<8x128xf32>
    %c11_143 = arith.constant 11 : index
    %c5_144 = arith.constant 5 : index
    %294 = memref.load %arg1[%c11_143, %c5_144] : memref<18x6xf32, #tpu.memory_space<smem>>
    %295 = vector.broadcast %294 : f32 to vector<8x128xf32>
    %296 = arith.mulf %295, %21 : vector<8x128xf32>
    %297 = arith.addf %293, %296 : vector<8x128xf32>
    %c12 = arith.constant 12 : index
    %c0_145 = arith.constant 0 : index
    %298 = memref.load %arg1[%c12, %c0_145] : memref<18x6xf32, #tpu.memory_space<smem>>
    %299 = vector.broadcast %298 : f32 to vector<8x128xf32>
    %300 = arith.mulf %299, %6 : vector<8x128xf32>
    %c12_146 = arith.constant 12 : index
    %c1_147 = arith.constant 1 : index
    %301 = memref.load %arg1[%c12_146, %c1_147] : memref<18x6xf32, #tpu.memory_space<smem>>
    %302 = vector.broadcast %301 : f32 to vector<8x128xf32>
    %303 = arith.mulf %302, %9 : vector<8x128xf32>
    %304 = arith.addf %300, %303 : vector<8x128xf32>
    %c12_148 = arith.constant 12 : index
    %c2_149 = arith.constant 2 : index
    %305 = memref.load %arg1[%c12_148, %c2_149] : memref<18x6xf32, #tpu.memory_space<smem>>
    %306 = vector.broadcast %305 : f32 to vector<8x128xf32>
    %307 = arith.mulf %306, %12 : vector<8x128xf32>
    %308 = arith.addf %304, %307 : vector<8x128xf32>
    %c12_150 = arith.constant 12 : index
    %c3_151 = arith.constant 3 : index
    %309 = memref.load %arg1[%c12_150, %c3_151] : memref<18x6xf32, #tpu.memory_space<smem>>
    %310 = vector.broadcast %309 : f32 to vector<8x128xf32>
    %311 = arith.mulf %310, %15 : vector<8x128xf32>
    %312 = arith.addf %308, %311 : vector<8x128xf32>
    %c12_152 = arith.constant 12 : index
    %c4_153 = arith.constant 4 : index
    %313 = memref.load %arg1[%c12_152, %c4_153] : memref<18x6xf32, #tpu.memory_space<smem>>
    %314 = vector.broadcast %313 : f32 to vector<8x128xf32>
    %315 = arith.mulf %314, %18 : vector<8x128xf32>
    %316 = arith.addf %312, %315 : vector<8x128xf32>
    %c12_154 = arith.constant 12 : index
    %c5_155 = arith.constant 5 : index
    %317 = memref.load %arg1[%c12_154, %c5_155] : memref<18x6xf32, #tpu.memory_space<smem>>
    %318 = vector.broadcast %317 : f32 to vector<8x128xf32>
    %319 = arith.mulf %318, %21 : vector<8x128xf32>
    %320 = arith.addf %316, %319 : vector<8x128xf32>
    %c13 = arith.constant 13 : index
    %c0_156 = arith.constant 0 : index
    %321 = memref.load %arg1[%c13, %c0_156] : memref<18x6xf32, #tpu.memory_space<smem>>
    %322 = vector.broadcast %321 : f32 to vector<8x128xf32>
    %323 = arith.mulf %322, %6 : vector<8x128xf32>
    %c13_157 = arith.constant 13 : index
    %c1_158 = arith.constant 1 : index
    %324 = memref.load %arg1[%c13_157, %c1_158] : memref<18x6xf32, #tpu.memory_space<smem>>
    %325 = vector.broadcast %324 : f32 to vector<8x128xf32>
    %326 = arith.mulf %325, %9 : vector<8x128xf32>
    %327 = arith.addf %323, %326 : vector<8x128xf32>
    %c13_159 = arith.constant 13 : index
    %c2_160 = arith.constant 2 : index
    %328 = memref.load %arg1[%c13_159, %c2_160] : memref<18x6xf32, #tpu.memory_space<smem>>
    %329 = vector.broadcast %328 : f32 to vector<8x128xf32>
    %330 = arith.mulf %329, %12 : vector<8x128xf32>
    %331 = arith.addf %327, %330 : vector<8x128xf32>
    %c13_161 = arith.constant 13 : index
    %c3_162 = arith.constant 3 : index
    %332 = memref.load %arg1[%c13_161, %c3_162] : memref<18x6xf32, #tpu.memory_space<smem>>
    %333 = vector.broadcast %332 : f32 to vector<8x128xf32>
    %334 = arith.mulf %333, %15 : vector<8x128xf32>
    %335 = arith.addf %331, %334 : vector<8x128xf32>
    %c13_163 = arith.constant 13 : index
    %c4_164 = arith.constant 4 : index
    %336 = memref.load %arg1[%c13_163, %c4_164] : memref<18x6xf32, #tpu.memory_space<smem>>
    %337 = vector.broadcast %336 : f32 to vector<8x128xf32>
    %338 = arith.mulf %337, %18 : vector<8x128xf32>
    %339 = arith.addf %335, %338 : vector<8x128xf32>
    %c13_165 = arith.constant 13 : index
    %c5_166 = arith.constant 5 : index
    %340 = memref.load %arg1[%c13_165, %c5_166] : memref<18x6xf32, #tpu.memory_space<smem>>
    %341 = vector.broadcast %340 : f32 to vector<8x128xf32>
    %342 = arith.mulf %341, %21 : vector<8x128xf32>
    %343 = arith.addf %339, %342 : vector<8x128xf32>
    %c14 = arith.constant 14 : index
    %c0_167 = arith.constant 0 : index
    %344 = memref.load %arg1[%c14, %c0_167] : memref<18x6xf32, #tpu.memory_space<smem>>
    %345 = vector.broadcast %344 : f32 to vector<8x128xf32>
    %346 = arith.mulf %345, %6 : vector<8x128xf32>
    %c14_168 = arith.constant 14 : index
    %c1_169 = arith.constant 1 : index
    %347 = memref.load %arg1[%c14_168, %c1_169] : memref<18x6xf32, #tpu.memory_space<smem>>
    %348 = vector.broadcast %347 : f32 to vector<8x128xf32>
    %349 = arith.mulf %348, %9 : vector<8x128xf32>
    %350 = arith.addf %346, %349 : vector<8x128xf32>
    %c14_170 = arith.constant 14 : index
    %c2_171 = arith.constant 2 : index
    %351 = memref.load %arg1[%c14_170, %c2_171] : memref<18x6xf32, #tpu.memory_space<smem>>
    %352 = vector.broadcast %351 : f32 to vector<8x128xf32>
    %353 = arith.mulf %352, %12 : vector<8x128xf32>
    %354 = arith.addf %350, %353 : vector<8x128xf32>
    %c14_172 = arith.constant 14 : index
    %c3_173 = arith.constant 3 : index
    %355 = memref.load %arg1[%c14_172, %c3_173] : memref<18x6xf32, #tpu.memory_space<smem>>
    %356 = vector.broadcast %355 : f32 to vector<8x128xf32>
    %357 = arith.mulf %356, %15 : vector<8x128xf32>
    %358 = arith.addf %354, %357 : vector<8x128xf32>
    %c14_174 = arith.constant 14 : index
    %c4_175 = arith.constant 4 : index
    %359 = memref.load %arg1[%c14_174, %c4_175] : memref<18x6xf32, #tpu.memory_space<smem>>
    %360 = vector.broadcast %359 : f32 to vector<8x128xf32>
    %361 = arith.mulf %360, %18 : vector<8x128xf32>
    %362 = arith.addf %358, %361 : vector<8x128xf32>
    %c14_176 = arith.constant 14 : index
    %c5_177 = arith.constant 5 : index
    %363 = memref.load %arg1[%c14_176, %c5_177] : memref<18x6xf32, #tpu.memory_space<smem>>
    %364 = vector.broadcast %363 : f32 to vector<8x128xf32>
    %365 = arith.mulf %364, %21 : vector<8x128xf32>
    %366 = arith.addf %362, %365 : vector<8x128xf32>
    %c15 = arith.constant 15 : index
    %c0_178 = arith.constant 0 : index
    %367 = memref.load %arg1[%c15, %c0_178] : memref<18x6xf32, #tpu.memory_space<smem>>
    %368 = vector.broadcast %367 : f32 to vector<8x128xf32>
    %369 = arith.mulf %368, %6 : vector<8x128xf32>
    %c15_179 = arith.constant 15 : index
    %c1_180 = arith.constant 1 : index
    %370 = memref.load %arg1[%c15_179, %c1_180] : memref<18x6xf32, #tpu.memory_space<smem>>
    %371 = vector.broadcast %370 : f32 to vector<8x128xf32>
    %372 = arith.mulf %371, %9 : vector<8x128xf32>
    %373 = arith.addf %369, %372 : vector<8x128xf32>
    %c15_181 = arith.constant 15 : index
    %c2_182 = arith.constant 2 : index
    %374 = memref.load %arg1[%c15_181, %c2_182] : memref<18x6xf32, #tpu.memory_space<smem>>
    %375 = vector.broadcast %374 : f32 to vector<8x128xf32>
    %376 = arith.mulf %375, %12 : vector<8x128xf32>
    %377 = arith.addf %373, %376 : vector<8x128xf32>
    %c15_183 = arith.constant 15 : index
    %c3_184 = arith.constant 3 : index
    %378 = memref.load %arg1[%c15_183, %c3_184] : memref<18x6xf32, #tpu.memory_space<smem>>
    %379 = vector.broadcast %378 : f32 to vector<8x128xf32>
    %380 = arith.mulf %379, %15 : vector<8x128xf32>
    %381 = arith.addf %377, %380 : vector<8x128xf32>
    %c15_185 = arith.constant 15 : index
    %c4_186 = arith.constant 4 : index
    %382 = memref.load %arg1[%c15_185, %c4_186] : memref<18x6xf32, #tpu.memory_space<smem>>
    %383 = vector.broadcast %382 : f32 to vector<8x128xf32>
    %384 = arith.mulf %383, %18 : vector<8x128xf32>
    %385 = arith.addf %381, %384 : vector<8x128xf32>
    %c15_187 = arith.constant 15 : index
    %c5_188 = arith.constant 5 : index
    %386 = memref.load %arg1[%c15_187, %c5_188] : memref<18x6xf32, #tpu.memory_space<smem>>
    %387 = vector.broadcast %386 : f32 to vector<8x128xf32>
    %388 = arith.mulf %387, %21 : vector<8x128xf32>
    %389 = arith.addf %385, %388 : vector<8x128xf32>
    %c16 = arith.constant 16 : index
    %c0_189 = arith.constant 0 : index
    %390 = memref.load %arg1[%c16, %c0_189] : memref<18x6xf32, #tpu.memory_space<smem>>
    %391 = vector.broadcast %390 : f32 to vector<8x128xf32>
    %392 = arith.mulf %391, %6 : vector<8x128xf32>
    %c16_190 = arith.constant 16 : index
    %c1_191 = arith.constant 1 : index
    %393 = memref.load %arg1[%c16_190, %c1_191] : memref<18x6xf32, #tpu.memory_space<smem>>
    %394 = vector.broadcast %393 : f32 to vector<8x128xf32>
    %395 = arith.mulf %394, %9 : vector<8x128xf32>
    %396 = arith.addf %392, %395 : vector<8x128xf32>
    %c16_192 = arith.constant 16 : index
    %c2_193 = arith.constant 2 : index
    %397 = memref.load %arg1[%c16_192, %c2_193] : memref<18x6xf32, #tpu.memory_space<smem>>
    %398 = vector.broadcast %397 : f32 to vector<8x128xf32>
    %399 = arith.mulf %398, %12 : vector<8x128xf32>
    %400 = arith.addf %396, %399 : vector<8x128xf32>
    %c16_194 = arith.constant 16 : index
    %c3_195 = arith.constant 3 : index
    %401 = memref.load %arg1[%c16_194, %c3_195] : memref<18x6xf32, #tpu.memory_space<smem>>
    %402 = vector.broadcast %401 : f32 to vector<8x128xf32>
    %403 = arith.mulf %402, %15 : vector<8x128xf32>
    %404 = arith.addf %400, %403 : vector<8x128xf32>
    %c16_196 = arith.constant 16 : index
    %c4_197 = arith.constant 4 : index
    %405 = memref.load %arg1[%c16_196, %c4_197] : memref<18x6xf32, #tpu.memory_space<smem>>
    %406 = vector.broadcast %405 : f32 to vector<8x128xf32>
    %407 = arith.mulf %406, %18 : vector<8x128xf32>
    %408 = arith.addf %404, %407 : vector<8x128xf32>
    %c16_198 = arith.constant 16 : index
    %c5_199 = arith.constant 5 : index
    %409 = memref.load %arg1[%c16_198, %c5_199] : memref<18x6xf32, #tpu.memory_space<smem>>
    %410 = vector.broadcast %409 : f32 to vector<8x128xf32>
    %411 = arith.mulf %410, %21 : vector<8x128xf32>
    %412 = arith.addf %408, %411 : vector<8x128xf32>
    %c17 = arith.constant 17 : index
    %c0_200 = arith.constant 0 : index
    %413 = memref.load %arg1[%c17, %c0_200] : memref<18x6xf32, #tpu.memory_space<smem>>
    %414 = vector.broadcast %413 : f32 to vector<8x128xf32>
    %415 = arith.mulf %414, %6 : vector<8x128xf32>
    %c17_201 = arith.constant 17 : index
    %c1_202 = arith.constant 1 : index
    %416 = memref.load %arg1[%c17_201, %c1_202] : memref<18x6xf32, #tpu.memory_space<smem>>
    %417 = vector.broadcast %416 : f32 to vector<8x128xf32>
    %418 = arith.mulf %417, %9 : vector<8x128xf32>
    %419 = arith.addf %415, %418 : vector<8x128xf32>
    %c17_203 = arith.constant 17 : index
    %c2_204 = arith.constant 2 : index
    %420 = memref.load %arg1[%c17_203, %c2_204] : memref<18x6xf32, #tpu.memory_space<smem>>
    %421 = vector.broadcast %420 : f32 to vector<8x128xf32>
    %422 = arith.mulf %421, %12 : vector<8x128xf32>
    %423 = arith.addf %419, %422 : vector<8x128xf32>
    %c17_205 = arith.constant 17 : index
    %c3_206 = arith.constant 3 : index
    %424 = memref.load %arg1[%c17_205, %c3_206] : memref<18x6xf32, #tpu.memory_space<smem>>
    %425 = vector.broadcast %424 : f32 to vector<8x128xf32>
    %426 = arith.mulf %425, %15 : vector<8x128xf32>
    %427 = arith.addf %423, %426 : vector<8x128xf32>
    %c17_207 = arith.constant 17 : index
    %c4_208 = arith.constant 4 : index
    %428 = memref.load %arg1[%c17_207, %c4_208] : memref<18x6xf32, #tpu.memory_space<smem>>
    %429 = vector.broadcast %428 : f32 to vector<8x128xf32>
    %430 = arith.mulf %429, %18 : vector<8x128xf32>
    %431 = arith.addf %427, %430 : vector<8x128xf32>
    %c17_209 = arith.constant 17 : index
    %c5_210 = arith.constant 5 : index
    %432 = memref.load %arg1[%c17_209, %c5_210] : memref<18x6xf32, #tpu.memory_space<smem>>
    %433 = vector.broadcast %432 : f32 to vector<8x128xf32>
    %434 = arith.mulf %433, %21 : vector<8x128xf32>
    %435 = arith.addf %431, %434 : vector<8x128xf32>
    %cst = arith.constant 1.98412701E-4 : f32
    %436 = vector.broadcast %cst : f32 to vector<8x128xf32>
    %437 = arith.mulf %44, %436 : vector<8x128xf32>
    %cst_211 = arith.constant 0.00138888892 : f32
    %438 = vector.broadcast %cst_211 : f32 to vector<8x128xf32>
    %439 = arith.addf %437, %438 : vector<8x128xf32>
    %cst_212 = arith.constant 1.98412701E-4 : f32
    %440 = vector.broadcast %cst_212 : f32 to vector<8x128xf32>
    %441 = arith.mulf %67, %440 : vector<8x128xf32>
    %cst_213 = arith.constant 1.98412701E-4 : f32
    %442 = vector.broadcast %cst_213 : f32 to vector<8x128xf32>
    %443 = arith.mulf %90, %442 : vector<8x128xf32>
    %cst_214 = arith.constant 1.98412701E-4 : f32
    %444 = vector.broadcast %cst_214 : f32 to vector<8x128xf32>
    %445 = arith.mulf %113, %444 : vector<8x128xf32>
    %cst_215 = arith.constant 1.98412701E-4 : f32
    %446 = vector.broadcast %cst_215 : f32 to vector<8x128xf32>
    %447 = arith.mulf %136, %446 : vector<8x128xf32>
    %cst_216 = arith.constant 0.00138888892 : f32
    %448 = vector.broadcast %cst_216 : f32 to vector<8x128xf32>
    %449 = arith.addf %447, %448 : vector<8x128xf32>
    %cst_217 = arith.constant 1.98412701E-4 : f32
    %450 = vector.broadcast %cst_217 : f32 to vector<8x128xf32>
    %451 = arith.mulf %159, %450 : vector<8x128xf32>
    %cst_218 = arith.constant 1.98412701E-4 : f32
    %452 = vector.broadcast %cst_218 : f32 to vector<8x128xf32>
    %453 = arith.mulf %182, %452 : vector<8x128xf32>
    %cst_219 = arith.constant 1.98412701E-4 : f32
    %454 = vector.broadcast %cst_219 : f32 to vector<8x128xf32>
    %455 = arith.mulf %205, %454 : vector<8x128xf32>
    %cst_220 = arith.constant 1.98412701E-4 : f32
    %456 = vector.broadcast %cst_220 : f32 to vector<8x128xf32>
    %457 = arith.mulf %228, %456 : vector<8x128xf32>
    %cst_221 = arith.constant 0.00138888892 : f32
    %458 = vector.broadcast %cst_221 : f32 to vector<8x128xf32>
    %459 = arith.addf %457, %458 : vector<8x128xf32>
    %cst_222 = arith.constant 1.98412701E-4 : f32
    %460 = vector.broadcast %cst_222 : f32 to vector<8x128xf32>
    %461 = arith.mulf %251, %460 : vector<8x128xf32>
    %cst_223 = arith.constant 0.00138888892 : f32
    %462 = vector.broadcast %cst_223 : f32 to vector<8x128xf32>
    %463 = arith.addf %461, %462 : vector<8x128xf32>
    %cst_224 = arith.constant 1.98412701E-4 : f32
    %464 = vector.broadcast %cst_224 : f32 to vector<8x128xf32>
    %465 = arith.mulf %274, %464 : vector<8x128xf32>
    %cst_225 = arith.constant 1.98412701E-4 : f32
    %466 = vector.broadcast %cst_225 : f32 to vector<8x128xf32>
    %467 = arith.mulf %297, %466 : vector<8x128xf32>
    %cst_226 = arith.constant 1.98412701E-4 : f32
    %468 = vector.broadcast %cst_226 : f32 to vector<8x128xf32>
    %469 = arith.mulf %320, %468 : vector<8x128xf32>
    %cst_227 = arith.constant 1.98412701E-4 : f32
    %470 = vector.broadcast %cst_227 : f32 to vector<8x128xf32>
    %471 = arith.mulf %343, %470 : vector<8x128xf32>
    %cst_228 = arith.constant 0.00138888892 : f32
    %472 = vector.broadcast %cst_228 : f32 to vector<8x128xf32>
    %473 = arith.addf %471, %472 : vector<8x128xf32>
    %cst_229 = arith.constant 1.98412701E-4 : f32
    %474 = vector.broadcast %cst_229 : f32 to vector<8x128xf32>
    %475 = arith.mulf %366, %474 : vector<8x128xf32>
    %cst_230 = arith.constant 1.98412701E-4 : f32
    %476 = vector.broadcast %cst_230 : f32 to vector<8x128xf32>
    %477 = arith.mulf %389, %476 : vector<8x128xf32>
    %cst_231 = arith.constant 1.98412701E-4 : f32
    %478 = vector.broadcast %cst_231 : f32 to vector<8x128xf32>
    %479 = arith.mulf %412, %478 : vector<8x128xf32>
    %cst_232 = arith.constant 1.98412701E-4 : f32
    %480 = vector.broadcast %cst_232 : f32 to vector<8x128xf32>
    %481 = arith.mulf %435, %480 : vector<8x128xf32>
    %cst_233 = arith.constant 0.00138888892 : f32
    %482 = vector.broadcast %cst_233 : f32 to vector<8x128xf32>
    %483 = arith.addf %481, %482 : vector<8x128xf32>
    %484 = arith.mulf %439, %44 : vector<8x128xf32>
    %485 = arith.mulf %441, %113 : vector<8x128xf32>
    %486 = arith.addf %484, %485 : vector<8x128xf32>
    %487 = arith.mulf %443, %182 : vector<8x128xf32>
    %488 = arith.addf %486, %487 : vector<8x128xf32>
    %489 = arith.mulf %439, %67 : vector<8x128xf32>
    %490 = arith.mulf %441, %136 : vector<8x128xf32>
    %491 = arith.addf %489, %490 : vector<8x128xf32>
    %492 = arith.mulf %443, %205 : vector<8x128xf32>
    %493 = arith.addf %491, %492 : vector<8x128xf32>
    %494 = arith.mulf %439, %90 : vector<8x128xf32>
    %495 = arith.mulf %441, %159 : vector<8x128xf32>
    %496 = arith.addf %494, %495 : vector<8x128xf32>
    %497 = arith.mulf %443, %228 : vector<8x128xf32>
    %498 = arith.addf %496, %497 : vector<8x128xf32>
    %499 = arith.mulf %445, %44 : vector<8x128xf32>
    %500 = arith.mulf %449, %113 : vector<8x128xf32>
    %501 = arith.addf %499, %500 : vector<8x128xf32>
    %502 = arith.mulf %451, %182 : vector<8x128xf32>
    %503 = arith.addf %501, %502 : vector<8x128xf32>
    %504 = arith.mulf %445, %67 : vector<8x128xf32>
    %505 = arith.mulf %449, %136 : vector<8x128xf32>
    %506 = arith.addf %504, %505 : vector<8x128xf32>
    %507 = arith.mulf %451, %205 : vector<8x128xf32>
    %508 = arith.addf %506, %507 : vector<8x128xf32>
    %509 = arith.mulf %445, %90 : vector<8x128xf32>
    %510 = arith.mulf %449, %159 : vector<8x128xf32>
    %511 = arith.addf %509, %510 : vector<8x128xf32>
    %512 = arith.mulf %451, %228 : vector<8x128xf32>
    %513 = arith.addf %511, %512 : vector<8x128xf32>
    %514 = arith.mulf %453, %44 : vector<8x128xf32>
    %515 = arith.mulf %455, %113 : vector<8x128xf32>
    %516 = arith.addf %514, %515 : vector<8x128xf32>
    %517 = arith.mulf %459, %182 : vector<8x128xf32>
    %518 = arith.addf %516, %517 : vector<8x128xf32>
    %519 = arith.mulf %453, %67 : vector<8x128xf32>
    %520 = arith.mulf %455, %136 : vector<8x128xf32>
    %521 = arith.addf %519, %520 : vector<8x128xf32>
    %522 = arith.mulf %459, %205 : vector<8x128xf32>
    %523 = arith.addf %521, %522 : vector<8x128xf32>
    %524 = arith.mulf %453, %90 : vector<8x128xf32>
    %525 = arith.mulf %455, %159 : vector<8x128xf32>
    %526 = arith.addf %524, %525 : vector<8x128xf32>
    %527 = arith.mulf %459, %228 : vector<8x128xf32>
    %528 = arith.addf %526, %527 : vector<8x128xf32>
    %529 = arith.mulf %463, %251 : vector<8x128xf32>
    %530 = arith.mulf %465, %320 : vector<8x128xf32>
    %531 = arith.addf %529, %530 : vector<8x128xf32>
    %532 = arith.mulf %467, %389 : vector<8x128xf32>
    %533 = arith.addf %531, %532 : vector<8x128xf32>
    %534 = arith.mulf %463, %274 : vector<8x128xf32>
    %535 = arith.mulf %465, %343 : vector<8x128xf32>
    %536 = arith.addf %534, %535 : vector<8x128xf32>
    %537 = arith.mulf %467, %412 : vector<8x128xf32>
    %538 = arith.addf %536, %537 : vector<8x128xf32>
    %539 = arith.mulf %463, %297 : vector<8x128xf32>
    %540 = arith.mulf %465, %366 : vector<8x128xf32>
    %541 = arith.addf %539, %540 : vector<8x128xf32>
    %542 = arith.mulf %467, %435 : vector<8x128xf32>
    %543 = arith.addf %541, %542 : vector<8x128xf32>
    %544 = arith.mulf %469, %251 : vector<8x128xf32>
    %545 = arith.mulf %473, %320 : vector<8x128xf32>
    %546 = arith.addf %544, %545 : vector<8x128xf32>
    %547 = arith.mulf %475, %389 : vector<8x128xf32>
    %548 = arith.addf %546, %547 : vector<8x128xf32>
    %549 = arith.mulf %469, %274 : vector<8x128xf32>
    %550 = arith.mulf %473, %343 : vector<8x128xf32>
    %551 = arith.addf %549, %550 : vector<8x128xf32>
    %552 = arith.mulf %475, %412 : vector<8x128xf32>
    %553 = arith.addf %551, %552 : vector<8x128xf32>
    %554 = arith.mulf %469, %297 : vector<8x128xf32>
    %555 = arith.mulf %473, %366 : vector<8x128xf32>
    %556 = arith.addf %554, %555 : vector<8x128xf32>
    %557 = arith.mulf %475, %435 : vector<8x128xf32>
    %558 = arith.addf %556, %557 : vector<8x128xf32>
    %559 = arith.mulf %477, %251 : vector<8x128xf32>
    %560 = arith.mulf %479, %320 : vector<8x128xf32>
    %561 = arith.addf %559, %560 : vector<8x128xf32>
    %562 = arith.mulf %483, %389 : vector<8x128xf32>
    %563 = arith.addf %561, %562 : vector<8x128xf32>
    %564 = arith.mulf %477, %274 : vector<8x128xf32>
    %565 = arith.mulf %479, %343 : vector<8x128xf32>
    %566 = arith.addf %564, %565 : vector<8x128xf32>
    %567 = arith.mulf %483, %412 : vector<8x128xf32>
    %568 = arith.addf %566, %567 : vector<8x128xf32>
    %569 = arith.mulf %477, %297 : vector<8x128xf32>
    %570 = arith.mulf %479, %366 : vector<8x128xf32>
    %571 = arith.addf %569, %570 : vector<8x128xf32>
    %572 = arith.mulf %483, %435 : vector<8x128xf32>
    %573 = arith.addf %571, %572 : vector<8x128xf32>
    %cst_234 = arith.constant 0.00833333377 : f32
    %574 = vector.broadcast %cst_234 : f32 to vector<8x128xf32>
    %575 = arith.addf %488, %574 : vector<8x128xf32>
    %cst_235 = arith.constant 0.00833333377 : f32
    %576 = vector.broadcast %cst_235 : f32 to vector<8x128xf32>
    %577 = arith.addf %508, %576 : vector<8x128xf32>
    %cst_236 = arith.constant 0.00833333377 : f32
    %578 = vector.broadcast %cst_236 : f32 to vector<8x128xf32>
    %579 = arith.addf %528, %578 : vector<8x128xf32>
    %cst_237 = arith.constant 0.00833333377 : f32
    %580 = vector.broadcast %cst_237 : f32 to vector<8x128xf32>
    %581 = arith.addf %533, %580 : vector<8x128xf32>
    %cst_238 = arith.constant 0.00833333377 : f32
    %582 = vector.broadcast %cst_238 : f32 to vector<8x128xf32>
    %583 = arith.addf %553, %582 : vector<8x128xf32>
    %cst_239 = arith.constant 0.00833333377 : f32
    %584 = vector.broadcast %cst_239 : f32 to vector<8x128xf32>
    %585 = arith.addf %573, %584 : vector<8x128xf32>
    %586 = arith.mulf %575, %44 : vector<8x128xf32>
    %587 = arith.mulf %493, %113 : vector<8x128xf32>
    %588 = arith.addf %586, %587 : vector<8x128xf32>
    %589 = arith.mulf %498, %182 : vector<8x128xf32>
    %590 = arith.addf %588, %589 : vector<8x128xf32>
    %591 = arith.mulf %575, %67 : vector<8x128xf32>
    %592 = arith.mulf %493, %136 : vector<8x128xf32>
    %593 = arith.addf %591, %592 : vector<8x128xf32>
    %594 = arith.mulf %498, %205 : vector<8x128xf32>
    %595 = arith.addf %593, %594 : vector<8x128xf32>
    %596 = arith.mulf %575, %90 : vector<8x128xf32>
    %597 = arith.mulf %493, %159 : vector<8x128xf32>
    %598 = arith.addf %596, %597 : vector<8x128xf32>
    %599 = arith.mulf %498, %228 : vector<8x128xf32>
    %600 = arith.addf %598, %599 : vector<8x128xf32>
    %601 = arith.mulf %503, %44 : vector<8x128xf32>
    %602 = arith.mulf %577, %113 : vector<8x128xf32>
    %603 = arith.addf %601, %602 : vector<8x128xf32>
    %604 = arith.mulf %513, %182 : vector<8x128xf32>
    %605 = arith.addf %603, %604 : vector<8x128xf32>
    %606 = arith.mulf %503, %67 : vector<8x128xf32>
    %607 = arith.mulf %577, %136 : vector<8x128xf32>
    %608 = arith.addf %606, %607 : vector<8x128xf32>
    %609 = arith.mulf %513, %205 : vector<8x128xf32>
    %610 = arith.addf %608, %609 : vector<8x128xf32>
    %611 = arith.mulf %503, %90 : vector<8x128xf32>
    %612 = arith.mulf %577, %159 : vector<8x128xf32>
    %613 = arith.addf %611, %612 : vector<8x128xf32>
    %614 = arith.mulf %513, %228 : vector<8x128xf32>
    %615 = arith.addf %613, %614 : vector<8x128xf32>
    %616 = arith.mulf %518, %44 : vector<8x128xf32>
    %617 = arith.mulf %523, %113 : vector<8x128xf32>
    %618 = arith.addf %616, %617 : vector<8x128xf32>
    %619 = arith.mulf %579, %182 : vector<8x128xf32>
    %620 = arith.addf %618, %619 : vector<8x128xf32>
    %621 = arith.mulf %518, %67 : vector<8x128xf32>
    %622 = arith.mulf %523, %136 : vector<8x128xf32>
    %623 = arith.addf %621, %622 : vector<8x128xf32>
    %624 = arith.mulf %579, %205 : vector<8x128xf32>
    %625 = arith.addf %623, %624 : vector<8x128xf32>
    %626 = arith.mulf %518, %90 : vector<8x128xf32>
    %627 = arith.mulf %523, %159 : vector<8x128xf32>
    %628 = arith.addf %626, %627 : vector<8x128xf32>
    %629 = arith.mulf %579, %228 : vector<8x128xf32>
    %630 = arith.addf %628, %629 : vector<8x128xf32>
    %631 = arith.mulf %581, %251 : vector<8x128xf32>
    %632 = arith.mulf %538, %320 : vector<8x128xf32>
    %633 = arith.addf %631, %632 : vector<8x128xf32>
    %634 = arith.mulf %543, %389 : vector<8x128xf32>
    %635 = arith.addf %633, %634 : vector<8x128xf32>
    %636 = arith.mulf %581, %274 : vector<8x128xf32>
    %637 = arith.mulf %538, %343 : vector<8x128xf32>
    %638 = arith.addf %636, %637 : vector<8x128xf32>
    %639 = arith.mulf %543, %412 : vector<8x128xf32>
    %640 = arith.addf %638, %639 : vector<8x128xf32>
    %641 = arith.mulf %581, %297 : vector<8x128xf32>
    %642 = arith.mulf %538, %366 : vector<8x128xf32>
    %643 = arith.addf %641, %642 : vector<8x128xf32>
    %644 = arith.mulf %543, %435 : vector<8x128xf32>
    %645 = arith.addf %643, %644 : vector<8x128xf32>
    %646 = arith.mulf %548, %251 : vector<8x128xf32>
    %647 = arith.mulf %583, %320 : vector<8x128xf32>
    %648 = arith.addf %646, %647 : vector<8x128xf32>
    %649 = arith.mulf %558, %389 : vector<8x128xf32>
    %650 = arith.addf %648, %649 : vector<8x128xf32>
    %651 = arith.mulf %548, %274 : vector<8x128xf32>
    %652 = arith.mulf %583, %343 : vector<8x128xf32>
    %653 = arith.addf %651, %652 : vector<8x128xf32>
    %654 = arith.mulf %558, %412 : vector<8x128xf32>
    %655 = arith.addf %653, %654 : vector<8x128xf32>
    %656 = arith.mulf %548, %297 : vector<8x128xf32>
    %657 = arith.mulf %583, %366 : vector<8x128xf32>
    %658 = arith.addf %656, %657 : vector<8x128xf32>
    %659 = arith.mulf %558, %435 : vector<8x128xf32>
    %660 = arith.addf %658, %659 : vector<8x128xf32>
    %661 = arith.mulf %563, %251 : vector<8x128xf32>
    %662 = arith.mulf %568, %320 : vector<8x128xf32>
    %663 = arith.addf %661, %662 : vector<8x128xf32>
    %664 = arith.mulf %585, %389 : vector<8x128xf32>
    %665 = arith.addf %663, %664 : vector<8x128xf32>
    %666 = arith.mulf %563, %274 : vector<8x128xf32>
    %667 = arith.mulf %568, %343 : vector<8x128xf32>
    %668 = arith.addf %666, %667 : vector<8x128xf32>
    %669 = arith.mulf %585, %412 : vector<8x128xf32>
    %670 = arith.addf %668, %669 : vector<8x128xf32>
    %671 = arith.mulf %563, %297 : vector<8x128xf32>
    %672 = arith.mulf %568, %366 : vector<8x128xf32>
    %673 = arith.addf %671, %672 : vector<8x128xf32>
    %674 = arith.mulf %585, %435 : vector<8x128xf32>
    %675 = arith.addf %673, %674 : vector<8x128xf32>
    %cst_240 = arith.constant 0.0416666679 : f32
    %676 = vector.broadcast %cst_240 : f32 to vector<8x128xf32>
    %677 = arith.addf %590, %676 : vector<8x128xf32>
    %cst_241 = arith.constant 0.0416666679 : f32
    %678 = vector.broadcast %cst_241 : f32 to vector<8x128xf32>
    %679 = arith.addf %610, %678 : vector<8x128xf32>
    %cst_242 = arith.constant 0.0416666679 : f32
    %680 = vector.broadcast %cst_242 : f32 to vector<8x128xf32>
    %681 = arith.addf %630, %680 : vector<8x128xf32>
    %cst_243 = arith.constant 0.0416666679 : f32
    %682 = vector.broadcast %cst_243 : f32 to vector<8x128xf32>
    %683 = arith.addf %635, %682 : vector<8x128xf32>
    %cst_244 = arith.constant 0.0416666679 : f32
    %684 = vector.broadcast %cst_244 : f32 to vector<8x128xf32>
    %685 = arith.addf %655, %684 : vector<8x128xf32>
    %cst_245 = arith.constant 0.0416666679 : f32
    %686 = vector.broadcast %cst_245 : f32 to vector<8x128xf32>
    %687 = arith.addf %675, %686 : vector<8x128xf32>
    %688 = arith.mulf %677, %44 : vector<8x128xf32>
    %689 = arith.mulf %595, %113 : vector<8x128xf32>
    %690 = arith.addf %688, %689 : vector<8x128xf32>
    %691 = arith.mulf %600, %182 : vector<8x128xf32>
    %692 = arith.addf %690, %691 : vector<8x128xf32>
    %693 = arith.mulf %677, %67 : vector<8x128xf32>
    %694 = arith.mulf %595, %136 : vector<8x128xf32>
    %695 = arith.addf %693, %694 : vector<8x128xf32>
    %696 = arith.mulf %600, %205 : vector<8x128xf32>
    %697 = arith.addf %695, %696 : vector<8x128xf32>
    %698 = arith.mulf %677, %90 : vector<8x128xf32>
    %699 = arith.mulf %595, %159 : vector<8x128xf32>
    %700 = arith.addf %698, %699 : vector<8x128xf32>
    %701 = arith.mulf %600, %228 : vector<8x128xf32>
    %702 = arith.addf %700, %701 : vector<8x128xf32>
    %703 = arith.mulf %605, %44 : vector<8x128xf32>
    %704 = arith.mulf %679, %113 : vector<8x128xf32>
    %705 = arith.addf %703, %704 : vector<8x128xf32>
    %706 = arith.mulf %615, %182 : vector<8x128xf32>
    %707 = arith.addf %705, %706 : vector<8x128xf32>
    %708 = arith.mulf %605, %67 : vector<8x128xf32>
    %709 = arith.mulf %679, %136 : vector<8x128xf32>
    %710 = arith.addf %708, %709 : vector<8x128xf32>
    %711 = arith.mulf %615, %205 : vector<8x128xf32>
    %712 = arith.addf %710, %711 : vector<8x128xf32>
    %713 = arith.mulf %605, %90 : vector<8x128xf32>
    %714 = arith.mulf %679, %159 : vector<8x128xf32>
    %715 = arith.addf %713, %714 : vector<8x128xf32>
    %716 = arith.mulf %615, %228 : vector<8x128xf32>
    %717 = arith.addf %715, %716 : vector<8x128xf32>
    %718 = arith.mulf %620, %44 : vector<8x128xf32>
    %719 = arith.mulf %625, %113 : vector<8x128xf32>
    %720 = arith.addf %718, %719 : vector<8x128xf32>
    %721 = arith.mulf %681, %182 : vector<8x128xf32>
    %722 = arith.addf %720, %721 : vector<8x128xf32>
    %723 = arith.mulf %620, %67 : vector<8x128xf32>
    %724 = arith.mulf %625, %136 : vector<8x128xf32>
    %725 = arith.addf %723, %724 : vector<8x128xf32>
    %726 = arith.mulf %681, %205 : vector<8x128xf32>
    %727 = arith.addf %725, %726 : vector<8x128xf32>
    %728 = arith.mulf %620, %90 : vector<8x128xf32>
    %729 = arith.mulf %625, %159 : vector<8x128xf32>
    %730 = arith.addf %728, %729 : vector<8x128xf32>
    %731 = arith.mulf %681, %228 : vector<8x128xf32>
    %732 = arith.addf %730, %731 : vector<8x128xf32>
    %733 = arith.mulf %683, %251 : vector<8x128xf32>
    %734 = arith.mulf %640, %320 : vector<8x128xf32>
    %735 = arith.addf %733, %734 : vector<8x128xf32>
    %736 = arith.mulf %645, %389 : vector<8x128xf32>
    %737 = arith.addf %735, %736 : vector<8x128xf32>
    %738 = arith.mulf %683, %274 : vector<8x128xf32>
    %739 = arith.mulf %640, %343 : vector<8x128xf32>
    %740 = arith.addf %738, %739 : vector<8x128xf32>
    %741 = arith.mulf %645, %412 : vector<8x128xf32>
    %742 = arith.addf %740, %741 : vector<8x128xf32>
    %743 = arith.mulf %683, %297 : vector<8x128xf32>
    %744 = arith.mulf %640, %366 : vector<8x128xf32>
    %745 = arith.addf %743, %744 : vector<8x128xf32>
    %746 = arith.mulf %645, %435 : vector<8x128xf32>
    %747 = arith.addf %745, %746 : vector<8x128xf32>
    %748 = arith.mulf %650, %251 : vector<8x128xf32>
    %749 = arith.mulf %685, %320 : vector<8x128xf32>
    %750 = arith.addf %748, %749 : vector<8x128xf32>
    %751 = arith.mulf %660, %389 : vector<8x128xf32>
    %752 = arith.addf %750, %751 : vector<8x128xf32>
    %753 = arith.mulf %650, %274 : vector<8x128xf32>
    %754 = arith.mulf %685, %343 : vector<8x128xf32>
    %755 = arith.addf %753, %754 : vector<8x128xf32>
    %756 = arith.mulf %660, %412 : vector<8x128xf32>
    %757 = arith.addf %755, %756 : vector<8x128xf32>
    %758 = arith.mulf %650, %297 : vector<8x128xf32>
    %759 = arith.mulf %685, %366 : vector<8x128xf32>
    %760 = arith.addf %758, %759 : vector<8x128xf32>
    %761 = arith.mulf %660, %435 : vector<8x128xf32>
    %762 = arith.addf %760, %761 : vector<8x128xf32>
    %763 = arith.mulf %665, %251 : vector<8x128xf32>
    %764 = arith.mulf %670, %320 : vector<8x128xf32>
    %765 = arith.addf %763, %764 : vector<8x128xf32>
    %766 = arith.mulf %687, %389 : vector<8x128xf32>
    %767 = arith.addf %765, %766 : vector<8x128xf32>
    %768 = arith.mulf %665, %274 : vector<8x128xf32>
    %769 = arith.mulf %670, %343 : vector<8x128xf32>
    %770 = arith.addf %768, %769 : vector<8x128xf32>
    %771 = arith.mulf %687, %412 : vector<8x128xf32>
    %772 = arith.addf %770, %771 : vector<8x128xf32>
    %773 = arith.mulf %665, %297 : vector<8x128xf32>
    %774 = arith.mulf %670, %366 : vector<8x128xf32>
    %775 = arith.addf %773, %774 : vector<8x128xf32>
    %776 = arith.mulf %687, %435 : vector<8x128xf32>
    %777 = arith.addf %775, %776 : vector<8x128xf32>
    %cst_246 = arith.constant 0.166666672 : f32
    %778 = vector.broadcast %cst_246 : f32 to vector<8x128xf32>
    %779 = arith.addf %692, %778 : vector<8x128xf32>
    %cst_247 = arith.constant 0.166666672 : f32
    %780 = vector.broadcast %cst_247 : f32 to vector<8x128xf32>
    %781 = arith.addf %712, %780 : vector<8x128xf32>
    %cst_248 = arith.constant 0.166666672 : f32
    %782 = vector.broadcast %cst_248 : f32 to vector<8x128xf32>
    %783 = arith.addf %732, %782 : vector<8x128xf32>
    %cst_249 = arith.constant 0.166666672 : f32
    %784 = vector.broadcast %cst_249 : f32 to vector<8x128xf32>
    %785 = arith.addf %737, %784 : vector<8x128xf32>
    %cst_250 = arith.constant 0.166666672 : f32
    %786 = vector.broadcast %cst_250 : f32 to vector<8x128xf32>
    %787 = arith.addf %757, %786 : vector<8x128xf32>
    %cst_251 = arith.constant 0.166666672 : f32
    %788 = vector.broadcast %cst_251 : f32 to vector<8x128xf32>
    %789 = arith.addf %777, %788 : vector<8x128xf32>
    %790 = arith.mulf %779, %44 : vector<8x128xf32>
    %791 = arith.mulf %697, %113 : vector<8x128xf32>
    %792 = arith.addf %790, %791 : vector<8x128xf32>
    %793 = arith.mulf %702, %182 : vector<8x128xf32>
    %794 = arith.addf %792, %793 : vector<8x128xf32>
    %795 = arith.mulf %779, %67 : vector<8x128xf32>
    %796 = arith.mulf %697, %136 : vector<8x128xf32>
    %797 = arith.addf %795, %796 : vector<8x128xf32>
    %798 = arith.mulf %702, %205 : vector<8x128xf32>
    %799 = arith.addf %797, %798 : vector<8x128xf32>
    %800 = arith.mulf %779, %90 : vector<8x128xf32>
    %801 = arith.mulf %697, %159 : vector<8x128xf32>
    %802 = arith.addf %800, %801 : vector<8x128xf32>
    %803 = arith.mulf %702, %228 : vector<8x128xf32>
    %804 = arith.addf %802, %803 : vector<8x128xf32>
    %805 = arith.mulf %707, %44 : vector<8x128xf32>
    %806 = arith.mulf %781, %113 : vector<8x128xf32>
    %807 = arith.addf %805, %806 : vector<8x128xf32>
    %808 = arith.mulf %717, %182 : vector<8x128xf32>
    %809 = arith.addf %807, %808 : vector<8x128xf32>
    %810 = arith.mulf %707, %67 : vector<8x128xf32>
    %811 = arith.mulf %781, %136 : vector<8x128xf32>
    %812 = arith.addf %810, %811 : vector<8x128xf32>
    %813 = arith.mulf %717, %205 : vector<8x128xf32>
    %814 = arith.addf %812, %813 : vector<8x128xf32>
    %815 = arith.mulf %707, %90 : vector<8x128xf32>
    %816 = arith.mulf %781, %159 : vector<8x128xf32>
    %817 = arith.addf %815, %816 : vector<8x128xf32>
    %818 = arith.mulf %717, %228 : vector<8x128xf32>
    %819 = arith.addf %817, %818 : vector<8x128xf32>
    %820 = arith.mulf %722, %44 : vector<8x128xf32>
    %821 = arith.mulf %727, %113 : vector<8x128xf32>
    %822 = arith.addf %820, %821 : vector<8x128xf32>
    %823 = arith.mulf %783, %182 : vector<8x128xf32>
    %824 = arith.addf %822, %823 : vector<8x128xf32>
    %825 = arith.mulf %722, %67 : vector<8x128xf32>
    %826 = arith.mulf %727, %136 : vector<8x128xf32>
    %827 = arith.addf %825, %826 : vector<8x128xf32>
    %828 = arith.mulf %783, %205 : vector<8x128xf32>
    %829 = arith.addf %827, %828 : vector<8x128xf32>
    %830 = arith.mulf %722, %90 : vector<8x128xf32>
    %831 = arith.mulf %727, %159 : vector<8x128xf32>
    %832 = arith.addf %830, %831 : vector<8x128xf32>
    %833 = arith.mulf %783, %228 : vector<8x128xf32>
    %834 = arith.addf %832, %833 : vector<8x128xf32>
    %835 = arith.mulf %785, %251 : vector<8x128xf32>
    %836 = arith.mulf %742, %320 : vector<8x128xf32>
    %837 = arith.addf %835, %836 : vector<8x128xf32>
    %838 = arith.mulf %747, %389 : vector<8x128xf32>
    %839 = arith.addf %837, %838 : vector<8x128xf32>
    %840 = arith.mulf %785, %274 : vector<8x128xf32>
    %841 = arith.mulf %742, %343 : vector<8x128xf32>
    %842 = arith.addf %840, %841 : vector<8x128xf32>
    %843 = arith.mulf %747, %412 : vector<8x128xf32>
    %844 = arith.addf %842, %843 : vector<8x128xf32>
    %845 = arith.mulf %785, %297 : vector<8x128xf32>
    %846 = arith.mulf %742, %366 : vector<8x128xf32>
    %847 = arith.addf %845, %846 : vector<8x128xf32>
    %848 = arith.mulf %747, %435 : vector<8x128xf32>
    %849 = arith.addf %847, %848 : vector<8x128xf32>
    %850 = arith.mulf %752, %251 : vector<8x128xf32>
    %851 = arith.mulf %787, %320 : vector<8x128xf32>
    %852 = arith.addf %850, %851 : vector<8x128xf32>
    %853 = arith.mulf %762, %389 : vector<8x128xf32>
    %854 = arith.addf %852, %853 : vector<8x128xf32>
    %855 = arith.mulf %752, %274 : vector<8x128xf32>
    %856 = arith.mulf %787, %343 : vector<8x128xf32>
    %857 = arith.addf %855, %856 : vector<8x128xf32>
    %858 = arith.mulf %762, %412 : vector<8x128xf32>
    %859 = arith.addf %857, %858 : vector<8x128xf32>
    %860 = arith.mulf %752, %297 : vector<8x128xf32>
    %861 = arith.mulf %787, %366 : vector<8x128xf32>
    %862 = arith.addf %860, %861 : vector<8x128xf32>
    %863 = arith.mulf %762, %435 : vector<8x128xf32>
    %864 = arith.addf %862, %863 : vector<8x128xf32>
    %865 = arith.mulf %767, %251 : vector<8x128xf32>
    %866 = arith.mulf %772, %320 : vector<8x128xf32>
    %867 = arith.addf %865, %866 : vector<8x128xf32>
    %868 = arith.mulf %789, %389 : vector<8x128xf32>
    %869 = arith.addf %867, %868 : vector<8x128xf32>
    %870 = arith.mulf %767, %274 : vector<8x128xf32>
    %871 = arith.mulf %772, %343 : vector<8x128xf32>
    %872 = arith.addf %870, %871 : vector<8x128xf32>
    %873 = arith.mulf %789, %412 : vector<8x128xf32>
    %874 = arith.addf %872, %873 : vector<8x128xf32>
    %875 = arith.mulf %767, %297 : vector<8x128xf32>
    %876 = arith.mulf %772, %366 : vector<8x128xf32>
    %877 = arith.addf %875, %876 : vector<8x128xf32>
    %878 = arith.mulf %789, %435 : vector<8x128xf32>
    %879 = arith.addf %877, %878 : vector<8x128xf32>
    %cst_252 = arith.constant 5.000000e-01 : f32
    %880 = vector.broadcast %cst_252 : f32 to vector<8x128xf32>
    %881 = arith.addf %794, %880 : vector<8x128xf32>
    %cst_253 = arith.constant 5.000000e-01 : f32
    %882 = vector.broadcast %cst_253 : f32 to vector<8x128xf32>
    %883 = arith.addf %814, %882 : vector<8x128xf32>
    %cst_254 = arith.constant 5.000000e-01 : f32
    %884 = vector.broadcast %cst_254 : f32 to vector<8x128xf32>
    %885 = arith.addf %834, %884 : vector<8x128xf32>
    %cst_255 = arith.constant 5.000000e-01 : f32
    %886 = vector.broadcast %cst_255 : f32 to vector<8x128xf32>
    %887 = arith.addf %839, %886 : vector<8x128xf32>
    %cst_256 = arith.constant 5.000000e-01 : f32
    %888 = vector.broadcast %cst_256 : f32 to vector<8x128xf32>
    %889 = arith.addf %859, %888 : vector<8x128xf32>
    %cst_257 = arith.constant 5.000000e-01 : f32
    %890 = vector.broadcast %cst_257 : f32 to vector<8x128xf32>
    %891 = arith.addf %879, %890 : vector<8x128xf32>
    %892 = arith.mulf %881, %44 : vector<8x128xf32>
    %893 = arith.mulf %799, %113 : vector<8x128xf32>
    %894 = arith.addf %892, %893 : vector<8x128xf32>
    %895 = arith.mulf %804, %182 : vector<8x128xf32>
    %896 = arith.addf %894, %895 : vector<8x128xf32>
    %897 = arith.mulf %881, %67 : vector<8x128xf32>
    %898 = arith.mulf %799, %136 : vector<8x128xf32>
    %899 = arith.addf %897, %898 : vector<8x128xf32>
    %900 = arith.mulf %804, %205 : vector<8x128xf32>
    %901 = arith.addf %899, %900 : vector<8x128xf32>
    %902 = arith.mulf %881, %90 : vector<8x128xf32>
    %903 = arith.mulf %799, %159 : vector<8x128xf32>
    %904 = arith.addf %902, %903 : vector<8x128xf32>
    %905 = arith.mulf %804, %228 : vector<8x128xf32>
    %906 = arith.addf %904, %905 : vector<8x128xf32>
    %907 = arith.mulf %809, %44 : vector<8x128xf32>
    %908 = arith.mulf %883, %113 : vector<8x128xf32>
    %909 = arith.addf %907, %908 : vector<8x128xf32>
    %910 = arith.mulf %819, %182 : vector<8x128xf32>
    %911 = arith.addf %909, %910 : vector<8x128xf32>
    %912 = arith.mulf %809, %67 : vector<8x128xf32>
    %913 = arith.mulf %883, %136 : vector<8x128xf32>
    %914 = arith.addf %912, %913 : vector<8x128xf32>
    %915 = arith.mulf %819, %205 : vector<8x128xf32>
    %916 = arith.addf %914, %915 : vector<8x128xf32>
    %917 = arith.mulf %809, %90 : vector<8x128xf32>
    %918 = arith.mulf %883, %159 : vector<8x128xf32>
    %919 = arith.addf %917, %918 : vector<8x128xf32>
    %920 = arith.mulf %819, %228 : vector<8x128xf32>
    %921 = arith.addf %919, %920 : vector<8x128xf32>
    %922 = arith.mulf %824, %44 : vector<8x128xf32>
    %923 = arith.mulf %829, %113 : vector<8x128xf32>
    %924 = arith.addf %922, %923 : vector<8x128xf32>
    %925 = arith.mulf %885, %182 : vector<8x128xf32>
    %926 = arith.addf %924, %925 : vector<8x128xf32>
    %927 = arith.mulf %824, %67 : vector<8x128xf32>
    %928 = arith.mulf %829, %136 : vector<8x128xf32>
    %929 = arith.addf %927, %928 : vector<8x128xf32>
    %930 = arith.mulf %885, %205 : vector<8x128xf32>
    %931 = arith.addf %929, %930 : vector<8x128xf32>
    %932 = arith.mulf %824, %90 : vector<8x128xf32>
    %933 = arith.mulf %829, %159 : vector<8x128xf32>
    %934 = arith.addf %932, %933 : vector<8x128xf32>
    %935 = arith.mulf %885, %228 : vector<8x128xf32>
    %936 = arith.addf %934, %935 : vector<8x128xf32>
    %937 = arith.mulf %887, %251 : vector<8x128xf32>
    %938 = arith.mulf %844, %320 : vector<8x128xf32>
    %939 = arith.addf %937, %938 : vector<8x128xf32>
    %940 = arith.mulf %849, %389 : vector<8x128xf32>
    %941 = arith.addf %939, %940 : vector<8x128xf32>
    %942 = arith.mulf %887, %274 : vector<8x128xf32>
    %943 = arith.mulf %844, %343 : vector<8x128xf32>
    %944 = arith.addf %942, %943 : vector<8x128xf32>
    %945 = arith.mulf %849, %412 : vector<8x128xf32>
    %946 = arith.addf %944, %945 : vector<8x128xf32>
    %947 = arith.mulf %887, %297 : vector<8x128xf32>
    %948 = arith.mulf %844, %366 : vector<8x128xf32>
    %949 = arith.addf %947, %948 : vector<8x128xf32>
    %950 = arith.mulf %849, %435 : vector<8x128xf32>
    %951 = arith.addf %949, %950 : vector<8x128xf32>
    %952 = arith.mulf %854, %251 : vector<8x128xf32>
    %953 = arith.mulf %889, %320 : vector<8x128xf32>
    %954 = arith.addf %952, %953 : vector<8x128xf32>
    %955 = arith.mulf %864, %389 : vector<8x128xf32>
    %956 = arith.addf %954, %955 : vector<8x128xf32>
    %957 = arith.mulf %854, %274 : vector<8x128xf32>
    %958 = arith.mulf %889, %343 : vector<8x128xf32>
    %959 = arith.addf %957, %958 : vector<8x128xf32>
    %960 = arith.mulf %864, %412 : vector<8x128xf32>
    %961 = arith.addf %959, %960 : vector<8x128xf32>
    %962 = arith.mulf %854, %297 : vector<8x128xf32>
    %963 = arith.mulf %889, %366 : vector<8x128xf32>
    %964 = arith.addf %962, %963 : vector<8x128xf32>
    %965 = arith.mulf %864, %435 : vector<8x128xf32>
    %966 = arith.addf %964, %965 : vector<8x128xf32>
    %967 = arith.mulf %869, %251 : vector<8x128xf32>
    %968 = arith.mulf %874, %320 : vector<8x128xf32>
    %969 = arith.addf %967, %968 : vector<8x128xf32>
    %970 = arith.mulf %891, %389 : vector<8x128xf32>
    %971 = arith.addf %969, %970 : vector<8x128xf32>
    %972 = arith.mulf %869, %274 : vector<8x128xf32>
    %973 = arith.mulf %874, %343 : vector<8x128xf32>
    %974 = arith.addf %972, %973 : vector<8x128xf32>
    %975 = arith.mulf %891, %412 : vector<8x128xf32>
    %976 = arith.addf %974, %975 : vector<8x128xf32>
    %977 = arith.mulf %869, %297 : vector<8x128xf32>
    %978 = arith.mulf %874, %366 : vector<8x128xf32>
    %979 = arith.addf %977, %978 : vector<8x128xf32>
    %980 = arith.mulf %891, %435 : vector<8x128xf32>
    %981 = arith.addf %979, %980 : vector<8x128xf32>
    %cst_258 = arith.constant 1.000000e+00 : f32
    %982 = vector.broadcast %cst_258 : f32 to vector<8x128xf32>
    %983 = arith.addf %896, %982 : vector<8x128xf32>
    %cst_259 = arith.constant 1.000000e+00 : f32
    %984 = vector.broadcast %cst_259 : f32 to vector<8x128xf32>
    %985 = arith.addf %916, %984 : vector<8x128xf32>
    %cst_260 = arith.constant 1.000000e+00 : f32
    %986 = vector.broadcast %cst_260 : f32 to vector<8x128xf32>
    %987 = arith.addf %936, %986 : vector<8x128xf32>
    %cst_261 = arith.constant 1.000000e+00 : f32
    %988 = vector.broadcast %cst_261 : f32 to vector<8x128xf32>
    %989 = arith.addf %941, %988 : vector<8x128xf32>
    %cst_262 = arith.constant 1.000000e+00 : f32
    %990 = vector.broadcast %cst_262 : f32 to vector<8x128xf32>
    %991 = arith.addf %961, %990 : vector<8x128xf32>
    %cst_263 = arith.constant 1.000000e+00 : f32
    %992 = vector.broadcast %cst_263 : f32 to vector<8x128xf32>
    %993 = arith.addf %981, %992 : vector<8x128xf32>
    %994 = arith.mulf %983, %44 : vector<8x128xf32>
    %995 = arith.mulf %901, %113 : vector<8x128xf32>
    %996 = arith.addf %994, %995 : vector<8x128xf32>
    %997 = arith.mulf %906, %182 : vector<8x128xf32>
    %998 = arith.addf %996, %997 : vector<8x128xf32>
    %999 = arith.mulf %983, %67 : vector<8x128xf32>
    %1000 = arith.mulf %901, %136 : vector<8x128xf32>
    %1001 = arith.addf %999, %1000 : vector<8x128xf32>
    %1002 = arith.mulf %906, %205 : vector<8x128xf32>
    %1003 = arith.addf %1001, %1002 : vector<8x128xf32>
    %1004 = arith.mulf %983, %90 : vector<8x128xf32>
    %1005 = arith.mulf %901, %159 : vector<8x128xf32>
    %1006 = arith.addf %1004, %1005 : vector<8x128xf32>
    %1007 = arith.mulf %906, %228 : vector<8x128xf32>
    %1008 = arith.addf %1006, %1007 : vector<8x128xf32>
    %1009 = arith.mulf %911, %44 : vector<8x128xf32>
    %1010 = arith.mulf %985, %113 : vector<8x128xf32>
    %1011 = arith.addf %1009, %1010 : vector<8x128xf32>
    %1012 = arith.mulf %921, %182 : vector<8x128xf32>
    %1013 = arith.addf %1011, %1012 : vector<8x128xf32>
    %1014 = arith.mulf %911, %67 : vector<8x128xf32>
    %1015 = arith.mulf %985, %136 : vector<8x128xf32>
    %1016 = arith.addf %1014, %1015 : vector<8x128xf32>
    %1017 = arith.mulf %921, %205 : vector<8x128xf32>
    %1018 = arith.addf %1016, %1017 : vector<8x128xf32>
    %1019 = arith.mulf %911, %90 : vector<8x128xf32>
    %1020 = arith.mulf %985, %159 : vector<8x128xf32>
    %1021 = arith.addf %1019, %1020 : vector<8x128xf32>
    %1022 = arith.mulf %921, %228 : vector<8x128xf32>
    %1023 = arith.addf %1021, %1022 : vector<8x128xf32>
    %1024 = arith.mulf %926, %44 : vector<8x128xf32>
    %1025 = arith.mulf %931, %113 : vector<8x128xf32>
    %1026 = arith.addf %1024, %1025 : vector<8x128xf32>
    %1027 = arith.mulf %987, %182 : vector<8x128xf32>
    %1028 = arith.addf %1026, %1027 : vector<8x128xf32>
    %1029 = arith.mulf %926, %67 : vector<8x128xf32>
    %1030 = arith.mulf %931, %136 : vector<8x128xf32>
    %1031 = arith.addf %1029, %1030 : vector<8x128xf32>
    %1032 = arith.mulf %987, %205 : vector<8x128xf32>
    %1033 = arith.addf %1031, %1032 : vector<8x128xf32>
    %1034 = arith.mulf %926, %90 : vector<8x128xf32>
    %1035 = arith.mulf %931, %159 : vector<8x128xf32>
    %1036 = arith.addf %1034, %1035 : vector<8x128xf32>
    %1037 = arith.mulf %987, %228 : vector<8x128xf32>
    %1038 = arith.addf %1036, %1037 : vector<8x128xf32>
    %1039 = arith.mulf %989, %251 : vector<8x128xf32>
    %1040 = arith.mulf %946, %320 : vector<8x128xf32>
    %1041 = arith.addf %1039, %1040 : vector<8x128xf32>
    %1042 = arith.mulf %951, %389 : vector<8x128xf32>
    %1043 = arith.addf %1041, %1042 : vector<8x128xf32>
    %1044 = arith.mulf %989, %274 : vector<8x128xf32>
    %1045 = arith.mulf %946, %343 : vector<8x128xf32>
    %1046 = arith.addf %1044, %1045 : vector<8x128xf32>
    %1047 = arith.mulf %951, %412 : vector<8x128xf32>
    %1048 = arith.addf %1046, %1047 : vector<8x128xf32>
    %1049 = arith.mulf %989, %297 : vector<8x128xf32>
    %1050 = arith.mulf %946, %366 : vector<8x128xf32>
    %1051 = arith.addf %1049, %1050 : vector<8x128xf32>
    %1052 = arith.mulf %951, %435 : vector<8x128xf32>
    %1053 = arith.addf %1051, %1052 : vector<8x128xf32>
    %1054 = arith.mulf %956, %251 : vector<8x128xf32>
    %1055 = arith.mulf %991, %320 : vector<8x128xf32>
    %1056 = arith.addf %1054, %1055 : vector<8x128xf32>
    %1057 = arith.mulf %966, %389 : vector<8x128xf32>
    %1058 = arith.addf %1056, %1057 : vector<8x128xf32>
    %1059 = arith.mulf %956, %274 : vector<8x128xf32>
    %1060 = arith.mulf %991, %343 : vector<8x128xf32>
    %1061 = arith.addf %1059, %1060 : vector<8x128xf32>
    %1062 = arith.mulf %966, %412 : vector<8x128xf32>
    %1063 = arith.addf %1061, %1062 : vector<8x128xf32>
    %1064 = arith.mulf %956, %297 : vector<8x128xf32>
    %1065 = arith.mulf %991, %366 : vector<8x128xf32>
    %1066 = arith.addf %1064, %1065 : vector<8x128xf32>
    %1067 = arith.mulf %966, %435 : vector<8x128xf32>
    %1068 = arith.addf %1066, %1067 : vector<8x128xf32>
    %1069 = arith.mulf %971, %251 : vector<8x128xf32>
    %1070 = arith.mulf %976, %320 : vector<8x128xf32>
    %1071 = arith.addf %1069, %1070 : vector<8x128xf32>
    %1072 = arith.mulf %993, %389 : vector<8x128xf32>
    %1073 = arith.addf %1071, %1072 : vector<8x128xf32>
    %1074 = arith.mulf %971, %274 : vector<8x128xf32>
    %1075 = arith.mulf %976, %343 : vector<8x128xf32>
    %1076 = arith.addf %1074, %1075 : vector<8x128xf32>
    %1077 = arith.mulf %993, %412 : vector<8x128xf32>
    %1078 = arith.addf %1076, %1077 : vector<8x128xf32>
    %1079 = arith.mulf %971, %297 : vector<8x128xf32>
    %1080 = arith.mulf %976, %366 : vector<8x128xf32>
    %1081 = arith.addf %1079, %1080 : vector<8x128xf32>
    %1082 = arith.mulf %993, %435 : vector<8x128xf32>
    %1083 = arith.addf %1081, %1082 : vector<8x128xf32>
    %cst_264 = arith.constant 1.000000e+00 : f32
    %1084 = vector.broadcast %cst_264 : f32 to vector<8x128xf32>
    %1085 = arith.addf %998, %1084 : vector<8x128xf32>
    %cst_265 = arith.constant 1.000000e+00 : f32
    %1086 = vector.broadcast %cst_265 : f32 to vector<8x128xf32>
    %1087 = arith.addf %1018, %1086 : vector<8x128xf32>
    %cst_266 = arith.constant 1.000000e+00 : f32
    %1088 = vector.broadcast %cst_266 : f32 to vector<8x128xf32>
    %1089 = arith.addf %1038, %1088 : vector<8x128xf32>
    %cst_267 = arith.constant 1.000000e+00 : f32
    %1090 = vector.broadcast %cst_267 : f32 to vector<8x128xf32>
    %1091 = arith.addf %1043, %1090 : vector<8x128xf32>
    %cst_268 = arith.constant 1.000000e+00 : f32
    %1092 = vector.broadcast %cst_268 : f32 to vector<8x128xf32>
    %1093 = arith.addf %1063, %1092 : vector<8x128xf32>
    %cst_269 = arith.constant 1.000000e+00 : f32
    %1094 = vector.broadcast %cst_269 : f32 to vector<8x128xf32>
    %1095 = arith.addf %1083, %1094 : vector<8x128xf32>
    %1096 = arith.mulf %1085, %1085 : vector<8x128xf32>
    %1097 = arith.mulf %1003, %1013 : vector<8x128xf32>
    %1098 = arith.addf %1096, %1097 : vector<8x128xf32>
    %1099 = arith.mulf %1008, %1028 : vector<8x128xf32>
    %1100 = arith.addf %1098, %1099 : vector<8x128xf32>
    %1101 = arith.mulf %1085, %1003 : vector<8x128xf32>
    %1102 = arith.mulf %1003, %1087 : vector<8x128xf32>
    %1103 = arith.addf %1101, %1102 : vector<8x128xf32>
    %1104 = arith.mulf %1008, %1033 : vector<8x128xf32>
    %1105 = arith.addf %1103, %1104 : vector<8x128xf32>
    %1106 = arith.mulf %1085, %1008 : vector<8x128xf32>
    %1107 = arith.mulf %1003, %1023 : vector<8x128xf32>
    %1108 = arith.addf %1106, %1107 : vector<8x128xf32>
    %1109 = arith.mulf %1008, %1089 : vector<8x128xf32>
    %1110 = arith.addf %1108, %1109 : vector<8x128xf32>
    %1111 = arith.mulf %1013, %1085 : vector<8x128xf32>
    %1112 = arith.mulf %1087, %1013 : vector<8x128xf32>
    %1113 = arith.addf %1111, %1112 : vector<8x128xf32>
    %1114 = arith.mulf %1023, %1028 : vector<8x128xf32>
    %1115 = arith.addf %1113, %1114 : vector<8x128xf32>
    %1116 = arith.mulf %1013, %1003 : vector<8x128xf32>
    %1117 = arith.mulf %1087, %1087 : vector<8x128xf32>
    %1118 = arith.addf %1116, %1117 : vector<8x128xf32>
    %1119 = arith.mulf %1023, %1033 : vector<8x128xf32>
    %1120 = arith.addf %1118, %1119 : vector<8x128xf32>
    %1121 = arith.mulf %1013, %1008 : vector<8x128xf32>
    %1122 = arith.mulf %1087, %1023 : vector<8x128xf32>
    %1123 = arith.addf %1121, %1122 : vector<8x128xf32>
    %1124 = arith.mulf %1023, %1089 : vector<8x128xf32>
    %1125 = arith.addf %1123, %1124 : vector<8x128xf32>
    %1126 = arith.mulf %1028, %1085 : vector<8x128xf32>
    %1127 = arith.mulf %1033, %1013 : vector<8x128xf32>
    %1128 = arith.addf %1126, %1127 : vector<8x128xf32>
    %1129 = arith.mulf %1089, %1028 : vector<8x128xf32>
    %1130 = arith.addf %1128, %1129 : vector<8x128xf32>
    %1131 = arith.mulf %1028, %1003 : vector<8x128xf32>
    %1132 = arith.mulf %1033, %1087 : vector<8x128xf32>
    %1133 = arith.addf %1131, %1132 : vector<8x128xf32>
    %1134 = arith.mulf %1089, %1033 : vector<8x128xf32>
    %1135 = arith.addf %1133, %1134 : vector<8x128xf32>
    %1136 = arith.mulf %1028, %1008 : vector<8x128xf32>
    %1137 = arith.mulf %1033, %1023 : vector<8x128xf32>
    %1138 = arith.addf %1136, %1137 : vector<8x128xf32>
    %1139 = arith.mulf %1089, %1089 : vector<8x128xf32>
    %1140 = arith.addf %1138, %1139 : vector<8x128xf32>
    %1141 = arith.mulf %1091, %1091 : vector<8x128xf32>
    %1142 = arith.mulf %1048, %1058 : vector<8x128xf32>
    %1143 = arith.addf %1141, %1142 : vector<8x128xf32>
    %1144 = arith.mulf %1053, %1073 : vector<8x128xf32>
    %1145 = arith.addf %1143, %1144 : vector<8x128xf32>
    %1146 = arith.mulf %1091, %1048 : vector<8x128xf32>
    %1147 = arith.mulf %1048, %1093 : vector<8x128xf32>
    %1148 = arith.addf %1146, %1147 : vector<8x128xf32>
    %1149 = arith.mulf %1053, %1078 : vector<8x128xf32>
    %1150 = arith.addf %1148, %1149 : vector<8x128xf32>
    %1151 = arith.mulf %1091, %1053 : vector<8x128xf32>
    %1152 = arith.mulf %1048, %1068 : vector<8x128xf32>
    %1153 = arith.addf %1151, %1152 : vector<8x128xf32>
    %1154 = arith.mulf %1053, %1095 : vector<8x128xf32>
    %1155 = arith.addf %1153, %1154 : vector<8x128xf32>
    %1156 = arith.mulf %1058, %1091 : vector<8x128xf32>
    %1157 = arith.mulf %1093, %1058 : vector<8x128xf32>
    %1158 = arith.addf %1156, %1157 : vector<8x128xf32>
    %1159 = arith.mulf %1068, %1073 : vector<8x128xf32>
    %1160 = arith.addf %1158, %1159 : vector<8x128xf32>
    %1161 = arith.mulf %1058, %1048 : vector<8x128xf32>
    %1162 = arith.mulf %1093, %1093 : vector<8x128xf32>
    %1163 = arith.addf %1161, %1162 : vector<8x128xf32>
    %1164 = arith.mulf %1068, %1078 : vector<8x128xf32>
    %1165 = arith.addf %1163, %1164 : vector<8x128xf32>
    %1166 = arith.mulf %1058, %1053 : vector<8x128xf32>
    %1167 = arith.mulf %1093, %1068 : vector<8x128xf32>
    %1168 = arith.addf %1166, %1167 : vector<8x128xf32>
    %1169 = arith.mulf %1068, %1095 : vector<8x128xf32>
    %1170 = arith.addf %1168, %1169 : vector<8x128xf32>
    %1171 = arith.mulf %1073, %1091 : vector<8x128xf32>
    %1172 = arith.mulf %1078, %1058 : vector<8x128xf32>
    %1173 = arith.addf %1171, %1172 : vector<8x128xf32>
    %1174 = arith.mulf %1095, %1073 : vector<8x128xf32>
    %1175 = arith.addf %1173, %1174 : vector<8x128xf32>
    %1176 = arith.mulf %1073, %1048 : vector<8x128xf32>
    %1177 = arith.mulf %1078, %1093 : vector<8x128xf32>
    %1178 = arith.addf %1176, %1177 : vector<8x128xf32>
    %1179 = arith.mulf %1095, %1078 : vector<8x128xf32>
    %1180 = arith.addf %1178, %1179 : vector<8x128xf32>
    %1181 = arith.mulf %1073, %1053 : vector<8x128xf32>
    %1182 = arith.mulf %1078, %1068 : vector<8x128xf32>
    %1183 = arith.addf %1181, %1182 : vector<8x128xf32>
    %1184 = arith.mulf %1095, %1095 : vector<8x128xf32>
    %1185 = arith.addf %1183, %1184 : vector<8x128xf32>
    %1186 = arith.mulf %1100, %1100 : vector<8x128xf32>
    %1187 = arith.mulf %1105, %1115 : vector<8x128xf32>
    %1188 = arith.addf %1186, %1187 : vector<8x128xf32>
    %1189 = arith.mulf %1110, %1130 : vector<8x128xf32>
    %1190 = arith.addf %1188, %1189 : vector<8x128xf32>
    %1191 = arith.mulf %1100, %1105 : vector<8x128xf32>
    %1192 = arith.mulf %1105, %1120 : vector<8x128xf32>
    %1193 = arith.addf %1191, %1192 : vector<8x128xf32>
    %1194 = arith.mulf %1110, %1135 : vector<8x128xf32>
    %1195 = arith.addf %1193, %1194 : vector<8x128xf32>
    %1196 = arith.mulf %1100, %1110 : vector<8x128xf32>
    %1197 = arith.mulf %1105, %1125 : vector<8x128xf32>
    %1198 = arith.addf %1196, %1197 : vector<8x128xf32>
    %1199 = arith.mulf %1110, %1140 : vector<8x128xf32>
    %1200 = arith.addf %1198, %1199 : vector<8x128xf32>
    %1201 = arith.mulf %1115, %1100 : vector<8x128xf32>
    %1202 = arith.mulf %1120, %1115 : vector<8x128xf32>
    %1203 = arith.addf %1201, %1202 : vector<8x128xf32>
    %1204 = arith.mulf %1125, %1130 : vector<8x128xf32>
    %1205 = arith.addf %1203, %1204 : vector<8x128xf32>
    %1206 = arith.mulf %1115, %1105 : vector<8x128xf32>
    %1207 = arith.mulf %1120, %1120 : vector<8x128xf32>
    %1208 = arith.addf %1206, %1207 : vector<8x128xf32>
    %1209 = arith.mulf %1125, %1135 : vector<8x128xf32>
    %1210 = arith.addf %1208, %1209 : vector<8x128xf32>
    %1211 = arith.mulf %1115, %1110 : vector<8x128xf32>
    %1212 = arith.mulf %1120, %1125 : vector<8x128xf32>
    %1213 = arith.addf %1211, %1212 : vector<8x128xf32>
    %1214 = arith.mulf %1125, %1140 : vector<8x128xf32>
    %1215 = arith.addf %1213, %1214 : vector<8x128xf32>
    %1216 = arith.mulf %1130, %1100 : vector<8x128xf32>
    %1217 = arith.mulf %1135, %1115 : vector<8x128xf32>
    %1218 = arith.addf %1216, %1217 : vector<8x128xf32>
    %1219 = arith.mulf %1140, %1130 : vector<8x128xf32>
    %1220 = arith.addf %1218, %1219 : vector<8x128xf32>
    %1221 = arith.mulf %1130, %1105 : vector<8x128xf32>
    %1222 = arith.mulf %1135, %1120 : vector<8x128xf32>
    %1223 = arith.addf %1221, %1222 : vector<8x128xf32>
    %1224 = arith.mulf %1140, %1135 : vector<8x128xf32>
    %1225 = arith.addf %1223, %1224 : vector<8x128xf32>
    %1226 = arith.mulf %1130, %1110 : vector<8x128xf32>
    %1227 = arith.mulf %1135, %1125 : vector<8x128xf32>
    %1228 = arith.addf %1226, %1227 : vector<8x128xf32>
    %1229 = arith.mulf %1140, %1140 : vector<8x128xf32>
    %1230 = arith.addf %1228, %1229 : vector<8x128xf32>
    %1231 = arith.mulf %1145, %1145 : vector<8x128xf32>
    %1232 = arith.mulf %1150, %1160 : vector<8x128xf32>
    %1233 = arith.addf %1231, %1232 : vector<8x128xf32>
    %1234 = arith.mulf %1155, %1175 : vector<8x128xf32>
    %1235 = arith.addf %1233, %1234 : vector<8x128xf32>
    %1236 = arith.mulf %1145, %1150 : vector<8x128xf32>
    %1237 = arith.mulf %1150, %1165 : vector<8x128xf32>
    %1238 = arith.addf %1236, %1237 : vector<8x128xf32>
    %1239 = arith.mulf %1155, %1180 : vector<8x128xf32>
    %1240 = arith.addf %1238, %1239 : vector<8x128xf32>
    %1241 = arith.mulf %1145, %1155 : vector<8x128xf32>
    %1242 = arith.mulf %1150, %1170 : vector<8x128xf32>
    %1243 = arith.addf %1241, %1242 : vector<8x128xf32>
    %1244 = arith.mulf %1155, %1185 : vector<8x128xf32>
    %1245 = arith.addf %1243, %1244 : vector<8x128xf32>
    %1246 = arith.mulf %1160, %1145 : vector<8x128xf32>
    %1247 = arith.mulf %1165, %1160 : vector<8x128xf32>
    %1248 = arith.addf %1246, %1247 : vector<8x128xf32>
    %1249 = arith.mulf %1170, %1175 : vector<8x128xf32>
    %1250 = arith.addf %1248, %1249 : vector<8x128xf32>
    %1251 = arith.mulf %1160, %1150 : vector<8x128xf32>
    %1252 = arith.mulf %1165, %1165 : vector<8x128xf32>
    %1253 = arith.addf %1251, %1252 : vector<8x128xf32>
    %1254 = arith.mulf %1170, %1180 : vector<8x128xf32>
    %1255 = arith.addf %1253, %1254 : vector<8x128xf32>
    %1256 = arith.mulf %1160, %1155 : vector<8x128xf32>
    %1257 = arith.mulf %1165, %1170 : vector<8x128xf32>
    %1258 = arith.addf %1256, %1257 : vector<8x128xf32>
    %1259 = arith.mulf %1170, %1185 : vector<8x128xf32>
    %1260 = arith.addf %1258, %1259 : vector<8x128xf32>
    %1261 = arith.mulf %1175, %1145 : vector<8x128xf32>
    %1262 = arith.mulf %1180, %1160 : vector<8x128xf32>
    %1263 = arith.addf %1261, %1262 : vector<8x128xf32>
    %1264 = arith.mulf %1185, %1175 : vector<8x128xf32>
    %1265 = arith.addf %1263, %1264 : vector<8x128xf32>
    %1266 = arith.mulf %1175, %1150 : vector<8x128xf32>
    %1267 = arith.mulf %1180, %1165 : vector<8x128xf32>
    %1268 = arith.addf %1266, %1267 : vector<8x128xf32>
    %1269 = arith.mulf %1185, %1180 : vector<8x128xf32>
    %1270 = arith.addf %1268, %1269 : vector<8x128xf32>
    %1271 = arith.mulf %1175, %1155 : vector<8x128xf32>
    %1272 = arith.mulf %1180, %1170 : vector<8x128xf32>
    %1273 = arith.addf %1271, %1272 : vector<8x128xf32>
    %1274 = arith.mulf %1185, %1185 : vector<8x128xf32>
    %1275 = arith.addf %1273, %1274 : vector<8x128xf32>
    %1276 = arith.mulf %1190, %1190 : vector<8x128xf32>
    %1277 = arith.mulf %1195, %1205 : vector<8x128xf32>
    %1278 = arith.addf %1276, %1277 : vector<8x128xf32>
    %1279 = arith.mulf %1200, %1220 : vector<8x128xf32>
    %1280 = arith.addf %1278, %1279 : vector<8x128xf32>
    %1281 = arith.mulf %1190, %1195 : vector<8x128xf32>
    %1282 = arith.mulf %1195, %1210 : vector<8x128xf32>
    %1283 = arith.addf %1281, %1282 : vector<8x128xf32>
    %1284 = arith.mulf %1200, %1225 : vector<8x128xf32>
    %1285 = arith.addf %1283, %1284 : vector<8x128xf32>
    %1286 = arith.mulf %1190, %1200 : vector<8x128xf32>
    %1287 = arith.mulf %1195, %1215 : vector<8x128xf32>
    %1288 = arith.addf %1286, %1287 : vector<8x128xf32>
    %1289 = arith.mulf %1200, %1230 : vector<8x128xf32>
    %1290 = arith.addf %1288, %1289 : vector<8x128xf32>
    %1291 = arith.mulf %1205, %1190 : vector<8x128xf32>
    %1292 = arith.mulf %1210, %1205 : vector<8x128xf32>
    %1293 = arith.addf %1291, %1292 : vector<8x128xf32>
    %1294 = arith.mulf %1215, %1220 : vector<8x128xf32>
    %1295 = arith.addf %1293, %1294 : vector<8x128xf32>
    %1296 = arith.mulf %1205, %1195 : vector<8x128xf32>
    %1297 = arith.mulf %1210, %1210 : vector<8x128xf32>
    %1298 = arith.addf %1296, %1297 : vector<8x128xf32>
    %1299 = arith.mulf %1215, %1225 : vector<8x128xf32>
    %1300 = arith.addf %1298, %1299 : vector<8x128xf32>
    %1301 = arith.mulf %1205, %1200 : vector<8x128xf32>
    %1302 = arith.mulf %1210, %1215 : vector<8x128xf32>
    %1303 = arith.addf %1301, %1302 : vector<8x128xf32>
    %1304 = arith.mulf %1215, %1230 : vector<8x128xf32>
    %1305 = arith.addf %1303, %1304 : vector<8x128xf32>
    %1306 = arith.mulf %1220, %1190 : vector<8x128xf32>
    %1307 = arith.mulf %1225, %1205 : vector<8x128xf32>
    %1308 = arith.addf %1306, %1307 : vector<8x128xf32>
    %1309 = arith.mulf %1230, %1220 : vector<8x128xf32>
    %1310 = arith.addf %1308, %1309 : vector<8x128xf32>
    %1311 = arith.mulf %1220, %1195 : vector<8x128xf32>
    %1312 = arith.mulf %1225, %1210 : vector<8x128xf32>
    %1313 = arith.addf %1311, %1312 : vector<8x128xf32>
    %1314 = arith.mulf %1230, %1225 : vector<8x128xf32>
    %1315 = arith.addf %1313, %1314 : vector<8x128xf32>
    %1316 = arith.mulf %1220, %1200 : vector<8x128xf32>
    %1317 = arith.mulf %1225, %1215 : vector<8x128xf32>
    %1318 = arith.addf %1316, %1317 : vector<8x128xf32>
    %1319 = arith.mulf %1230, %1230 : vector<8x128xf32>
    %1320 = arith.addf %1318, %1319 : vector<8x128xf32>
    %1321 = arith.mulf %1235, %1235 : vector<8x128xf32>
    %1322 = arith.mulf %1240, %1250 : vector<8x128xf32>
    %1323 = arith.addf %1321, %1322 : vector<8x128xf32>
    %1324 = arith.mulf %1245, %1265 : vector<8x128xf32>
    %1325 = arith.addf %1323, %1324 : vector<8x128xf32>
    %1326 = arith.mulf %1235, %1240 : vector<8x128xf32>
    %1327 = arith.mulf %1240, %1255 : vector<8x128xf32>
    %1328 = arith.addf %1326, %1327 : vector<8x128xf32>
    %1329 = arith.mulf %1245, %1270 : vector<8x128xf32>
    %1330 = arith.addf %1328, %1329 : vector<8x128xf32>
    %1331 = arith.mulf %1235, %1245 : vector<8x128xf32>
    %1332 = arith.mulf %1240, %1260 : vector<8x128xf32>
    %1333 = arith.addf %1331, %1332 : vector<8x128xf32>
    %1334 = arith.mulf %1245, %1275 : vector<8x128xf32>
    %1335 = arith.addf %1333, %1334 : vector<8x128xf32>
    %1336 = arith.mulf %1250, %1235 : vector<8x128xf32>
    %1337 = arith.mulf %1255, %1250 : vector<8x128xf32>
    %1338 = arith.addf %1336, %1337 : vector<8x128xf32>
    %1339 = arith.mulf %1260, %1265 : vector<8x128xf32>
    %1340 = arith.addf %1338, %1339 : vector<8x128xf32>
    %1341 = arith.mulf %1250, %1240 : vector<8x128xf32>
    %1342 = arith.mulf %1255, %1255 : vector<8x128xf32>
    %1343 = arith.addf %1341, %1342 : vector<8x128xf32>
    %1344 = arith.mulf %1260, %1270 : vector<8x128xf32>
    %1345 = arith.addf %1343, %1344 : vector<8x128xf32>
    %1346 = arith.mulf %1250, %1245 : vector<8x128xf32>
    %1347 = arith.mulf %1255, %1260 : vector<8x128xf32>
    %1348 = arith.addf %1346, %1347 : vector<8x128xf32>
    %1349 = arith.mulf %1260, %1275 : vector<8x128xf32>
    %1350 = arith.addf %1348, %1349 : vector<8x128xf32>
    %1351 = arith.mulf %1265, %1235 : vector<8x128xf32>
    %1352 = arith.mulf %1270, %1250 : vector<8x128xf32>
    %1353 = arith.addf %1351, %1352 : vector<8x128xf32>
    %1354 = arith.mulf %1275, %1265 : vector<8x128xf32>
    %1355 = arith.addf %1353, %1354 : vector<8x128xf32>
    %1356 = arith.mulf %1265, %1240 : vector<8x128xf32>
    %1357 = arith.mulf %1270, %1255 : vector<8x128xf32>
    %1358 = arith.addf %1356, %1357 : vector<8x128xf32>
    %1359 = arith.mulf %1275, %1270 : vector<8x128xf32>
    %1360 = arith.addf %1358, %1359 : vector<8x128xf32>
    %1361 = arith.mulf %1265, %1245 : vector<8x128xf32>
    %1362 = arith.mulf %1270, %1260 : vector<8x128xf32>
    %1363 = arith.addf %1361, %1362 : vector<8x128xf32>
    %1364 = arith.mulf %1275, %1275 : vector<8x128xf32>
    %1365 = arith.addf %1363, %1364 : vector<8x128xf32>
    %c0_270 = arith.constant 0 : index
    %1366 = arith.index_cast %3 : i32 to index
    %c0_271 = arith.constant 0 : index
    %1367 = vector.load %arg3[%c0_270, %1366, %c0_271] : memref<6x8x128xf32, #tpu.memory_space<vmem>>, vector<1x8x128xf32>
    %1368 = vector.shape_cast %1367 : vector<1x8x128xf32> to vector<8x128xf32>
    %c1_272 = arith.constant 1 : index
    %1369 = arith.index_cast %3 : i32 to index
    %c0_273 = arith.constant 0 : index
    %1370 = vector.load %arg3[%c1_272, %1369, %c0_273] : memref<6x8x128xf32, #tpu.memory_space<vmem>>, vector<1x8x128xf32>
    %1371 = vector.shape_cast %1370 : vector<1x8x128xf32> to vector<8x128xf32>
    %c2_274 = arith.constant 2 : index
    %1372 = arith.index_cast %3 : i32 to index
    %c0_275 = arith.constant 0 : index
    %1373 = vector.load %arg3[%c2_274, %1372, %c0_275] : memref<6x8x128xf32, #tpu.memory_space<vmem>>, vector<1x8x128xf32>
    %1374 = vector.shape_cast %1373 : vector<1x8x128xf32> to vector<8x128xf32>
    %c3_276 = arith.constant 3 : index
    %1375 = arith.index_cast %3 : i32 to index
    %c0_277 = arith.constant 0 : index
    %1376 = vector.load %arg3[%c3_276, %1375, %c0_277] : memref<6x8x128xf32, #tpu.memory_space<vmem>>, vector<1x8x128xf32>
    %1377 = vector.shape_cast %1376 : vector<1x8x128xf32> to vector<8x128xf32>
    %c4_278 = arith.constant 4 : index
    %1378 = arith.index_cast %3 : i32 to index
    %c0_279 = arith.constant 0 : index
    %1379 = vector.load %arg3[%c4_278, %1378, %c0_279] : memref<6x8x128xf32, #tpu.memory_space<vmem>>, vector<1x8x128xf32>
    %1380 = vector.shape_cast %1379 : vector<1x8x128xf32> to vector<8x128xf32>
    %c5_280 = arith.constant 5 : index
    %1381 = arith.index_cast %3 : i32 to index
    %c0_281 = arith.constant 0 : index
    %1382 = vector.load %arg3[%c5_280, %1381, %c0_281] : memref<6x8x128xf32, #tpu.memory_space<vmem>>, vector<1x8x128xf32>
    %1383 = vector.shape_cast %1382 : vector<1x8x128xf32> to vector<8x128xf32>
    %1384 = arith.mulf %1280, %1368 : vector<8x128xf32>
    %1385 = arith.mulf %1285, %1371 : vector<8x128xf32>
    %1386 = arith.addf %1384, %1385 : vector<8x128xf32>
    %1387 = arith.mulf %1290, %1374 : vector<8x128xf32>
    %1388 = arith.addf %1386, %1387 : vector<8x128xf32>
    %1389 = arith.mulf %1295, %1368 : vector<8x128xf32>
    %1390 = arith.mulf %1300, %1371 : vector<8x128xf32>
    %1391 = arith.addf %1389, %1390 : vector<8x128xf32>
    %1392 = arith.mulf %1305, %1374 : vector<8x128xf32>
    %1393 = arith.addf %1391, %1392 : vector<8x128xf32>
    %1394 = arith.mulf %1310, %1368 : vector<8x128xf32>
    %1395 = arith.mulf %1315, %1371 : vector<8x128xf32>
    %1396 = arith.addf %1394, %1395 : vector<8x128xf32>
    %1397 = arith.mulf %1320, %1374 : vector<8x128xf32>
    %1398 = arith.addf %1396, %1397 : vector<8x128xf32>
    %1399 = arith.mulf %1325, %1377 : vector<8x128xf32>
    %1400 = arith.mulf %1330, %1380 : vector<8x128xf32>
    %1401 = arith.addf %1399, %1400 : vector<8x128xf32>
    %1402 = arith.mulf %1335, %1383 : vector<8x128xf32>
    %1403 = arith.addf %1401, %1402 : vector<8x128xf32>
    %1404 = arith.mulf %1340, %1377 : vector<8x128xf32>
    %1405 = arith.mulf %1345, %1380 : vector<8x128xf32>
    %1406 = arith.addf %1404, %1405 : vector<8x128xf32>
    %1407 = arith.mulf %1350, %1383 : vector<8x128xf32>
    %1408 = arith.addf %1406, %1407 : vector<8x128xf32>
    %1409 = arith.mulf %1355, %1377 : vector<8x128xf32>
    %1410 = arith.mulf %1360, %1380 : vector<8x128xf32>
    %1411 = arith.addf %1409, %1410 : vector<8x128xf32>
    %1412 = arith.mulf %1365, %1383 : vector<8x128xf32>
    %1413 = arith.addf %1411, %1412 : vector<8x128xf32>
    %1414 = arith.mulf %1280, %1388 : vector<8x128xf32>
    %1415 = arith.mulf %1285, %1393 : vector<8x128xf32>
    %1416 = arith.addf %1414, %1415 : vector<8x128xf32>
    %1417 = arith.mulf %1290, %1398 : vector<8x128xf32>
    %1418 = arith.addf %1416, %1417 : vector<8x128xf32>
    %1419 = arith.mulf %1295, %1388 : vector<8x128xf32>
    %1420 = arith.mulf %1300, %1393 : vector<8x128xf32>
    %1421 = arith.addf %1419, %1420 : vector<8x128xf32>
    %1422 = arith.mulf %1305, %1398 : vector<8x128xf32>
    %1423 = arith.addf %1421, %1422 : vector<8x128xf32>
    %1424 = arith.mulf %1310, %1388 : vector<8x128xf32>
    %1425 = arith.mulf %1315, %1393 : vector<8x128xf32>
    %1426 = arith.addf %1424, %1425 : vector<8x128xf32>
    %1427 = arith.mulf %1320, %1398 : vector<8x128xf32>
    %1428 = arith.addf %1426, %1427 : vector<8x128xf32>
    %1429 = arith.mulf %1325, %1403 : vector<8x128xf32>
    %1430 = arith.mulf %1330, %1408 : vector<8x128xf32>
    %1431 = arith.addf %1429, %1430 : vector<8x128xf32>
    %1432 = arith.mulf %1335, %1413 : vector<8x128xf32>
    %1433 = arith.addf %1431, %1432 : vector<8x128xf32>
    %1434 = arith.mulf %1340, %1403 : vector<8x128xf32>
    %1435 = arith.mulf %1345, %1408 : vector<8x128xf32>
    %1436 = arith.addf %1434, %1435 : vector<8x128xf32>
    %1437 = arith.mulf %1350, %1413 : vector<8x128xf32>
    %1438 = arith.addf %1436, %1437 : vector<8x128xf32>
    %1439 = arith.mulf %1355, %1403 : vector<8x128xf32>
    %1440 = arith.mulf %1360, %1408 : vector<8x128xf32>
    %1441 = arith.addf %1439, %1440 : vector<8x128xf32>
    %1442 = arith.mulf %1365, %1413 : vector<8x128xf32>
    %1443 = arith.addf %1441, %1442 : vector<8x128xf32>
    %1444 = arith.mulf %1280, %1418 : vector<8x128xf32>
    %1445 = arith.mulf %1285, %1423 : vector<8x128xf32>
    %1446 = arith.addf %1444, %1445 : vector<8x128xf32>
    %1447 = arith.mulf %1290, %1428 : vector<8x128xf32>
    %1448 = arith.addf %1446, %1447 : vector<8x128xf32>
    %1449 = arith.mulf %1295, %1418 : vector<8x128xf32>
    %1450 = arith.mulf %1300, %1423 : vector<8x128xf32>
    %1451 = arith.addf %1449, %1450 : vector<8x128xf32>
    %1452 = arith.mulf %1305, %1428 : vector<8x128xf32>
    %1453 = arith.addf %1451, %1452 : vector<8x128xf32>
    %1454 = arith.mulf %1310, %1418 : vector<8x128xf32>
    %1455 = arith.mulf %1315, %1423 : vector<8x128xf32>
    %1456 = arith.addf %1454, %1455 : vector<8x128xf32>
    %1457 = arith.mulf %1320, %1428 : vector<8x128xf32>
    %1458 = arith.addf %1456, %1457 : vector<8x128xf32>
    %1459 = arith.mulf %1325, %1433 : vector<8x128xf32>
    %1460 = arith.mulf %1330, %1438 : vector<8x128xf32>
    %1461 = arith.addf %1459, %1460 : vector<8x128xf32>
    %1462 = arith.mulf %1335, %1443 : vector<8x128xf32>
    %1463 = arith.addf %1461, %1462 : vector<8x128xf32>
    %1464 = arith.mulf %1340, %1433 : vector<8x128xf32>
    %1465 = arith.mulf %1345, %1438 : vector<8x128xf32>
    %1466 = arith.addf %1464, %1465 : vector<8x128xf32>
    %1467 = arith.mulf %1350, %1443 : vector<8x128xf32>
    %1468 = arith.addf %1466, %1467 : vector<8x128xf32>
    %1469 = arith.mulf %1355, %1433 : vector<8x128xf32>
    %1470 = arith.mulf %1360, %1438 : vector<8x128xf32>
    %1471 = arith.addf %1469, %1470 : vector<8x128xf32>
    %1472 = arith.mulf %1365, %1443 : vector<8x128xf32>
    %1473 = arith.addf %1471, %1472 : vector<8x128xf32>
    %1474 = arith.mulf %1280, %1448 : vector<8x128xf32>
    %1475 = arith.mulf %1285, %1453 : vector<8x128xf32>
    %1476 = arith.addf %1474, %1475 : vector<8x128xf32>
    %1477 = arith.mulf %1290, %1458 : vector<8x128xf32>
    %1478 = arith.addf %1476, %1477 : vector<8x128xf32>
    %1479 = arith.mulf %1295, %1448 : vector<8x128xf32>
    %1480 = arith.mulf %1300, %1453 : vector<8x128xf32>
    %1481 = arith.addf %1479, %1480 : vector<8x128xf32>
    %1482 = arith.mulf %1305, %1458 : vector<8x128xf32>
    %1483 = arith.addf %1481, %1482 : vector<8x128xf32>
    %1484 = arith.mulf %1310, %1448 : vector<8x128xf32>
    %1485 = arith.mulf %1315, %1453 : vector<8x128xf32>
    %1486 = arith.addf %1484, %1485 : vector<8x128xf32>
    %1487 = arith.mulf %1320, %1458 : vector<8x128xf32>
    %1488 = arith.addf %1486, %1487 : vector<8x128xf32>
    %1489 = arith.mulf %1325, %1463 : vector<8x128xf32>
    %1490 = arith.mulf %1330, %1468 : vector<8x128xf32>
    %1491 = arith.addf %1489, %1490 : vector<8x128xf32>
    %1492 = arith.mulf %1335, %1473 : vector<8x128xf32>
    %1493 = arith.addf %1491, %1492 : vector<8x128xf32>
    %1494 = arith.mulf %1340, %1463 : vector<8x128xf32>
    %1495 = arith.mulf %1345, %1468 : vector<8x128xf32>
    %1496 = arith.addf %1494, %1495 : vector<8x128xf32>
    %1497 = arith.mulf %1350, %1473 : vector<8x128xf32>
    %1498 = arith.addf %1496, %1497 : vector<8x128xf32>
    %1499 = arith.mulf %1355, %1463 : vector<8x128xf32>
    %1500 = arith.mulf %1360, %1468 : vector<8x128xf32>
    %1501 = arith.addf %1499, %1500 : vector<8x128xf32>
    %1502 = arith.mulf %1365, %1473 : vector<8x128xf32>
    %1503 = arith.addf %1501, %1502 : vector<8x128xf32>
    %c0_282 = arith.constant 0 : index
    %1504 = arith.index_cast %3 : i32 to index
    %c0_283 = arith.constant 0 : index
    %1505 = vector.load %arg4[%c0_282, %1504, %c0_283] : memref<6x8x128xf32, #tpu.memory_space<vmem>>, vector<1x8x128xf32>
    %1506 = vector.shape_cast %1505 : vector<1x8x128xf32> to vector<8x128xf32>
    %1507 = vector.shape_cast %1478 : vector<8x128xf32> to vector<1x8x128xf32>
    tpu.vector_store %arg4[%c0_282, %1504, %c0_283], %1507 {strides = array<i32>} : memref<6x8x128xf32, #tpu.memory_space<vmem>>, vector<1x8x128xf32>,
    %c1_284 = arith.constant 1 : index
    %1508 = arith.index_cast %3 : i32 to index
    %c0_285 = arith.constant 0 : index
    %1509 = vector.load %arg4[%c1_284, %1508, %c0_285] : memref<6x8x128xf32, #tpu.memory_space<vmem>>, vector<1x8x128xf32>
    %1510 = vector.shape_cast %1509 : vector<1x8x128xf32> to vector<8x128xf32>
    %1511 = vector.shape_cast %1483 : vector<8x128xf32> to vector<1x8x128xf32>
    tpu.vector_store %arg4[%c1_284, %1508, %c0_285], %1511 {strides = array<i32>} : memref<6x8x128xf32, #tpu.memory_space<vmem>>, vector<1x8x128xf32>,
    %c2_286 = arith.constant 2 : index
    %1512 = arith.index_cast %3 : i32 to index
    %c0_287 = arith.constant 0 : index
    %1513 = vector.load %arg4[%c2_286, %1512, %c0_287] : memref<6x8x128xf32, #tpu.memory_space<vmem>>, vector<1x8x128xf32>
    %1514 = vector.shape_cast %1513 : vector<1x8x128xf32> to vector<8x128xf32>
    %1515 = vector.shape_cast %1488 : vector<8x128xf32> to vector<1x8x128xf32>
    tpu.vector_store %arg4[%c2_286, %1512, %c0_287], %1515 {strides = array<i32>} : memref<6x8x128xf32, #tpu.memory_space<vmem>>, vector<1x8x128xf32>,
    %c3_288 = arith.constant 3 : index
    %1516 = arith.index_cast %3 : i32 to index
    %c0_289 = arith.constant 0 : index
    %1517 = vector.load %arg4[%c3_288, %1516, %c0_289] : memref<6x8x128xf32, #tpu.memory_space<vmem>>, vector<1x8x128xf32>
    %1518 = vector.shape_cast %1517 : vector<1x8x128xf32> to vector<8x128xf32>
    %1519 = vector.shape_cast %1493 : vector<8x128xf32> to vector<1x8x128xf32>
    tpu.vector_store %arg4[%c3_288, %1516, %c0_289], %1519 {strides = array<i32>} : memref<6x8x128xf32, #tpu.memory_space<vmem>>, vector<1x8x128xf32>,
    %c4_290 = arith.constant 4 : index
    %1520 = arith.index_cast %3 : i32 to index
    %c0_291 = arith.constant 0 : index
    %1521 = vector.load %arg4[%c4_290, %1520, %c0_291] : memref<6x8x128xf32, #tpu.memory_space<vmem>>, vector<1x8x128xf32>
    %1522 = vector.shape_cast %1521 : vector<1x8x128xf32> to vector<8x128xf32>
    %1523 = vector.shape_cast %1498 : vector<8x128xf32> to vector<1x8x128xf32>
    tpu.vector_store %arg4[%c4_290, %1520, %c0_291], %1523 {strides = array<i32>} : memref<6x8x128xf32, #tpu.memory_space<vmem>>, vector<1x8x128xf32>,
    %c5_292 = arith.constant 5 : index
    %1524 = arith.index_cast %3 : i32 to index
    %c0_293 = arith.constant 0 : index
    %1525 = vector.load %arg4[%c5_292, %1524, %c0_293] : memref<6x8x128xf32, #tpu.memory_space<vmem>>, vector<1x8x128xf32>
    %1526 = vector.shape_cast %1525 : vector<1x8x128xf32> to vector<8x128xf32>
    %1527 = vector.shape_cast %1503 : vector<8x128xf32> to vector<1x8x128xf32>
    tpu.vector_store %arg4[%c5_292, %1524, %c0_293], %1527 {strides = array<i32>} : memref<6x8x128xf32, #tpu.memory_space<vmem>>, vector<1x8x128xf32>,
    %c1_i32_294 = arith.constant 1 : i32
    return
  }
  func.func @transform_0(%arg0: i32) -> (i32, i32) {
    %c0_i32 = arith.constant 0 : i32
    %c0_i32_0 = arith.constant 0 : i32
    %c0_i32_1 = arith.constant 0 : i32
    return %c0_i32, %c0_i32_0 : i32, i32
  }
  func.func @transform_1(%arg0: i32) -> (i32, i32, i32) {
    %c0_i32 = arith.constant 0 : i32
    %c0_i32_0 = arith.constant 0 : i32
    %c0_i32_1 = arith.constant 0 : i32
    return %c0_i32, %arg0, %c0_i32_0 : i32, i32, i32
  }
  func.func @transform_2(%arg0: i32) -> (i32, i32, i32) {
    %c0_i32 = arith.constant 0 : i32
    %c0_i32_0 = arith.constant 0 : i32
    %c0_i32_1 = arith.constant 0 : i32
    return %c0_i32, %arg0, %c0_i32_0 : i32, i32, i32
  }
  func.func @transform_3(%arg0: i32) -> (i32, i32, i32) {
    %c0_i32 = arith.constant 0 : i32
    %c0_i32_0 = arith.constant 0 : i32
    %c0_i32_1 = arith.constant 0 : i32
    return %c0_i32, %arg0, %c0_i32_0 : i32, i32, i32
  }
}

</mosaic_0001>

<llo_original>
// kernel: tpu_custom_call.1
$region0: #{tpu_custom_call.1}
  #allocation0 [shape = 'u32[]', space=smem, size = 0x4, offset = 0x4, fixed_abs, tag = 'smem constant byte address 0x4 - core index']
  #allocation1 [shape = 'u32[144,128]{1,0:T(1,128)}', space=vmem, size = 0x12000, scoped, tag = 'internal scratch']
  %s0 = inlined_call_operand.vmem [shape: f32[18,6], index: 0, kind: input, shape index: {}]
  %s1 = inlined_call_operand.hbm [shape: f32[6,8,128], index: 1, kind: input, shape index: {}]
  %s2 = inlined_call_operand.hbm [shape: f32[6,8,128], index: 2, kind: input, shape index: {}]
  %s3 = inlined_call_operand.hbm [shape: f32[6,8,128], index: 3, kind: output, shape index: {}]
  %s4 = sld [smem:[#allocation0]]
  $region34: #{tpu_custom_call.1} parent=0
    _
  %s6 = ssub.s32 1, %s4
  %s7 = scalar_select 0, %s6, %s4
  $region1: #{tpu_custom_call.1} parent=0
    #allocation2 [shape = 'u8[12288]{0}', space=smem, size = 0x3000, scoped, tag = 'input window, operand 0, single buffered']
    #allocation3 [shape = 's32[1]{0}', space=sflag, size = 0x4, scoped, tag = 'scoped memory for tpu_custom_call.1']
    #allocation4 [shape = 's32[1]{0}', space=sflag, size = 0x4, scoped, tag = 'scoped memory for tpu_custom_call.1']
    #allocation5 [shape = 's32[1]{0}', space=sflag, size = 0x4, scoped, tag = 'scoped memory for tpu_custom_call.1']
    #allocation6 [shape = 'u8[24576]{0}', space=vmem, size = 0x6000, scoped, tag = 'input window, operand 1, single buffered']
    #allocation7 [shape = 'u8[24576]{0}', space=vmem, size = 0x6000, scoped, tag = 'input window, operand 2, single buffered']
    #allocation8 [shape = 's32[1]{0}', space=sflag, size = 0x4, scoped, tag = 'scoped memory for tpu_custom_call.1']
    #allocation9 [shape = 'u8[24576]{0}', space=vmem, size = 0x6000, scoped, tag = 'output window, operand 0, single buffered']
    %8 = vsyncpa [#allocation5], 0
    %9 = vsyncpa [#allocation3], 0
    %10 = vsyncpa [#allocation8], 0
    %11 = vsyncpa [#allocation4], 0
    // Predicated region
    $region2: #{tpu_custom_call.1} parent=1 // pred_check
      _
    $region3: #{tpu_custom_call.1} parent=1 // pred_check_branch
      %13 = sbr.rel (0) target = $region5
    $region4: #{tpu_custom_call.1} parent=1 // pred_region
      %s15 = ssub.s32 384, 384
      %16 = vsyncadd [#allocation5], %s15
      %s17 = sshll.u32 %s0, 4
      %s18 = int_to_ptr.vmem [resolvable:$true] %s17
      %23 = dma.vmem_to_smem %s18, 384, [#allocation2], [#allocation5], 128, 128, 8
    $region5: #{tpu_custom_call.1} parent=1 // pred_fallthru
      _
    // Predicated region
    $region6: #{tpu_custom_call.1} parent=1 // pred_check
      _
    $region7: #{tpu_custom_call.1} parent=1 // pred_check_branch
      %25 = sbr.rel (0) target = $region9
    $region8: #{tpu_custom_call.1} parent=1 // pred_region
      %s27 = ssub.s32 768, 768
      %28 = vsyncadd [#allocation3], %s27
      %s29 = sshll.u32 [#allocation6], 4
      %s30 = int_to_ptr.vmem [resolvable:$true] %s29
      %35 = dma.hbm_to_vmem [thread:$0]  %s1, 768, %s30, [#allocation3], 128, 128, 8
    $region9: #{tpu_custom_call.1} parent=1 // pred_fallthru
      _
    // Predicated region
    $region10: #{tpu_custom_call.1} parent=1 // pred_check
      _
    $region11: #{tpu_custom_call.1} parent=1 // pred_check_branch
      %37 = sbr.rel (0) target = $region13
    $region12: #{tpu_custom_call.1} parent=1 // pred_region
      %s39 = ssub.s32 768, 768
      %40 = vsyncadd [#allocation8], %s39
      %s41 = sshll.u32 [#allocation7], 4
      %s42 = int_to_ptr.vmem [resolvable:$true] %s41
      %47 = dma.hbm_to_vmem [thread:$0]  %s2, 768, %s42, [#allocation8], 128, 128, 8
    $region13: #{tpu_custom_call.1} parent=1 // pred_fallthru
      _
    // Predicated region
    $region14: #{tpu_custom_call.1} parent=1 // pred_check
      _
    $region15: #{tpu_custom_call.1} parent=1 // pred_check_branch
      %49 = sbr.rel (0) target = $region17
    $region16: #{tpu_custom_call.1} parent=1 // pred_region
      %50 = dma.done [#allocation5], 384
    $region17: #{tpu_custom_call.1} parent=1 // pred_fallthru
      _
    // Predicated region
    $region18: #{tpu_custom_call.1} parent=1 // pred_check
      _
    $region19: #{tpu_custom_call.1} parent=1 // pred_check_branch
      %52 = sbr.rel (0) target = $region21
    $region20: #{tpu_custom_call.1} parent=1 // pred_region
      %53 = dma.done [#allocation3], 768
    $region21: #{tpu_custom_call.1} parent=1 // pred_fallthru
      _
    // Predicated region
    $region22: #{tpu_custom_call.1} parent=1 // pred_check
      _
    $region23: #{tpu_custom_call.1} parent=1 // pred_check_branch
      %55 = sbr.rel (0) target = $region25
    $region24: #{tpu_custom_call.1} parent=1 // pred_region
      %56 = dma.done [#allocation8], 768
    $region25: #{tpu_custom_call.1} parent=1 // pred_fallthru
      _
    %57 = sfence
    %v58 = vld [vmem:[#allocation6] sm:$0xff]
    %s59 = sadd.s32 0, 8
    %s60 = scalar_lea.vmem [#allocation6], %s59
    %v61 = vld [vmem:[%s60] sm:$0xff]
    %s62 = sadd.s32 0, 16
    %s63 = scalar_lea.vmem [#allocation6], %s62
    %v64 = vld [vmem:[%s63] sm:$0xff]
    %s65 = sadd.s32 0, 24
    %s66 = scalar_lea.vmem [#allocation6], %s65
    %v67 = vld [vmem:[%s66] sm:$0xff]
    %s68 = sadd.s32 0, 32
    %s69 = scalar_lea.vmem [#allocation6], %s68
    %v70 = vld [vmem:[%s69] sm:$0xff]
    %s71 = sadd.s32 0, 40
    %s72 = scalar_lea.vmem [#allocation6], %s71
    %v73 = vld [vmem:[%s72] sm:$0xff]
    %s74 = sld [smem:[#allocation2]]
    %v75 = vstv %s74
    %v76 = vmul.f32 %v75, %v58
    %s77 = sld [smem:[#allocation2 + $0x1]]
    %v78 = vstv %s77
    %v79 = vmul.f32 %v78, %v61
    %v80 = vadd.f32 %v76, %v79
    %s81 = sld [smem:[#allocation2 + $0x2]]
    %v82 = vstv %s81
    %v83 = vmul.f32 %v82, %v64
    %v84 = vadd.f32 %v80, %v83
    %s85 = sld [smem:[#allocation2 + $0x3]]
    %v86 = vstv %s85
    %v87 = vmul.f32 %v86, %v67
    %v88 = vadd.f32 %v84, %v87
    %s89 = sld [smem:[#allocation2 + $0x4]]
    %v90 = vstv %s89
    %v91 = vmul.f32 %v90, %v70
    %v92 = vadd.f32 %v88, %v91
    %s93 = sld [smem:[#allocation2 + $0x5]]
    %v94 = vstv %s93
    %v95 = vmul.f32 %v94, %v73
    %v96 = vadd.f32 %v92, %v95
    %s97 = sld [smem:[#allocation2 + $0x80]]
    %v98 = vstv %s97
    %v99 = vmul.f32 %v98, %v58
    %s100 = sld [smem:[#allocation2 + $0x81]]
    %v101 = vstv %s100
    %v102 = vmul.f32 %v101, %v61
    %v103 = vadd.f32 %v99, %v102
    %s104 = sld [smem:[#allocation2 + $0x82]]
    %v105 = vstv %s104
    %v106 = vmul.f32 %v105, %v64
    %v107 = vadd.f32 %v103, %v106
    %s108 = sld [smem:[#allocation2 + $0x83]]
    %v109 = vstv %s108
    %v110 = vmul.f32 %v109, %v67
    %v111 = vadd.f32 %v107, %v110
    %s112 = sld [smem:[#allocation2 + $0x84]]
    %v113 = vstv %s112
    %v114 = vmul.f32 %v113, %v70
    %v115 = vadd.f32 %v111, %v114
    %s116 = sld [smem:[#allocation2 + $0x85]]
    %v117 = vstv %s116
    %v118 = vmul.f32 %v117, %v73
    %v119 = vadd.f32 %v115, %v118
    %s120 = sld [smem:[#allocation2 + $0x100]]
    %v121 = vstv %s120
    %v122 = vmul.f32 %v121, %v58
    %s123 = sld [smem:[#allocation2 + $0x101]]
    %v124 = vstv %s123
    %v125 = vmul.f32 %v124, %v61
    %v126 = vadd.f32 %v122, %v125
    %s127 = sld [smem:[#allocation2 + $0x102]]
    %v128 = vstv %s127
    %v129 = vmul.f32 %v128, %v64
    %v130 = vadd.f32 %v126, %v129
    %s131 = sld [smem:[#allocation2 + $0x103]]
    %v132 = vstv %s131
    %v133 = vmul.f32 %v132, %v67
    %v134 = vadd.f32 %v130, %v133
    %s135 = sld [smem:[#allocation2 + $0x104]]
    %v136 = vstv %s135
    %v137 = vmul.f32 %v136, %v70
    %v138 = vadd.f32 %v134, %v137
    %s139 = sld [smem:[#allocation2 + $0x105]]
    %v140 = vstv %s139
    %v141 = vmul.f32 %v140, %v73
    %v142 = vadd.f32 %v138, %v141
    %s143 = sld [smem:[#allocation2 + $0x180]]
    %v144 = vstv %s143
    %v145 = vmul.f32 %v144, %v58
    %s146 = sld [smem:[#allocation2 + $0x181]]
    %v147 = vstv %s146
    %v148 = vmul.f32 %v147, %v61
    %v149 = vadd.f32 %v145, %v148
    %s150 = sld [smem:[#allocation2 + $0x182]]
    %v151 = vstv %s150
    %v152 = vmul.f32 %v151, %v64
    %v153 = vadd.f32 %v149, %v152
    %s154 = sld [smem:[#allocation2 + $0x183]]
    %v155 = vstv %s154
    %v156 = vmul.f32 %v155, %v67
    %v157 = vadd.f32 %v153, %v156
    %s158 = sld [smem:[#allocation2 + $0x184]]
    %v159 = vstv %s158
    %v160 = vmul.f32 %v159, %v70
    %v161 = vadd.f32 %v157, %v160
    %s162 = sld [smem:[#allocation2 + $0x185]]
    %v163 = vstv %s162
    %v164 = vmul.f32 %v163, %v73
    %v165 = vadd.f32 %v161, %v164
    %s166 = sld [smem:[#allocation2 + $0x200]]
    %v167 = vstv %s166
    %v168 = vmul.f32 %v167, %v58
    %s169 = sld [smem:[#allocation2 + $0x201]]
    %v170 = vstv %s169
    %v171 = vmul.f32 %v170, %v61
    %v172 = vadd.f32 %v168, %v171
    %s173 = sld [smem:[#allocation2 + $0x202]]
    %v174 = vstv %s173
    %v175 = vmul.f32 %v174, %v64
    %v176 = vadd.f32 %v172, %v175
    %s177 = sld [smem:[#allocation2 + $0x203]]
    %v178 = vstv %s177
    %v179 = vmul.f32 %v178, %v67
    %v180 = vadd.f32 %v176, %v179
    %s181 = sld [smem:[#allocation2 + $0x204]]
    %v182 = vstv %s181
    %v183 = vmul.f32 %v182, %v70
    %v184 = vadd.f32 %v180, %v183
    %s185 = sld [smem:[#allocation2 + $0x205]]
    %v186 = vstv %s185
    %v187 = vmul.f32 %v186, %v73
    %v188 = vadd.f32 %v184, %v187
    %s189 = sld [smem:[#allocation2 + $0x280]]
    %v190 = vstv %s189
    %v191 = vmul.f32 %v190, %v58
    %s192 = sld [smem:[#allocation2 + $0x281]]
    %v193 = vstv %s192
    %v194 = vmul.f32 %v193, %v61
    %v195 = vadd.f32 %v191, %v194
    %s196 = sld [smem:[#allocation2 + $0x282]]
    %v197 = vstv %s196
    %v198 = vmul.f32 %v197, %v64
    %v199 = vadd.f32 %v195, %v198
    %s200 = sld [smem:[#allocation2 + $0x283]]
    %v201 = vstv %s200
    %v202 = vmul.f32 %v201, %v67
    %v203 = vadd.f32 %v199, %v202
    %s204 = sld [smem:[#allocation2 + $0x284]]
    %v205 = vstv %s204
    %v206 = vmul.f32 %v205, %v70
    %v207 = vadd.f32 %v203, %v206
    %s208 = sld [smem:[#allocation2 + $0x285]]
    %v209 = vstv %s208
    %v210 = vmul.f32 %v209, %v73
    %v211 = vadd.f32 %v207, %v210
    %s212 = sld [smem:[#allocation2 + $0x300]]
    %v213 = vstv %s212
    %v214 = vmul.f32 %v213, %v58
    %s215 = sld [smem:[#allocation2 + $0x301]]
    %v216 = vstv %s215
    %v217 = vmul.f32 %v216, %v61
    %v218 = vadd.f32 %v214, %v217
    %s219 = sld [smem:[#allocation2 + $0x302]]
    %v220 = vstv %s219
    %v221 = vmul.f32 %v220, %v64
    %v222 = vadd.f32 %v218, %v221
    %s223 = sld [smem:[#allocation2 + $0x303]]
    %v224 = vstv %s223
    %v225 = vmul.f32 %v224, %v67
    %v226 = vadd.f32 %v222, %v225
    %s227 = sld [smem:[#allocation2 + $0x304]]
    %v228 = vstv %s227
    %v229 = vmul.f32 %v228, %v70
    %v230 = vadd.f32 %v226, %v229
    %s231 = sld [smem:[#allocation2 + $0x305]]
    %v232 = vstv %s231
    %v233 = vmul.f32 %v232, %v73
    %v234 = vadd.f32 %v230, %v233
    %s235 = sld [smem:[#allocation2 + $0x380]]
    %v236 = vstv %s235
    %v237 = vmul.f32 %v236, %v58
    %s238 = sld [smem:[#allocation2 + $0x381]]
    %v239 = vstv %s238
    %v240 = vmul.f32 %v239, %v61
    %v241 = vadd.f32 %v237, %v240
    %s242 = sld [smem:[#allocation2 + $0x382]]
    %v243 = vstv %s242
    %v244 = vmul.f32 %v243, %v64
    %v245 = vadd.f32 %v241, %v244
    %s246 = sld [smem:[#allocation2 + $0x383]]
    %v247 = vstv %s246
    %v248 = vmul.f32 %v247, %v67
    %v249 = vadd.f32 %v245, %v248
    %s250 = sld [smem:[#allocation2 + $0x384]]
    %v251 = vstv %s250
    %v252 = vmul.f32 %v251, %v70
    %v253 = vadd.f32 %v249, %v252
    %s254 = sld [smem:[#allocation2 + $0x385]]
    %v255 = vstv %s254
    %v256 = vmul.f32 %v255, %v73
    %v257 = vadd.f32 %v253, %v256
    %s258 = sld [smem:[#allocation2 + $0x400]]
    %v259 = vstv %s258
    %v260 = vmul.f32 %v259, %v58
    %s261 = sld [smem:[#allocation2 + $0x401]]
    %v262 = vstv %s261
    %v263 = vmul.f32 %v262, %v61
    %v264 = vadd.f32 %v260, %v263
    %s265 = sld [smem:[#allocation2 + $0x402]]
    %v266 = vstv %s265
    %v267 = vmul.f32 %v266, %v64
    %v268 = vadd.f32 %v264, %v267
    %s269 = sld [smem:[#allocation2 + $0x403]]
    %v270 = vstv %s269
    %v271 = vmul.f32 %v270, %v67
    %v272 = vadd.f32 %v268, %v271
    %s273 = sld [smem:[#allocation2 + $0x404]]
    %v274 = vstv %s273
    %v275 = vmul.f32 %v274, %v70
    %v276 = vadd.f32 %v272, %v275
    %s277 = sld [smem:[#allocation2 + $0x405]]
    %v278 = vstv %s277
    %v279 = vmul.f32 %v278, %v73
    %v280 = vadd.f32 %v276, %v279
    %s281 = sld [smem:[#allocation2 + $0x480]]
    %v282 = vstv %s281
    %v283 = vmul.f32 %v282, %v58
    %s284 = sld [smem:[#allocation2 + $0x481]]
    %v285 = vstv %s284
    %v286 = vmul.f32 %v285, %v61
    %v287 = vadd.f32 %v283, %v286
    %s288 = sld [smem:[#allocation2 + $0x482]]
    %v289 = vstv %s288
    %v290 = vmul.f32 %v289, %v64
    %v291 = vadd.f32 %v287, %v290
    %s292 = sld [smem:[#allocation2 + $0x483]]
    %v293 = vstv %s292
    %v294 = vmul.f32 %v293, %v67
    %v295 = vadd.f32 %v291, %v294
    %s296 = sld [smem:[#allocation2 + $0x484]]
    %v297 = vstv %s296
    %v298 = vmul.f32 %v297, %v70
    %v299 = vadd.f32 %v295, %v298
    %s300 = sld [smem:[#allocation2 + $0x485]]
    %v301 = vstv %s300
    %v302 = vmul.f32 %v301, %v73
    %v303 = vadd.f32 %v299, %v302
    %s304 = sld [smem:[#allocation2 + $0x500]]
    %v305 = vstv %s304
    %v306 = vmul.f32 %v305, %v58
    %s307 = sld [smem:[#allocation2 + $0x501]]
    %v308 = vstv %s307
    %v309 = vmul.f32 %v308, %v61
    %v310 = vadd.f32 %v306, %v309
    %s311 = sld [smem:[#allocation2 + $0x502]]
    %v312 = vstv %s311
    %v313 = vmul.f32 %v312, %v64
    %v314 = vadd.f32 %v310, %v313
    %s315 = sld [smem:[#allocation2 + $0x503]]
    %v316 = vstv %s315
    %v317 = vmul.f32 %v316, %v67
    %v318 = vadd.f32 %v314, %v317
    %s319 = sld [smem:[#allocation2 + $0x504]]
    %v320 = vstv %s319
    %v321 = vmul.f32 %v320, %v70
    %v322 = vadd.f32 %v318, %v321
    %s323 = sld [smem:[#allocation2 + $0x505]]
    %v324 = vstv %s323
    %v325 = vmul.f32 %v324, %v73
    %v326 = vadd.f32 %v322, %v325
    %s327 = sld [smem:[#allocation2 + $0x580]]
    %v328 = vstv %s327
    %v329 = vmul.f32 %v328, %v58
    %s330 = sld [smem:[#allocation2 + $0x581]]
    %v331 = vstv %s330
    %v332 = vmul.f32 %v331, %v61
    %v333 = vadd.f32 %v329, %v332
    %s334 = sld [smem:[#allocation2 + $0x582]]
    %v335 = vstv %s334
    %v336 = vmul.f32 %v335, %v64
    %v337 = vadd.f32 %v333, %v336
    %s338 = sld [smem:[#allocation2 + $0x583]]
    %v339 = vstv %s338
    %v340 = vmul.f32 %v339, %v67
    %v341 = vadd.f32 %v337, %v340
    %s342 = sld [smem:[#allocation2 + $0x584]]
    %v343 = vstv %s342
    %v344 = vmul.f32 %v343, %v70
    %v345 = vadd.f32 %v341, %v344
    %s346 = sld [smem:[#allocation2 + $0x585]]
    %v347 = vstv %s346
    %v348 = vmul.f32 %v347, %v73
    %v349 = vadd.f32 %v345, %v348
    %s350 = sld [smem:[#allocation2 + $0x600]]
    %v351 = vstv %s350
    %v352 = vmul.f32 %v351, %v58
    %s353 = sld [smem:[#allocation2 + $0x601]]
    %v354 = vstv %s353
    %v355 = vmul.f32 %v354, %v61
    %v356 = vadd.f32 %v352, %v355
    %s357 = sld [smem:[#allocation2 + $0x602]]
    %v358 = vstv %s357
    %v359 = vmul.f32 %v358, %v64
    %v360 = vadd.f32 %v356, %v359
    %s361 = sld [smem:[#allocation2 + $0x603]]
    %v362 = vstv %s361
    %v363 = vmul.f32 %v362, %v67
    %v364 = vadd.f32 %v360, %v363
    %s365 = sld [smem:[#allocation2 + $0x604]]
    %v366 = vstv %s365
    %v367 = vmul.f32 %v366, %v70
    %v368 = vadd.f32 %v364, %v367
    %s369 = sld [smem:[#allocation2 + $0x605]]
    %v370 = vstv %s369
    %v371 = vmul.f32 %v370, %v73
    %v372 = vadd.f32 %v368, %v371
    %s373 = sld [smem:[#allocation2 + $0x680]]
    %v374 = vstv %s373
    %v375 = vmul.f32 %v374, %v58
    %s376 = sld [smem:[#allocation2 + $0x681]]
    %v377 = vstv %s376
    %v378 = vmul.f32 %v377, %v61
    %v379 = vadd.f32 %v375, %v378
    %s380 = sld [smem:[#allocation2 + $0x682]]
    %v381 = vstv %s380
    %v382 = vmul.f32 %v381, %v64
    %v383 = vadd.f32 %v379, %v382
    %s384 = sld [smem:[#allocation2 + $0x683]]
    %v385 = vstv %s384
    %v386 = vmul.f32 %v385, %v67
    %v387 = vadd.f32 %v383, %v386
    %s388 = sld [smem:[#allocation2 + $0x684]]
    %v389 = vstv %s388
    %v390 = vmul.f32 %v389, %v70
    %v391 = vadd.f32 %v387, %v390
    %s392 = sld [smem:[#allocation2 + $0x685]]
    %v393 = vstv %s392
    %v394 = vmul.f32 %v393, %v73
    %v395 = vadd.f32 %v391, %v394
    %s396 = sld [smem:[#allocation2 + $0x700]]
    %v397 = vstv %s396
    %v398 = vmul.f32 %v397, %v58
    %s399 = sld [smem:[#allocation2 + $0x701]]
    %v400 = vstv %s399
    %v401 = vmul.f32 %v400, %v61
    %v402 = vadd.f32 %v398, %v401
    %s403 = sld [smem:[#allocation2 + $0x702]]
    %v404 = vstv %s403
    %v405 = vmul.f32 %v404, %v64
    %v406 = vadd.f32 %v402, %v405
    %s407 = sld [smem:[#allocation2 + $0x703]]
    %v408 = vstv %s407
    %v409 = vmul.f32 %v408, %v67
    %v410 = vadd.f32 %v406, %v409
    %s411 = sld [smem:[#allocation2 + $0x704]]
    %v412 = vstv %s411
    %v413 = vmul.f32 %v412, %v70
    %v414 = vadd.f32 %v410, %v413
    %s415 = sld [smem:[#allocation2 + $0x705]]
    %v416 = vstv %s415
    %v417 = vmul.f32 %v416, %v73
    %v418 = vadd.f32 %v414, %v417
    %s419 = sld [smem:[#allocation2 + $0x780]]
    %v420 = vstv %s419
    %v421 = vmul.f32 %v420, %v58
    %s422 = sld [smem:[#allocation2 + $0x781]]
    %v423 = vstv %s422
    %v424 = vmul.f32 %v423, %v61
    %v425 = vadd.f32 %v421, %v424
    %s426 = sld [smem:[#allocation2 + $0x782]]
    %v427 = vstv %s426
    %v428 = vmul.f32 %v427, %v64
    %v429 = vadd.f32 %v425, %v428
    %s430 = sld [smem:[#allocation2 + $0x783]]
    %v431 = vstv %s430
    %v432 = vmul.f32 %v431, %v67
    %v433 = vadd.f32 %v429, %v432
    %s434 = sld [smem:[#allocation2 + $0x784]]
    %v435 = vstv %s434
    %v436 = vmul.f32 %v435, %v70
    %v437 = vadd.f32 %v433, %v436
    %s438 = sld [smem:[#allocation2 + $0x785]]
    %v439 = vstv %s438
    %v440 = vmul.f32 %v439, %v73
    %v441 = vadd.f32 %v437, %v440
    %s442 = sld [smem:[#allocation2 + $0x800]]
    %v443 = vstv %s442
    %v444 = vmul.f32 %v443, %v58
    %s445 = sld [smem:[#allocation2 + $0x801]]
    %v446 = vstv %s445
    %v447 = vmul.f32 %v446, %v61
    %v448 = vadd.f32 %v444, %v447
    %s449 = sld [smem:[#allocation2 + $0x802]]
    %v450 = vstv %s449
    %v451 = vmul.f32 %v450, %v64
    %v452 = vadd.f32 %v448, %v451
    %s453 = sld [smem:[#allocation2 + $0x803]]
    %v454 = vstv %s453
    %v455 = vmul.f32 %v454, %v67
    %v456 = vadd.f32 %v452, %v455
    %s457 = sld [smem:[#allocation2 + $0x804]]
    %v458 = vstv %s457
    %v459 = vmul.f32 %v458, %v70
    %v460 = vadd.f32 %v456, %v459
    %s461 = sld [smem:[#allocation2 + $0x805]]
    %v462 = vstv %s461
    %v463 = vmul.f32 %v462, %v73
    %v464 = vadd.f32 %v460, %v463
    %s465 = sld [smem:[#allocation2 + $0x880]]
    %v466 = vstv %s465
    %v467 = vmul.f32 %v466, %v58
    %s468 = sld [smem:[#allocation2 + $0x881]]
    %v469 = vstv %s468
    %v470 = vmul.f32 %v469, %v61
    %v471 = vadd.f32 %v467, %v470
    %s472 = sld [smem:[#allocation2 + $0x882]]
    %v473 = vstv %s472
    %v474 = vmul.f32 %v473, %v64
    %v475 = vadd.f32 %v471, %v474
    %s476 = sld [smem:[#allocation2 + $0x883]]
    %v477 = vstv %s476
    %v478 = vmul.f32 %v477, %v67
    %v479 = vadd.f32 %v475, %v478
    %s480 = sld [smem:[#allocation2 + $0x884]]
    %v481 = vstv %s480
    %v482 = vmul.f32 %v481, %v70
    %v483 = vadd.f32 %v479, %v482
    %s484 = sld [smem:[#allocation2 + $0x885]]
    %v485 = vstv %s484
    %v486 = vmul.f32 %v485, %v73
    %v487 = vadd.f32 %v483, %v486
    %v488 = vmul.f32 %v96, 0.0001984127
    %v489 = vadd.f32 %v488, 0.0013888889
    %v490 = vmul.f32 %v119, 0.0001984127
    %v491 = vmul.f32 %v142, 0.0001984127
    %v492 = vmul.f32 %v165, 0.0001984127
    %v493 = vmul.f32 %v188, 0.0001984127
    %v494 = vadd.f32 %v493, 0.0013888889
    %v495 = vmul.f32 %v211, 0.0001984127
    %v496 = vmul.f32 %v234, 0.0001984127
    %v497 = vmul.f32 %v257, 0.0001984127
    %v498 = vmul.f32 %v280, 0.0001984127
    %v499 = vadd.f32 %v498, 0.0013888889
    %v500 = vmul.f32 %v303, 0.0001984127
    %v501 = vadd.f32 %v500, 0.0013888889
    %v502 = vmul.f32 %v326, 0.0001984127
    %v503 = vmul.f32 %v349, 0.0001984127
    %v504 = vmul.f32 %v372, 0.0001984127
    %v505 = vmul.f32 %v395, 0.0001984127
    %v506 = vadd.f32 %v505, 0.0013888889
    %v507 = vmul.f32 %v418, 0.0001984127
    %v508 = vmul.f32 %v441, 0.0001984127
    %v509 = vmul.f32 %v464, 0.0001984127
    %v510 = vmul.f32 %v487, 0.0001984127
    %v511 = vadd.f32 %v510, 0.0013888889
    %v512 = vmul.f32 %v489, %v96
    %v513 = vmul.f32 %v490, %v165
    %v514 = vadd.f32 %v512, %v513
    %v515 = vmul.f32 %v491, %v234
    %v516 = vadd.f32 %v514, %v515
    %v517 = vmul.f32 %v489, %v119
    %v518 = vmul.f32 %v490, %v188
    %v519 = vadd.f32 %v517, %v518
    %v520 = vmul.f32 %v491, %v257
    %v521 = vadd.f32 %v519, %v520
    %v522 = vmul.f32 %v489, %v142
    %v523 = vmul.f32 %v490, %v211
    %v524 = vadd.f32 %v522, %v523
    %v525 = vmul.f32 %v491, %v280
    %v526 = vadd.f32 %v524, %v525
    %v527 = vmul.f32 %v492, %v96
    %v528 = vmul.f32 %v494, %v165
    %v529 = vadd.f32 %v527, %v528
    %v530 = vmul.f32 %v495, %v234
    %v531 = vadd.f32 %v529, %v530
    %v532 = vmul.f32 %v492, %v119
    %v533 = vmul.f32 %v494, %v188
    %v534 = vadd.f32 %v532, %v533
    %v535 = vmul.f32 %v495, %v257
    %v536 = vadd.f32 %v534, %v535
    %v537 = vmul.f32 %v492, %v142
    %v538 = vmul.f32 %v494, %v211
    %v539 = vadd.f32 %v537, %v538
    %v540 = vmul.f32 %v495, %v280
    %v541 = vadd.f32 %v539, %v540
    %v542 = vmul.f32 %v496, %v96
    %v543 = vmul.f32 %v497, %v165
    %v544 = vadd.f32 %v542, %v543
    %v545 = vmul.f32 %v499, %v234
    %v546 = vadd.f32 %v544, %v545
    %v547 = vmul.f32 %v496, %v119
    %v548 = vmul.f32 %v497, %v188
    %v549 = vadd.f32 %v547, %v548
    %v550 = vmul.f32 %v499, %v257
    %v551 = vadd.f32 %v549, %v550
    %v552 = vmul.f32 %v496, %v142
    %v553 = vmul.f32 %v497, %v211
    %v554 = vadd.f32 %v552, %v553
    %v555 = vmul.f32 %v499, %v280
    %v556 = vadd.f32 %v554, %v555
    %v557 = vmul.f32 %v501, %v303
    %v558 = vmul.f32 %v502, %v372
    %v559 = vadd.f32 %v557, %v558
    %v560 = vmul.f32 %v503, %v441
    %v561 = vadd.f32 %v559, %v560
    %v562 = vmul.f32 %v501, %v326
    %v563 = vmul.f32 %v502, %v395
    %v564 = vadd.f32 %v562, %v563
    %v565 = vmul.f32 %v503, %v464
    %v566 = vadd.f32 %v564, %v565
    %v567 = vmul.f32 %v501, %v349
    %v568 = vmul.f32 %v502, %v418
    %v569 = vadd.f32 %v567, %v568
    %v570 = vmul.f32 %v503, %v487
    %v571 = vadd.f32 %v569, %v570
    %v572 = vmul.f32 %v504, %v303
    %v573 = vmul.f32 %v506, %v372
    %v574 = vadd.f32 %v572, %v573
    %v575 = vmul.f32 %v507, %v441
    %v576 = vadd.f32 %v574, %v575
    %v577 = vmul.f32 %v504, %v326
    %v578 = vmul.f32 %v506, %v395
    %v579 = vadd.f32 %v577, %v578
    %v580 = vmul.f32 %v507, %v464
    %v581 = vadd.f32 %v579, %v580
    %v582 = vmul.f32 %v504, %v349
    %v583 = vmul.f32 %v506, %v418
    %v584 = vadd.f32 %v582, %v583
    %v585 = vmul.f32 %v507, %v487
    %v586 = vadd.f32 %v584, %v585
    %v587 = vmul.f32 %v508, %v303
    %v588 = vmul.f32 %v509, %v372
    %v589 = vadd.f32 %v587, %v588
    %v590 = vmul.f32 %v511, %v441
    %v591 = vadd.f32 %v589, %v590
    %v592 = vmul.f32 %v508, %v326
    %v593 = vmul.f32 %v509, %v395
    %v594 = vadd.f32 %v592, %v593
    %v595 = vmul.f32 %v511, %v464
    %v596 = vadd.f32 %v594, %v595
    %v597 = vmul.f32 %v508, %v349
    %v598 = vmul.f32 %v509, %v418
    %v599 = vadd.f32 %v597, %v598
    %v600 = vmul.f32 %v511, %v487
    %v601 = vadd.f32 %v599, %v600
    %v602 = vadd.f32 %v516, 0.008333334
    %v603 = vadd.f32 %v536, 0.008333334
    %v604 = vadd.f32 %v556, 0.008333334
    %v605 = vadd.f32 %v561, 0.008333334
    %v606 = vadd.f32 %v581, 0.008333334
    %v607 = vadd.f32 %v601, 0.008333334
    %v608 = vmul.f32 %v602, %v96
    %v609 = vmul.f32 %v521, %v165
    %v610 = vadd.f32 %v608, %v609
    %v611 = vmul.f32 %v526, %v234
    %v612 = vadd.f32 %v610, %v611
    %v613 = vmul.f32 %v602, %v119
    %v614 = vmul.f32 %v521, %v188
    %v615 = vadd.f32 %v613, %v614
    %v616 = vmul.f32 %v526, %v257
    %v617 = vadd.f32 %v615, %v616
    %v618 = vmul.f32 %v602, %v142
    %v619 = vmul.f32 %v521, %v211
    %v620 = vadd.f32 %v618, %v619
    %v621 = vmul.f32 %v526, %v280
    %v622 = vadd.f32 %v620, %v621
    %v623 = vmul.f32 %v531, %v96
    %v624 = vmul.f32 %v603, %v165
    %v625 = vadd.f32 %v623, %v624
    %v626 = vmul.f32 %v541, %v234
    %v627 = vadd.f32 %v625, %v626
    %v628 = vmul.f32 %v531, %v119
    %v629 = vmul.f32 %v603, %v188
    %v630 = vadd.f32 %v628, %v629
    %v631 = vmul.f32 %v541, %v257
    %v632 = vadd.f32 %v630, %v631
    %v633 = vmul.f32 %v531, %v142
    %v634 = vmul.f32 %v603, %v211
    %v635 = vadd.f32 %v633, %v634
    %v636 = vmul.f32 %v541, %v280
    %v637 = vadd.f32 %v635, %v636
    %v638 = vmul.f32 %v546, %v96
    %v639 = vmul.f32 %v551, %v165
    %v640 = vadd.f32 %v638, %v639
    %v641 = vmul.f32 %v604, %v234
    %v642 = vadd.f32 %v640, %v641
    %v643 = vmul.f32 %v546, %v119
    %v644 = vmul.f32 %v551, %v188
    %v645 = vadd.f32 %v643, %v644
    %v646 = vmul.f32 %v604, %v257
    %v647 = vadd.f32 %v645, %v646
    %v648 = vmul.f32 %v546, %v142
    %v649 = vmul.f32 %v551, %v211
    %v650 = vadd.f32 %v648, %v649
    %v651 = vmul.f32 %v604, %v280
    %v652 = vadd.f32 %v650, %v651
    %v653 = vmul.f32 %v605, %v303
    %v654 = vmul.f32 %v566, %v372
    %v655 = vadd.f32 %v653, %v654
    %v656 = vmul.f32 %v571, %v441
    %v657 = vadd.f32 %v655, %v656
    %v658 = vmul.f32 %v605, %v326
    %v659 = vmul.f32 %v566, %v395
    %v660 = vadd.f32 %v658, %v659
    %v661 = vmul.f32 %v571, %v464
    %v662 = vadd.f32 %v660, %v661
    %v663 = vmul.f32 %v605, %v349
    %v664 = vmul.f32 %v566, %v418
    %v665 = vadd.f32 %v663, %v664
    %v666 = vmul.f32 %v571, %v487
    %v667 = vadd.f32 %v665, %v666
    %v668 = vmul.f32 %v576, %v303
    %v669 = vmul.f32 %v606, %v372
    %v670 = vadd.f32 %v668, %v669
    %v671 = vmul.f32 %v586, %v441
    %v672 = vadd.f32 %v670, %v671
    %v673 = vmul.f32 %v576, %v326
    %v674 = vmul.f32 %v606, %v395
    %v675 = vadd.f32 %v673, %v674
    %v676 = vmul.f32 %v586, %v464
    %v677 = vadd.f32 %v675, %v676
    %v678 = vmul.f32 %v576, %v349
    %v679 = vmul.f32 %v606, %v418
    %v680 = vadd.f32 %v678, %v679
    %v681 = vmul.f32 %v586, %v487
    %v682 = vadd.f32 %v680, %v681
    %v683 = vmul.f32 %v591, %v303
    %v684 = vmul.f32 %v596, %v372
    %v685 = vadd.f32 %v683, %v684
    %v686 = vmul.f32 %v607, %v441
    %v687 = vadd.f32 %v685, %v686
    %v688 = vmul.f32 %v591, %v326
    %v689 = vmul.f32 %v596, %v395
    %v690 = vadd.f32 %v688, %v689
    %v691 = vmul.f32 %v607, %v464
    %v692 = vadd.f32 %v690, %v691
    %v693 = vmul.f32 %v591, %v349
    %v694 = vmul.f32 %v596, %v418
    %v695 = vadd.f32 %v693, %v694
    %v696 = vmul.f32 %v607, %v487
    %v697 = vadd.f32 %v695, %v696
    %v698 = vadd.f32 %v612, 0.041666668
    %v699 = vadd.f32 %v632, 0.041666668
    %v700 = vadd.f32 %v652, 0.041666668
    %v701 = vadd.f32 %v657, 0.041666668
    %v702 = vadd.f32 %v677, 0.041666668
    %v703 = vadd.f32 %v697, 0.041666668
    %v704 = vmul.f32 %v698, %v96
    %v705 = vmul.f32 %v617, %v165
    %v706 = vadd.f32 %v704, %v705
    %v707 = vmul.f32 %v622, %v234
    %v708 = vadd.f32 %v706, %v707
    %v709 = vmul.f32 %v698, %v119
    %v710 = vmul.f32 %v617, %v188
    %v711 = vadd.f32 %v709, %v710
    %v712 = vmul.f32 %v622, %v257
    %v713 = vadd.f32 %v711, %v712
    %v714 = vmul.f32 %v698, %v142
    %v715 = vmul.f32 %v617, %v211
    %v716 = vadd.f32 %v714, %v715
    %v717 = vmul.f32 %v622, %v280
    %v718 = vadd.f32 %v716, %v717
    %v719 = vmul.f32 %v627, %v96
    %v720 = vmul.f32 %v699, %v165
    %v721 = vadd.f32 %v719, %v720
    %v722 = vmul.f32 %v637, %v234
    %v723 = vadd.f32 %v721, %v722
    %v724 = vmul.f32 %v627, %v119
    %v725 = vmul.f32 %v699, %v188
    %v726 = vadd.f32 %v724, %v725
    %v727 = vmul.f32 %v637, %v257
    %v728 = vadd.f32 %v726, %v727
    %v729 = vmul.f32 %v627, %v142
    %v730 = vmul.f32 %v699, %v211
    %v731 = vadd.f32 %v729, %v730
    %v732 = vmul.f32 %v637, %v280
    %v733 = vadd.f32 %v731, %v732
    %v734 = vmul.f32 %v642, %v96
    %v735 = vmul.f32 %v647, %v165
    %v736 = vadd.f32 %v734, %v735
    %v737 = vmul.f32 %v700, %v234
    %v738 = vadd.f32 %v736, %v737
    %v739 = vmul.f32 %v642, %v119
    %v740 = vmul.f32 %v647, %v188
    %v741 = vadd.f32 %v739, %v740
    %v742 = vmul.f32 %v700, %v257
    %v743 = vadd.f32 %v741, %v742
    %v744 = vmul.f32 %v642, %v142
    %v745 = vmul.f32 %v647, %v211
    %v746 = vadd.f32 %v744, %v745
    %v747 = vmul.f32 %v700, %v280
    %v748 = vadd.f32 %v746, %v747
    %v749 = vmul.f32 %v701, %v303
    %v750 = vmul.f32 %v662, %v372
    %v751 = vadd.f32 %v749, %v750
    %v752 = vmul.f32 %v667, %v441
    %v753 = vadd.f32 %v751, %v752
    %v754 = vmul.f32 %v701, %v326
    %v755 = vmul.f32 %v662, %v395
    %v756 = vadd.f32 %v754, %v755
    %v757 = vmul.f32 %v667, %v464
    %v758 = vadd.f32 %v756, %v757
    %v759 = vmul.f32 %v701, %v349
    %v760 = vmul.f32 %v662, %v418
    %v761 = vadd.f32 %v759, %v760
    %v762 = vmul.f32 %v667, %v487
    %v763 = vadd.f32 %v761, %v762
    %v764 = vmul.f32 %v672, %v303
    %v765 = vmul.f32 %v702, %v372
    %v766 = vadd.f32 %v764, %v765
    %v767 = vmul.f32 %v682, %v441
    %v768 = vadd.f32 %v766, %v767
    %v769 = vmul.f32 %v672, %v326
    %v770 = vmul.f32 %v702, %v395
    %v771 = vadd.f32 %v769, %v770
    %v772 = vmul.f32 %v682, %v464
    %v773 = vadd.f32 %v771, %v772
    %v774 = vmul.f32 %v672, %v349
    %v775 = vmul.f32 %v702, %v418
    %v776 = vadd.f32 %v774, %v775
    %v777 = vmul.f32 %v682, %v487
    %v778 = vadd.f32 %v776, %v777
    %v779 = vmul.f32 %v687, %v303
    %v780 = vmul.f32 %v692, %v372
    %v781 = vadd.f32 %v779, %v780
    %v782 = vmul.f32 %v703, %v441
    %v783 = vadd.f32 %v781, %v782
    %v784 = vmul.f32 %v687, %v326
    %v785 = vmul.f32 %v692, %v395
    %v786 = vadd.f32 %v784, %v785
    %v787 = vmul.f32 %v703, %v464
    %v788 = vadd.f32 %v786, %v787
    %v789 = vmul.f32 %v687, %v349
    %v790 = vmul.f32 %v692, %v418
    %v791 = vadd.f32 %v789, %v790
    %v792 = vmul.f32 %v703, %v487
    %v793 = vadd.f32 %v791, %v792
    %v794 = vadd.f32 %v708, 0.16666667
    %v795 = vadd.f32 %v728, 0.16666667
    %v796 = vadd.f32 %v748, 0.16666667
    %v797 = vadd.f32 %v753, 0.16666667
    %v798 = vadd.f32 %v773, 0.16666667
    %v799 = vadd.f32 %v793, 0.16666667
    %v800 = vmul.f32 %v794, %v96
    %v801 = vmul.f32 %v713, %v165
    %v802 = vadd.f32 %v800, %v801
    %v803 = vmul.f32 %v718, %v234
    %v804 = vadd.f32 %v802, %v803
    %v805 = vmul.f32 %v794, %v119
    %v806 = vmul.f32 %v713, %v188
    %v807 = vadd.f32 %v805, %v806
    %v808 = vmul.f32 %v718, %v257
    %v809 = vadd.f32 %v807, %v808
    %v810 = vmul.f32 %v794, %v142
    %v811 = vmul.f32 %v713, %v211
    %v812 = vadd.f32 %v810, %v811
    %v813 = vmul.f32 %v718, %v280
    %v814 = vadd.f32 %v812, %v813
    %v815 = vmul.f32 %v723, %v96
    %v816 = vmul.f32 %v795, %v165
    %v817 = vadd.f32 %v815, %v816
    %v818 = vmul.f32 %v733, %v234
    %v819 = vadd.f32 %v817, %v818
    %v820 = vmul.f32 %v723, %v119
    %v821 = vmul.f32 %v795, %v188
    %v822 = vadd.f32 %v820, %v821
    %v823 = vmul.f32 %v733, %v257
    %v824 = vadd.f32 %v822, %v823
    %v825 = vmul.f32 %v723, %v142
    %v826 = vmul.f32 %v795, %v211
    %v827 = vadd.f32 %v825, %v826
    %v828 = vmul.f32 %v733, %v280
    %v829 = vadd.f32 %v827, %v828
    %v830 = vmul.f32 %v738, %v96
    %v831 = vmul.f32 %v743, %v165
    %v832 = vadd.f32 %v830, %v831
    %v833 = vmul.f32 %v796, %v234
    %v834 = vadd.f32 %v832, %v833
    %v835 = vmul.f32 %v738, %v119
    %v836 = vmul.f32 %v743, %v188
    %v837 = vadd.f32 %v835, %v836
    %v838 = vmul.f32 %v796, %v257
    %v839 = vadd.f32 %v837, %v838
    %v840 = vmul.f32 %v738, %v142
    %v841 = vmul.f32 %v743, %v211
    %v842 = vadd.f32 %v840, %v841
    %v843 = vmul.f32 %v796, %v280
    %v844 = vadd.f32 %v842, %v843
    %v845 = vmul.f32 %v797, %v303
    %v846 = vmul.f32 %v758, %v372
    %v847 = vadd.f32 %v845, %v846
    %v848 = vmul.f32 %v763, %v441
    %v849 = vadd.f32 %v847, %v848
    %v850 = vmul.f32 %v797, %v326
    %v851 = vmul.f32 %v758, %v395
    %v852 = vadd.f32 %v850, %v851
    %v853 = vmul.f32 %v763, %v464
    %v854 = vadd.f32 %v852, %v853
    %v855 = vmul.f32 %v797, %v349
    %v856 = vmul.f32 %v758, %v418
    %v857 = vadd.f32 %v855, %v856
    %v858 = vmul.f32 %v763, %v487
    %v859 = vadd.f32 %v857, %v858
    %v860 = vmul.f32 %v768, %v303
    %v861 = vmul.f32 %v798, %v372
    %v862 = vadd.f32 %v860, %v861
    %v863 = vmul.f32 %v778, %v441
    %v864 = vadd.f32 %v862, %v863
    %v865 = vmul.f32 %v768, %v326
    %v866 = vmul.f32 %v798, %v395
    %v867 = vadd.f32 %v865, %v866
    %v868 = vmul.f32 %v778, %v464
    %v869 = vadd.f32 %v867, %v868
    %v870 = vmul.f32 %v768, %v349
    %v871 = vmul.f32 %v798, %v418
    %v872 = vadd.f32 %v870, %v871
    %v873 = vmul.f32 %v778, %v487
    %v874 = vadd.f32 %v872, %v873
    %v875 = vmul.f32 %v783, %v303
    %v876 = vmul.f32 %v788, %v372
    %v877 = vadd.f32 %v875, %v876
    %v878 = vmul.f32 %v799, %v441
    %v879 = vadd.f32 %v877, %v878
    %v880 = vmul.f32 %v783, %v326
    %v881 = vmul.f32 %v788, %v395
    %v882 = vadd.f32 %v880, %v881
    %v883 = vmul.f32 %v799, %v464
    %v884 = vadd.f32 %v882, %v883
    %v885 = vmul.f32 %v783, %v349
    %v886 = vmul.f32 %v788, %v418
    %v887 = vadd.f32 %v885, %v886
    %v888 = vmul.f32 %v799, %v487
    %v889 = vadd.f32 %v887, %v888
    %v890 = vadd.f32 %v804, 0.5
    %v891 = vadd.f32 %v824, 0.5
    %v892 = vadd.f32 %v844, 0.5
    %v893 = vadd.f32 %v849, 0.5
    %v894 = vadd.f32 %v869, 0.5
    %v895 = vadd.f32 %v889, 0.5
    %v896 = vmul.f32 %v890, %v96
    %v897 = vmul.f32 %v809, %v165
    %v898 = vadd.f32 %v896, %v897
    %v899 = vmul.f32 %v814, %v234
    %v900 = vadd.f32 %v898, %v899
    %v901 = vmul.f32 %v890, %v119
    %v902 = vmul.f32 %v809, %v188
    %v903 = vadd.f32 %v901, %v902
    %v904 = vmul.f32 %v814, %v257
    %v905 = vadd.f32 %v903, %v904
    %v906 = vmul.f32 %v890, %v142
    %v907 = vmul.f32 %v809, %v211
    %v908 = vadd.f32 %v906, %v907
    %v909 = vmul.f32 %v814, %v280
    %v910 = vadd.f32 %v908, %v909
    %v911 = vmul.f32 %v819, %v96
    %v912 = vmul.f32 %v891, %v165
    %v913 = vadd.f32 %v911, %v912
    %v914 = vmul.f32 %v829, %v234
    %v915 = vadd.f32 %v913, %v914
    %v916 = vmul.f32 %v819, %v119
    %v917 = vmul.f32 %v891, %v188
    %v918 = vadd.f32 %v916, %v917
    %v919 = vmul.f32 %v829, %v257
    %v920 = vadd.f32 %v918, %v919
    %v921 = vmul.f32 %v819, %v142
    %v922 = vmul.f32 %v891, %v211
    %v923 = vadd.f32 %v921, %v922
    %v924 = vmul.f32 %v829, %v280
    %v925 = vadd.f32 %v923, %v924
    %v926 = vmul.f32 %v834, %v96
    %v927 = vmul.f32 %v839, %v165
    %v928 = vadd.f32 %v926, %v927
    %v929 = vmul.f32 %v892, %v234
    %v930 = vadd.f32 %v928, %v929
    %v931 = vmul.f32 %v834, %v119
    %v932 = vmul.f32 %v839, %v188
    %v933 = vadd.f32 %v931, %v932
    %v934 = vmul.f32 %v892, %v257
    %v935 = vadd.f32 %v933, %v934
    %v936 = vmul.f32 %v834, %v142
    %v937 = vmul.f32 %v839, %v211
    %v938 = vadd.f32 %v936, %v937
    %v939 = vmul.f32 %v892, %v280
    %v940 = vadd.f32 %v938, %v939
    %v941 = vmul.f32 %v893, %v303
    %v942 = vmul.f32 %v854, %v372
    %v943 = vadd.f32 %v941, %v942
    %v944 = vmul.f32 %v859, %v441
    %v945 = vadd.f32 %v943, %v944
    %v946 = vmul.f32 %v893, %v326
    %v947 = vmul.f32 %v854, %v395
    %v948 = vadd.f32 %v946, %v947
    %v949 = vmul.f32 %v859, %v464
    %v950 = vadd.f32 %v948, %v949
    %v951 = vmul.f32 %v893, %v349
    %v952 = vmul.f32 %v854, %v418
    %v953 = vadd.f32 %v951, %v952
    %v954 = vmul.f32 %v859, %v487
    %v955 = vadd.f32 %v953, %v954
    %v956 = vmul.f32 %v864, %v303
    %v957 = vmul.f32 %v894, %v372
    %v958 = vadd.f32 %v956, %v957
    %v959 = vmul.f32 %v874, %v441
    %v960 = vadd.f32 %v958, %v959
    %v961 = vmul.f32 %v864, %v326
    %v962 = vmul.f32 %v894, %v395
    %v963 = vadd.f32 %v961, %v962
    %v964 = vmul.f32 %v874, %v464
    %v965 = vadd.f32 %v963, %v964
    %v966 = vmul.f32 %v864, %v349
    %v967 = vmul.f32 %v894, %v418
    %v968 = vadd.f32 %v966, %v967
    %v969 = vmul.f32 %v874, %v487
    %v970 = vadd.f32 %v968, %v969
    %v971 = vmul.f32 %v879, %v303
    %v972 = vmul.f32 %v884, %v372
    %v973 = vadd.f32 %v971, %v972
    %v974 = vmul.f32 %v895, %v441
    %v975 = vadd.f32 %v973, %v974
    %v976 = vmul.f32 %v879, %v326
    %v977 = vmul.f32 %v884, %v395
    %v978 = vadd.f32 %v976, %v977
    %v979 = vmul.f32 %v895, %v464
    %v980 = vadd.f32 %v978, %v979
    %v981 = vmul.f32 %v879, %v349
    %v982 = vmul.f32 %v884, %v418
    %v983 = vadd.f32 %v981, %v982
    %v984 = vmul.f32 %v895, %v487
    %v985 = vadd.f32 %v983, %v984
    %v986 = vadd.f32 %v900, 1.0
    %v987 = vadd.f32 %v920, 1.0
    %v988 = vadd.f32 %v940, 1.0
    %v989 = vadd.f32 %v945, 1.0
    %v990 = vadd.f32 %v965, 1.0
    %v991 = vadd.f32 %v985, 1.0
    %v992 = vmul.f32 %v986, %v96
    %v993 = vmul.f32 %v905, %v165
    %v994 = vadd.f32 %v992, %v993
    %v995 = vmul.f32 %v910, %v234
    %v996 = vadd.f32 %v994, %v995
    %v997 = vmul.f32 %v986, %v119
    %v998 = vmul.f32 %v905, %v188
    %v999 = vadd.f32 %v997, %v998
    %v1000 = vmul.f32 %v910, %v257
    %v1001 = vadd.f32 %v999, %v1000
    %v1002 = vmul.f32 %v986, %v142
    %v1003 = vmul.f32 %v905, %v211
    %v1004 = vadd.f32 %v1002, %v1003
    %v1005 = vmul.f32 %v910, %v280
    %v1006 = vadd.f32 %v1004, %v1005
    %v1007 = vmul.f32 %v915, %v96
    %v1008 = vmul.f32 %v987, %v165
    %v1009 = vadd.f32 %v1007, %v1008
    %v1010 = vmul.f32 %v925, %v234
    %v1011 = vadd.f32 %v1009, %v1010
    %v1012 = vmul.f32 %v915, %v119
    %v1013 = vmul.f32 %v987, %v188
    %v1014 = vadd.f32 %v1012, %v1013
    %v1015 = vmul.f32 %v925, %v257
    %v1016 = vadd.f32 %v1014, %v1015
    %v1017 = vmul.f32 %v915, %v142
    %v1018 = vmul.f32 %v987, %v211
    %v1019 = vadd.f32 %v1017, %v1018
    %v1020 = vmul.f32 %v925, %v280
    %v1021 = vadd.f32 %v1019, %v1020
    %v1022 = vmul.f32 %v930, %v96
    %v1023 = vmul.f32 %v935, %v165
    %v1024 = vadd.f32 %v1022, %v1023
    %v1025 = vmul.f32 %v988, %v234
    %v1026 = vadd.f32 %v1024, %v1025
    %v1027 = vmul.f32 %v930, %v119
    %v1028 = vmul.f32 %v935, %v188
    %v1029 = vadd.f32 %v1027, %v1028
    %v1030 = vmul.f32 %v988, %v257
    %v1031 = vadd.f32 %v1029, %v1030
    %v1032 = vmul.f32 %v930, %v142
    %v1033 = vmul.f32 %v935, %v211
    %v1034 = vadd.f32 %v1032, %v1033
    %v1035 = vmul.f32 %v988, %v280
    %v1036 = vadd.f32 %v1034, %v1035
    %v1037 = vmul.f32 %v989, %v303
    %v1038 = vmul.f32 %v950, %v372
    %v1039 = vadd.f32 %v1037, %v1038
    %v1040 = vmul.f32 %v955, %v441
    %v1041 = vadd.f32 %v1039, %v1040
    %v1042 = vmul.f32 %v989, %v326
    %v1043 = vmul.f32 %v950, %v395
    %v1044 = vadd.f32 %v1042, %v1043
    %v1045 = vmul.f32 %v955, %v464
    %v1046 = vadd.f32 %v1044, %v1045
    %v1047 = vmul.f32 %v989, %v349
    %v1048 = vmul.f32 %v950, %v418
    %v1049 = vadd.f32 %v1047, %v1048
    %v1050 = vmul.f32 %v955, %v487
    %v1051 = vadd.f32 %v1049, %v1050
    %v1052 = vmul.f32 %v960, %v303
    %v1053 = vmul.f32 %v990, %v372
    %v1054 = vadd.f32 %v1052, %v1053
    %v1055 = vmul.f32 %v970, %v441
    %v1056 = vadd.f32 %v1054, %v1055
    %v1057 = vmul.f32 %v960, %v326
    %v1058 = vmul.f32 %v990, %v395
    %v1059 = vadd.f32 %v1057, %v1058
    %v1060 = vmul.f32 %v970, %v464
    %v1061 = vadd.f32 %v1059, %v1060
    %v1062 = vmul.f32 %v960, %v349
    %v1063 = vmul.f32 %v990, %v418
    %v1064 = vadd.f32 %v1062, %v1063
    %v1065 = vmul.f32 %v970, %v487
    %v1066 = vadd.f32 %v1064, %v1065
    %v1067 = vmul.f32 %v975, %v303
    %v1068 = vmul.f32 %v980, %v372
    %v1069 = vadd.f32 %v1067, %v1068
    %v1070 = vmul.f32 %v991, %v441
    %v1071 = vadd.f32 %v1069, %v1070
    %v1072 = vmul.f32 %v975, %v326
    %v1073 = vmul.f32 %v980, %v395
    %v1074 = vadd.f32 %v1072, %v1073
    %v1075 = vmul.f32 %v991, %v464
    %v1076 = vadd.f32 %v1074, %v1075
    %v1077 = vmul.f32 %v975, %v349
    %v1078 = vmul.f32 %v980, %v418
    %v1079 = vadd.f32 %v1077, %v1078
    %v1080 = vmul.f32 %v991, %v487
    %v1081 = vadd.f32 %v1079, %v1080
    %v1082 = vadd.f32 %v996, 1.0
    %v1083 = vadd.f32 %v1016, 1.0
    %v1084 = vadd.f32 %v1036, 1.0
    %v1085 = vadd.f32 %v1041, 1.0
    %v1086 = vadd.f32 %v1061, 1.0
    %v1087 = vadd.f32 %v1081, 1.0
    %v1088 = vmul.f32 %v1082, %v1082
    %v1089 = vmul.f32 %v1001, %v1011
    %v1090 = vadd.f32 %v1088, %v1089
    %v1091 = vmul.f32 %v1006, %v1026
    %v1092 = vadd.f32 %v1090, %v1091
    %v1093 = vmul.f32 %v1082, %v1001
    %v1094 = vmul.f32 %v1001, %v1083
    %v1095 = vadd.f32 %v1093, %v1094
    %v1096 = vmul.f32 %v1006, %v1031
    %v1097 = vadd.f32 %v1095, %v1096
    %v1098 = vmul.f32 %v1082, %v1006
    %v1099 = vmul.f32 %v1001, %v1021
    %v1100 = vadd.f32 %v1098, %v1099
    %v1101 = vmul.f32 %v1006, %v1084
    %v1102 = vadd.f32 %v1100, %v1101
    %v1103 = vmul.f32 %v1011, %v1082
    %v1104 = vmul.f32 %v1083, %v1011
    %v1105 = vadd.f32 %v1103, %v1104
    %v1106 = vmul.f32 %v1021, %v1026
    %v1107 = vadd.f32 %v1105, %v1106
    %v1108 = vmul.f32 %v1083, %v1083
    %v1109 = vadd.f32 %v1089, %v1108
    %v1110 = vmul.f32 %v1021, %v1031
    %v1111 = vadd.f32 %v1109, %v1110
    %v1112 = vmul.f32 %v1011, %v1006
    %v1113 = vmul.f32 %v1083, %v1021
    %v1114 = vadd.f32 %v1112, %v1113
    %v1115 = vmul.f32 %v1021, %v1084
    %v1116 = vadd.f32 %v1114, %v1115
    %v1117 = vmul.f32 %v1026, %v1082
    %v1118 = vmul.f32 %v1031, %v1011
    %v1119 = vadd.f32 %v1117, %v1118
    %v1120 = vmul.f32 %v1084, %v1026
    %v1121 = vadd.f32 %v1119, %v1120
    %v1122 = vmul.f32 %v1026, %v1001
    %v1123 = vmul.f32 %v1031, %v1083
    %v1124 = vadd.f32 %v1122, %v1123
    %v1125 = vmul.f32 %v1084, %v1031
    %v1126 = vadd.f32 %v1124, %v1125
    %v1127 = vadd.f32 %v1091, %v1110
    %v1128 = vmul.f32 %v1084, %v1084
    %v1129 = vadd.f32 %v1127, %v1128
    %v1130 = vmul.f32 %v1085, %v1085
    %v1131 = vmul.f32 %v1046, %v1056
    %v1132 = vadd.f32 %v1130, %v1131
    %v1133 = vmul.f32 %v1051, %v1071
    %v1134 = vadd.f32 %v1132, %v1133
    %v1135 = vmul.f32 %v1085, %v1046
    %v1136 = vmul.f32 %v1046, %v1086
    %v1137 = vadd.f32 %v1135, %v1136
    %v1138 = vmul.f32 %v1051, %v1076
    %v1139 = vadd.f32 %v1137, %v1138
    %v1140 = vmul.f32 %v1085, %v1051
    %v1141 = vmul.f32 %v1046, %v1066
    %v1142 = vadd.f32 %v1140, %v1141
    %v1143 = vmul.f32 %v1051, %v1087
    %v1144 = vadd.f32 %v1142, %v1143
    %v1145 = vmul.f32 %v1056, %v1085
    %v1146 = vmul.f32 %v1086, %v1056
    %v1147 = vadd.f32 %v1145, %v1146
    %v1148 = vmul.f32 %v1066, %v1071
    %v1149 = vadd.f32 %v1147, %v1148
    %v1150 = vmul.f32 %v1086, %v1086
    %v1151 = vadd.f32 %v1131, %v1150
    %v1152 = vmul.f32 %v1066, %v1076
    %v1153 = vadd.f32 %v1151, %v1152
    %v1154 = vmul.f32 %v1056, %v1051
    %v1155 = vmul.f32 %v1086, %v1066
    %v1156 = vadd.f32 %v1154, %v1155
    %v1157 = vmul.f32 %v1066, %v1087
    %v1158 = vadd.f32 %v1156, %v1157
    %v1159 = vmul.f32 %v1071, %v1085
    %v1160 = vmul.f32 %v1076, %v1056
    %v1161 = vadd.f32 %v1159, %v1160
    %v1162 = vmul.f32 %v1087, %v1071
    %v1163 = vadd.f32 %v1161, %v1162
    %v1164 = vmul.f32 %v1071, %v1046
    %v1165 = vmul.f32 %v1076, %v1086
    %v1166 = vadd.f32 %v1164, %v1165
    %v1167 = vmul.f32 %v1087, %v1076
    %v1168 = vadd.f32 %v1166, %v1167
    %v1169 = vadd.f32 %v1133, %v1152
    %v1170 = vmul.f32 %v1087, %v1087
    %v1171 = vadd.f32 %v1169, %v1170
    %v1172 = vmul.f32 %v1092, %v1092
    %v1173 = vmul.f32 %v1097, %v1107
    %v1174 = vadd.f32 %v1172, %v1173
    %v1175 = vmul.f32 %v1102, %v1121
    %v1176 = vadd.f32 %v1174, %v1175
    %v1177 = vmul.f32 %v1092, %v1097
    %v1178 = vmul.f32 %v1097, %v1111
    %v1179 = vadd.f32 %v1177, %v1178
    %v1180 = vmul.f32 %v1102, %v1126
    %v1181 = vadd.f32 %v1179, %v1180
    %v1182 = vmul.f32 %v1092, %v1102
    %v1183 = vmul.f32 %v1097, %v1116
    %v1184 = vadd.f32 %v1182, %v1183
    %v1185 = vmul.f32 %v1102, %v1129
    %v1186 = vadd.f32 %v1184, %v1185
    %v1187 = vmul.f32 %v1107, %v1092
    %v1188 = vmul.f32 %v1111, %v1107
    %v1189 = vadd.f32 %v1187, %v1188
    %v1190 = vmul.f32 %v1116, %v1121
    %v1191 = vadd.f32 %v1189, %v1190
    %v1192 = vmul.f32 %v1111, %v1111
    %v1193 = vadd.f32 %v1173, %v1192
    %v1194 = vmul.f32 %v1116, %v1126
    %v1195 = vadd.f32 %v1193, %v1194
    %v1196 = vmul.f32 %v1107, %v1102
    %v1197 = vmul.f32 %v1111, %v1116
    %v1198 = vadd.f32 %v1196, %v1197
    %v1199 = vmul.f32 %v1116, %v1129
    %v1200 = vadd.f32 %v1198, %v1199
    %v1201 = vmul.f32 %v1121, %v1092
    %v1202 = vmul.f32 %v1126, %v1107
    %v1203 = vadd.f32 %v1201, %v1202
    %v1204 = vmul.f32 %v1129, %v1121
    %v1205 = vadd.f32 %v1203, %v1204
    %v1206 = vmul.f32 %v1121, %v1097
    %v1207 = vmul.f32 %v1126, %v1111
    %v1208 = vadd.f32 %v1206, %v1207
    %v1209 = vmul.f32 %v1129, %v1126
    %v1210 = vadd.f32 %v1208, %v1209
    %v1211 = vadd.f32 %v1175, %v1194
    %v1212 = vmul.f32 %v1129, %v1129
    %v1213 = vadd.f32 %v1211, %v1212
    %v1214 = vmul.f32 %v1134, %v1134
    %v1215 = vmul.f32 %v1139, %v1149
    %v1216 = vadd.f32 %v1214, %v1215
    %v1217 = vmul.f32 %v1144, %v1163
    %v1218 = vadd.f32 %v1216, %v1217
    %v1219 = vmul.f32 %v1134, %v1139
    %v1220 = vmul.f32 %v1139, %v1153
    %v1221 = vadd.f32 %v1219, %v1220
    %v1222 = vmul.f32 %v1144, %v1168
    %v1223 = vadd.f32 %v1221, %v1222
    %v1224 = vmul.f32 %v1134, %v1144
    %v1225 = vmul.f32 %v1139, %v1158
    %v1226 = vadd.f32 %v1224, %v1225
    %v1227 = vmul.f32 %v1144, %v1171
    %v1228 = vadd.f32 %v1226, %v1227
    %v1229 = vmul.f32 %v1149, %v1134
    %v1230 = vmul.f32 %v1153, %v1149
    %v1231 = vadd.f32 %v1229, %v1230
    %v1232 = vmul.f32 %v1158, %v1163
    %v1233 = vadd.f32 %v1231, %v1232
    %v1234 = vmul.f32 %v1153, %v1153
    %v1235 = vadd.f32 %v1215, %v1234
    %v1236 = vmul.f32 %v1158, %v1168
    %v1237 = vadd.f32 %v1235, %v1236
    %v1238 = vmul.f32 %v1149, %v1144
    %v1239 = vmul.f32 %v1153, %v1158
    %v1240 = vadd.f32 %v1238, %v1239
    %v1241 = vmul.f32 %v1158, %v1171
    %v1242 = vadd.f32 %v1240, %v1241
    %v1243 = vmul.f32 %v1163, %v1134
    %v1244 = vmul.f32 %v1168, %v1149
    %v1245 = vadd.f32 %v1243, %v1244
    %v1246 = vmul.f32 %v1171, %v1163
    %v1247 = vadd.f32 %v1245, %v1246
    %v1248 = vmul.f32 %v1163, %v1139
    %v1249 = vmul.f32 %v1168, %v1153
    %v1250 = vadd.f32 %v1248, %v1249
    %v1251 = vmul.f32 %v1171, %v1168
    %v1252 = vadd.f32 %v1250, %v1251
    %v1253 = vadd.f32 %v1217, %v1236
    %v1254 = vmul.f32 %v1171, %v1171
    %v1255 = vadd.f32 %v1253, %v1254
    %v1256 = vmul.f32 %v1176, %v1176
    %v1257 = vmul.f32 %v1181, %v1191
    %v1258 = vadd.f32 %v1256, %v1257
    %v1259 = vmul.f32 %v1186, %v1205
    %v1260 = vadd.f32 %v1258, %v1259
    %v1261 = vmul.f32 %v1176, %v1181
    %v1262 = vmul.f32 %v1181, %v1195
    %v1263 = vadd.f32 %v1261, %v1262
    %v1264 = vmul.f32 %v1186, %v1210
    %v1265 = vadd.f32 %v1263, %v1264
    %v1266 = vmul.f32 %v1176, %v1186
    %v1267 = vmul.f32 %v1181, %v1200
    %v1268 = vadd.f32 %v1266, %v1267
    %v1269 = vmul.f32 %v1186, %v1213
    %v1270 = vadd.f32 %v1268, %v1269
    %v1271 = vmul.f32 %v1191, %v1176
    %v1272 = vmul.f32 %v1195, %v1191
    %v1273 = vadd.f32 %v1271, %v1272
    %v1274 = vmul.f32 %v1200, %v1205
    %v1275 = vadd.f32 %v1273, %v1274
    %v1276 = vmul.f32 %v1195, %v1195
    %v1277 = vadd.f32 %v1257, %v1276
    %v1278 = vmul.f32 %v1200, %v1210
    %v1279 = vadd.f32 %v1277, %v1278
    %v1280 = vmul.f32 %v1191, %v1186
    %v1281 = vmul.f32 %v1195, %v1200
    %v1282 = vadd.f32 %v1280, %v1281
    %v1283 = vmul.f32 %v1200, %v1213
    %v1284 = vadd.f32 %v1282, %v1283
    %v1285 = vmul.f32 %v1205, %v1176
    %v1286 = vmul.f32 %v1210, %v1191
    %v1287 = vadd.f32 %v1285, %v1286
    %v1288 = vmul.f32 %v1213, %v1205
    %v1289 = vadd.f32 %v1287, %v1288
    %v1290 = vmul.f32 %v1205, %v1181
    %v1291 = vmul.f32 %v1210, %v1195
    %v1292 = vadd.f32 %v1290, %v1291
    %v1293 = vmul.f32 %v1213, %v1210
    %v1294 = vadd.f32 %v1292, %v1293
    %v1295 = vadd.f32 %v1259, %v1278
    %v1296 = vmul.f32 %v1213, %v1213
    %v1297 = vadd.f32 %v1295, %v1296
    %v1298 = vmul.f32 %v1218, %v1218
    %v1299 = vmul.f32 %v1223, %v1233
    %v1300 = vadd.f32 %v1298, %v1299
    %v1301 = vmul.f32 %v1228, %v1247
    %v1302 = vadd.f32 %v1300, %v1301
    %v1303 = vmul.f32 %v1218, %v1223
    %v1304 = vmul.f32 %v1223, %v1237
    %v1305 = vadd.f32 %v1303, %v1304
    %v1306 = vmul.f32 %v1228, %v1252
    %v1307 = vadd.f32 %v1305, %v1306
    %v1308 = vmul.f32 %v1218, %v1228
    %v1309 = vmul.f32 %v1223, %v1242
    %v1310 = vadd.f32 %v1308, %v1309
    %v1311 = vmul.f32 %v1228, %v1255
    %v1312 = vadd.f32 %v1310, %v1311
    %v1313 = vmul.f32 %v1233, %v1218
    %v1314 = vmul.f32 %v1237, %v1233
    %v1315 = vadd.f32 %v1313, %v1314
    %v1316 = vmul.f32 %v1242, %v1247
    %v1317 = vadd.f32 %v1315, %v1316
    %v1318 = vmul.f32 %v1237, %v1237
    %v1319 = vadd.f32 %v1299, %v1318
    %v1320 = vmul.f32 %v1242, %v1252
    %v1321 = vadd.f32 %v1319, %v1320
    %v1322 = vmul.f32 %v1233, %v1228
    %v1323 = vmul.f32 %v1237, %v1242
    %v1324 = vadd.f32 %v1322, %v1323
    %v1325 = vmul.f32 %v1242, %v1255
    %v1326 = vadd.f32 %v1324, %v1325
    %v1327 = vmul.f32 %v1247, %v1218
    %v1328 = vmul.f32 %v1252, %v1233
    %v1329 = vadd.f32 %v1327, %v1328
    %v1330 = vmul.f32 %v1255, %v1247
    %v1331 = vadd.f32 %v1329, %v1330
    %v1332 = vmul.f32 %v1247, %v1223
    %v1333 = vmul.f32 %v1252, %v1237
    %v1334 = vadd.f32 %v1332, %v1333
    %v1335 = vmul.f32 %v1255, %v1252
    %v1336 = vadd.f32 %v1334, %v1335
    %v1337 = vadd.f32 %v1301, %v1320
    %v1338 = vmul.f32 %v1255, %v1255
    %v1339 = vadd.f32 %v1337, %v1338
    %v1340 = vld [vmem:[#allocation7] sm:$0xff]
    %s1341 = scalar_lea.vmem [#allocation7], %s59
    %v1342 = vld [vmem:[%s1341] sm:$0xff]
    %s1343 = scalar_lea.vmem [#allocation7], %s62
    %v1344 = vld [vmem:[%s1343] sm:$0xff]
    %s1345 = scalar_lea.vmem [#allocation7], %s65
    %v1346 = vld [vmem:[%s1345] sm:$0xff]
    %s1347 = scalar_lea.vmem [#allocation7], %s68
    %v1348 = vld [vmem:[%s1347] sm:$0xff]
    %s1349 = scalar_lea.vmem [#allocation7], %s71
    %v1350 = vld [vmem:[%s1349] sm:$0xff]
    %v1351 = vmul.f32 %v1260, %v1340
    %v1352 = vmul.f32 %v1265, %v1342
    %v1353 = vadd.f32 %v1351, %v1352
    %v1354 = vmul.f32 %v1270, %v1344
    %v1355 = vadd.f32 %v1353, %v1354
    %v1356 = vmul.f32 %v1275, %v1340
    %v1357 = vmul.f32 %v1279, %v1342
    %v1358 = vadd.f32 %v1356, %v1357
    %v1359 = vmul.f32 %v1284, %v1344
    %v1360 = vadd.f32 %v1358, %v1359
    %v1361 = vmul.f32 %v1289, %v1340
    %v1362 = vmul.f32 %v1294, %v1342
    %v1363 = vadd.f32 %v1361, %v1362
    %v1364 = vmul.f32 %v1297, %v1344
    %v1365 = vadd.f32 %v1363, %v1364
    %v1366 = vmul.f32 %v1302, %v1346
    %v1367 = vmul.f32 %v1307, %v1348
    %v1368 = vadd.f32 %v1366, %v1367
    %v1369 = vmul.f32 %v1312, %v1350
    %v1370 = vadd.f32 %v1368, %v1369
    %v1371 = vmul.f32 %v1317, %v1346
    %v1372 = vmul.f32 %v1321, %v1348
    %v1373 = vadd.f32 %v1371, %v1372
    %v1374 = vmul.f32 %v1326, %v1350
    %v1375 = vadd.f32 %v1373, %v1374
    %v1376 = vmul.f32 %v1331, %v1346
    %v1377 = vmul.f32 %v1336, %v1348
    %v1378 = vadd.f32 %v1376, %v1377
    %v1379 = vmul.f32 %v1339, %v1350
    %v1380 = vadd.f32 %v1378, %v1379
    %v1381 = vmul.f32 %v1260, %v1355
    %v1382 = vmul.f32 %v1265, %v1360
    %v1383 = vadd.f32 %v1381, %v1382
    %v1384 = vmul.f32 %v1270, %v1365
    %v1385 = vadd.f32 %v1383, %v1384
    %v1386 = vmul.f32 %v1275, %v1355
    %v1387 = vmul.f32 %v1279, %v1360
    %v1388 = vadd.f32 %v1386, %v1387
    %v1389 = vmul.f32 %v1284, %v1365
    %v1390 = vadd.f32 %v1388, %v1389
    %v1391 = vmul.f32 %v1289, %v1355
    %v1392 = vmul.f32 %v1294, %v1360
    %v1393 = vadd.f32 %v1391, %v1392
    %v1394 = vmul.f32 %v1297, %v1365
    %v1395 = vadd.f32 %v1393, %v1394
    %v1396 = vmul.f32 %v1302, %v1370
    %v1397 = vmul.f32 %v1307, %v1375
    %v1398 = vadd.f32 %v1396, %v1397
    %v1399 = vmul.f32 %v1312, %v1380
    %v1400 = vadd.f32 %v1398, %v1399
    %v1401 = vmul.f32 %v1317, %v1370
    %v1402 = vmul.f32 %v1321, %v1375
    %v1403 = vadd.f32 %v1401, %v1402
    %v1404 = vmul.f32 %v1326, %v1380
    %v1405 = vadd.f32 %v1403, %v1404
    %v1406 = vmul.f32 %v1331, %v1370
    %v1407 = vmul.f32 %v1336, %v1375
    %v1408 = vadd.f32 %v1406, %v1407
    %v1409 = vmul.f32 %v1339, %v1380
    %v1410 = vadd.f32 %v1408, %v1409
    %v1411 = vmul.f32 %v1260, %v1385
    %v1412 = vmul.f32 %v1265, %v1390
    %v1413 = vadd.f32 %v1411, %v1412
    %v1414 = vmul.f32 %v1270, %v1395
    %v1415 = vadd.f32 %v1413, %v1414
    %v1416 = vmul.f32 %v1275, %v1385
    %v1417 = vmul.f32 %v1279, %v1390
    %v1418 = vadd.f32 %v1416, %v1417
    %v1419 = vmul.f32 %v1284, %v1395
    %v1420 = vadd.f32 %v1418, %v1419
    %v1421 = vmul.f32 %v1289, %v1385
    %v1422 = vmul.f32 %v1294, %v1390
    %v1423 = vadd.f32 %v1421, %v1422
    %v1424 = vmul.f32 %v1297, %v1395
    %v1425 = vadd.f32 %v1423, %v1424
    %v1426 = vmul.f32 %v1302, %v1400
    %v1427 = vmul.f32 %v1307, %v1405
    %v1428 = vadd.f32 %v1426, %v1427
    %v1429 = vmul.f32 %v1312, %v1410
    %v1430 = vadd.f32 %v1428, %v1429
    %v1431 = vmul.f32 %v1317, %v1400
    %v1432 = vmul.f32 %v1321, %v1405
    %v1433 = vadd.f32 %v1431, %v1432
    %v1434 = vmul.f32 %v1326, %v1410
    %v1435 = vadd.f32 %v1433, %v1434
    %v1436 = vmul.f32 %v1331, %v1400
    %v1437 = vmul.f32 %v1336, %v1405
    %v1438 = vadd.f32 %v1436, %v1437
    %v1439 = vmul.f32 %v1339, %v1410
    %v1440 = vadd.f32 %v1438, %v1439
    %v1441 = vmul.f32 %v1260, %v1415
    %v1442 = vmul.f32 %v1265, %v1420
    %v1443 = vadd.f32 %v1441, %v1442
    %v1444 = vmul.f32 %v1270, %v1425
    %v1445 = vadd.f32 %v1443, %v1444
    %v1446 = vmul.f32 %v1275, %v1415
    %v1447 = vmul.f32 %v1279, %v1420
    %v1448 = vadd.f32 %v1446, %v1447
    %v1449 = vmul.f32 %v1284, %v1425
    %v1450 = vadd.f32 %v1448, %v1449
    %v1451 = vmul.f32 %v1289, %v1415
    %v1452 = vmul.f32 %v1294, %v1420
    %v1453 = vadd.f32 %v1451, %v1452
    %v1454 = vmul.f32 %v1297, %v1425
    %v1455 = vadd.f32 %v1453, %v1454
    %v1456 = vmul.f32 %v1302, %v1430
    %v1457 = vmul.f32 %v1307, %v1435
    %v1458 = vadd.f32 %v1456, %v1457
    %v1459 = vmul.f32 %v1312, %v1440
    %v1460 = vadd.f32 %v1458, %v1459
    %v1461 = vmul.f32 %v1317, %v1430
    %v1462 = vmul.f32 %v1321, %v1435
    %v1463 = vadd.f32 %v1461, %v1462
    %v1464 = vmul.f32 %v1326, %v1440
    %v1465 = vadd.f32 %v1463, %v1464
    %v1466 = vmul.f32 %v1331, %v1430
    %v1467 = vmul.f32 %v1336, %v1435
    %v1468 = vadd.f32 %v1466, %v1467
    %v1469 = vmul.f32 %v1339, %v1440
    %v1470 = vadd.f32 %v1468, %v1469
    %1471 = vst [vmem:[#allocation9] sm:$0xff] %v1445
    %s1472 = scalar_lea.vmem [#allocation9], %s59
    %1473 = vst [vmem:[%s1472] sm:$0xff] %v1450
    %s1474 = scalar_lea.vmem [#allocation9], %s62
    %1475 = vst [vmem:[%s1474] sm:$0xff] %v1455
    %s1476 = scalar_lea.vmem [#allocation9], %s65
    %1477 = vst [vmem:[%s1476] sm:$0xff] %v1460
    %s1478 = scalar_lea.vmem [#allocation9], %s68
    %1479 = vst [vmem:[%s1478] sm:$0xff] %v1465
    %s1480 = scalar_lea.vmem [#allocation9], %s71
    %1481 = vst [vmem:[%s1480] sm:$0xff] %v1470
    // Predicated region
    $region26: #{tpu_custom_call.1} parent=1 // pred_check
      _
    $region27: #{tpu_custom_call.1} parent=1 // pred_check_branch
      %1483 = sbr.rel (0) target = $region29
    $region28: #{tpu_custom_call.1} parent=1 // pred_region
      %s1485 = ssub.s32 768, 768
      %1486 = vsyncadd [#allocation4], %s1485
      %s1487 = sshll.u32 [#allocation9], 4
      %s1488 = int_to_ptr.vmem [resolvable:$true] %s1487
      %1493 = dma.vmem_to_hbm [thread:$0]  %s1488, 768, %s3, [#allocation4], 128, 128, 8
    $region29: #{tpu_custom_call.1} parent=1 // pred_fallthru
      _
    // Predicated region
    $region30: #{tpu_custom_call.1} parent=1 // pred_check
      _
    $region31: #{tpu_custom_call.1} parent=1 // pred_check_branch
      %1495 = sbr.rel (0) target = $region33
    $region32: #{tpu_custom_call.1} parent=1 // pred_region
      %1496 = dma.done [#allocation4], 768
    $region33: #{tpu_custom_call.1} parent=1 // pred_fallthru
      _
    %1497 = vsyncpa [#allocation3], 1
    %1498 = vsyncpa [#allocation8], 1
    %1499 = vsyncpa [#allocation4], 1
    %1500 = vsyncpa [#allocation5], 1

</llo_original>
